<compile_context>
chip_gen: v7x
topology: tpu7x:2x2x1
jax: 0.10.0
libtpu: 0.0.40
codegen_flags: <defaults>
</compile_context>

<pallas_src>
import math
import functools

import jax
import jax.numpy as jnp
from jax.experimental import pallas as pl
from jax.experimental.pallas import tpu as pltpu


# Scoped-VMEM budget: above every chip's scoped default (16/32 MiB) but below
# v7x's 64 MiB physical VMEM so the tiling below double-buffers on all of
# v5e / v6e / v7x without re-deriving per chip.
_VMEM_LIMIT = 48 * 1024 * 1024


def _pick_tile(dim, target, granule):
    """Largest `granule`-multiple <= target that divides `dim`; the full dim only
    when dim <= target (toy sizes) or no aligned divisor exists.
    # TODO(synk): pad + mask ragged tails (pl.cdiv grid) for large dims with no
    # granule-multiple divisor instead of falling back to the full dim."""
    if dim <= target:
        return dim
    t = (target // granule) * granule
    while t >= granule:
        if dim % t == 0:
            return t
        t -= granule
    return dim


# ----------------------------- linear kernels ------------------------------

def _linear_kernel(*refs, apply_relu, has_bias):
    """One (tm, tn) output tile; K reduced over grid axis 2 into f32 scratch."""
    if has_bias:
        x_ref, w_ref, b_ref, o_ref, acc_ref = refs
    else:
        x_ref, w_ref, o_ref, acc_ref = refs
        b_ref = None

    @pl.when(pl.program_id(2) == 0)
    def _():
        acc_ref[...] = jnp.zeros_like(acc_ref)

    acc_ref[...] += jnp.dot(x_ref[...].astype(jnp.bfloat16),
                            w_ref[...].astype(jnp.bfloat16),
                            preferred_element_type=jnp.float32)

    @pl.when(pl.program_id(2) == pl.num_programs(2) - 1)
    def _():
        y = acc_ref[...]
        if has_bias:
            y = y + b_ref[...]
        if apply_relu:
            y = jnp.maximum(y, 0.0)
        o_ref[...] = y.astype(o_ref.dtype)


def linear(x2d, w, b=None, *, apply_relu=False, out_dtype=jnp.bfloat16):
    """(M, K) @ (K, N) [+ b] -> (M, N), bf16 operands, f32 accumulation."""
    M, K = x2d.shape
    N = w.shape[1]
    tm = _pick_tile(M, 256, 8)
    tn = _pick_tile(N, 256, 128)
    tk = _pick_tile(K, 512, 128)
    has_bias = b is not None
    grid = (M // tm, N // tn, K // tk)

    w_spec = pl.BlockSpec((tk, tn), lambda i, j, k: (k, j))
    if grid[2] >= 3:
        # extra weight buffer only when the K pipeline is deep enough to use it
        w_spec = pl.BlockSpec((tk, tn), lambda i, j, k: (k, j),
                              pipeline_mode=pl.Buffered(3))

    in_specs = [pl.BlockSpec((tm, tk), lambda i, j, k: (i, k)), w_spec]
    operands = [x2d, w]
    if has_bias:
        in_specs.append(pl.BlockSpec((1, tn), lambda i, j, k: (0, j)))
        operands.append(b.reshape(1, N).astype(jnp.float32))

    return pl.pallas_call(
        functools.partial(_linear_kernel, apply_relu=apply_relu,
                          has_bias=has_bias),
        out_shape=jax.ShapeDtypeStruct((M, N), out_dtype),
        grid=grid,
        in_specs=in_specs,
        out_specs=pl.BlockSpec((tm, tn), lambda i, j, k: (i, j)),
        scratch_shapes=[pltpu.VMEM((tm, tn), jnp.float32)],
        compiler_params=pltpu.CompilerParams(
            dimension_semantics=("parallel", "parallel", "arbitrary"),
            vmem_limit_bytes=_VMEM_LIMIT),
    )(*operands)


def _linear_addnorm_kernel(*refs, eps, has_bias):
    """out = LayerNorm((x @ W [+ b]) + residual), LN fused as matmul epilogue."""
    if has_bias:
        x_ref, w_ref, b_ref, r_ref, g_ref, bt_ref, o_ref, acc_ref = refs
    else:
        x_ref, w_ref, r_ref, g_ref, bt_ref, o_ref, acc_ref = refs
        b_ref = None

    @pl.when(pl.program_id(1) == 0)
    def _():
        acc_ref[...] = jnp.zeros_like(acc_ref)

    acc_ref[...] += jnp.dot(x_ref[...].astype(jnp.bfloat16),
                            w_ref[...].astype(jnp.bfloat16),
                            preferred_element_type=jnp.float32)

    @pl.when(pl.program_id(1) == pl.num_programs(1) - 1)
    def _():
        z = acc_ref[...] + r_ref[...].astype(jnp.float32)   # dropout p=0
        if has_bias:
            z = z + b_ref[...]
        mean = jnp.mean(z, axis=-1, keepdims=True)
        var = jnp.mean(jnp.square(z - mean), axis=-1, keepdims=True)
        zn = (z - mean) * jax.lax.rsqrt(var + eps)
        o_ref[...] = (zn * g_ref[...] + bt_ref[...]).astype(o_ref.dtype)


def linear_add_norm(x2d, w, b, residual2d, gamma, beta, *, eps=1e-5,
                    out_dtype=jnp.bfloat16):
    """LayerNorm(dropout(x @ W [+ b]) + residual); LN needs full feature rows,
    so M and K are tiled and N is kept whole per block."""
    M, K = x2d.shape
    N = w.shape[1]
    tm = _pick_tile(M, 256, 8)
    tk = _pick_tile(K, 512, 128)
    has_bias = b is not None

    in_specs = [pl.BlockSpec((tm, tk), lambda i, k: (i, k)),
                pl.BlockSpec((tk, N), lambda i, k: (k, 0))]
    operands = [x2d, w]
    if has_bias:
        in_specs.append(pl.BlockSpec((1, N), lambda i, k: (0, 0)))
        operands.append(b.reshape(1, N).astype(jnp.float32))
    in_specs += [pl.BlockSpec((tm, N), lambda i, k: (i, 0)),
                 pl.BlockSpec((1, N), lambda i, k: (0, 0)),
                 pl.BlockSpec((1, N), lambda i, k: (0, 0))]
    operands += [residual2d, gamma.reshape(1, N).astype(jnp.float32),
                 beta.reshape(1, N).astype(jnp.float32)]

    return pl.pallas_call(
        functools.partial(_linear_addnorm_kernel, eps=eps, has_bias=has_bias),
        out_shape=jax.ShapeDtypeStruct((M, N), out_dtype),
        grid=(M // tm, K // tk),
        in_specs=in_specs,
        out_specs=pl.BlockSpec((tm, N), lambda i, k: (i, 0)),
        scratch_shapes=[pltpu.VMEM((tm, N), jnp.float32)],
        compiler_params=pltpu.CompilerParams(
            dimension_semantics=("parallel", "arbitrary"),
            vmem_limit_bytes=_VMEM_LIMIT),
    )(*operands)


# ------------------- flash-style masked dot-product attention ---------------

def _flash_attn_kernel(q_ref, k_ref, v_ref, vl_ref, o_ref,
                       m_ref, l_ref, acc_ref, *, nh, d, scale, tk):
    """Online-softmax attention over one (batch, q-tile) block, streaming K/V
    tiles along grid axis 2.  Heads live side-by-side in the lane dimension
    (blocks are (tq, nh*d)); masking replicates masked_softmax's -1e6 fill."""
    ki = pl.program_id(2)

    @pl.when(ki == 0)
    def _():
        m_ref[...] = jnp.full_like(m_ref, -jnp.inf)
        l_ref[...] = jnp.zeros_like(l_ref)
        acc_ref[...] = jnp.zeros_like(acc_ref)

    q = q_ref[0]                       # (tq, nh*d) bf16
    k = k_ref[0]                       # (tk, nh*d) bf16
    v = v_ref[0]
    valid = vl_ref[0]                  # (tq, 1) int32 = #valid keys per query
    tq = q.shape[0]

    key_pos = ki * tk + jax.lax.broadcasted_iota(jnp.int32, (tq, tk), 1)
    mask = key_pos < valid             # (tq, tk)

    new_m, new_l, new_acc = [], [], []
    for h in range(nh):                # heads folded into lanes; static unroll
        lo, hi = h * d, (h + 1) * d
        qh = q[:, lo:hi].astype(jnp.bfloat16)
        kh = k[:, lo:hi].astype(jnp.bfloat16)
        vh = v[:, lo:hi].astype(jnp.bfloat16)

        # q @ k^T expressed with dot_general contracting dims (no XLU transpose)
        s = jax.lax.dot_general(qh, kh, (((1,), (1,)), ((), ())),
                                preferred_element_type=jnp.float32) * scale
        s = jnp.where(mask, s, -1.0e6)             # masked_softmax fill value

        m_prev = m_ref[:, h:h + 1]
        m_cur = jnp.maximum(m_prev, jnp.max(s, axis=-1, keepdims=True))
        alpha = jnp.exp(m_prev - m_cur)
        p = jnp.exp(s - m_cur)                     # f32 softmax numerators

        new_m.append(m_cur)
        new_l.append(alpha * l_ref[:, h:h + 1] + jnp.sum(s * 0 + p, axis=-1,
                                                         keepdims=True))
        new_acc.append(alpha * acc_ref[:, lo:hi] +
                       jnp.dot(p.astype(jnp.bfloat16), vh,
                               preferred_element_type=jnp.float32))

    # dense full-width scratch updates (one store each, no per-head masked stores)
    m_ref[...] = jnp.concatenate(new_m, axis=-1)
    l_ref[...] = jnp.concatenate(new_l, axis=-1)
    acc_ref[...] = jnp.concatenate(new_acc, axis=-1)

    @pl.when(ki == pl.num_programs(2) - 1)
    def _():
        parts = []
        for h in range(nh):
            inv = pl.reciprocal(l_ref[:, h:h + 1], approx=True)   # EUP
            parts.append(acc_ref[:, h * d:(h + 1) * d] * inv)
        o_ref[0] = jnp.concatenate(parts, axis=-1).astype(o_ref.dtype)


def flash_attention(q_src, kv_src, valid, *, hidden, num_heads,
                    q_col, k_col, v_col, out_dtype=jnp.bfloat16):
    """Masked scaled-dot-product attention.  Q/K/V are addressed directly inside
    the fused projection slabs (q_src width = c*hidden) via column-block index
    maps, so no slicing/transposing HBM passes happen in the wrapper.  Requires
    hidden to be a 128-multiple (or the slab to be exactly `hidden` wide) so the
    column blocks stay lane-aligned."""
    B, Tq, _ = q_src.shape
    Tk = kv_src.shape[1]
    d = hidden // num_heads
    tq = _pick_tile(Tq, 128, 8)
    tk = _pick_tile(Tk, 128, 8)

    def q_map(col):
        return lambda b, qi, ki: (b, qi, col)

    def kv_map(col):
        return lambda b, qi, ki: (b, ki, col)

    return pl.pallas_call(
        functools.partial(_flash_attn_kernel, nh=num_heads, d=d,
                          scale=1.0 / math.sqrt(d), tk=tk),
        out_shape=jax.ShapeDtypeStruct((B, Tq, hidden), out_dtype),
        grid=(B, Tq // tq, Tk // tk),
        in_specs=[
            pl.BlockSpec((1, tq, hidden), q_map(q_col)),
            pl.BlockSpec((1, tk, hidden), kv_map(k_col)),
            pl.BlockSpec((1, tk, hidden), kv_map(v_col)),
            pl.BlockSpec((1, tq, 1), lambda b, qi, ki: (b, qi, 0)),
        ],
        out_specs=pl.BlockSpec((1, tq, hidden), lambda b, qi, ki: (b, qi, 0)),
        scratch_shapes=[pltpu.VMEM((tq, num_heads), jnp.float32),   # m
                        pltpu.VMEM((tq, num_heads), jnp.float32),   # l
                        pltpu.VMEM((tq, hidden), jnp.float32)],     # acc
        compiler_params=pltpu.CompilerParams(
            dimension_semantics=("parallel", "parallel", "arbitrary"),
            vmem_limit_bytes=_VMEM_LIMIT),
    )(q_src, kv_src, kv_src, valid)


# ----------------------------- decoder forward ------------------------------

def transformer_decoder_forward(params, tokens, enc_outputs, enc_valid_lens,
                                num_heads, num_layers):
    B, T = tokens.shape
    H = params["embedding"].shape[1]
    vocab = params["dense_w"].shape[1]
    Tenc = enc_outputs.shape[1]

    # embedding lookup (gather kept in JAX glue) + sinusoidal positional encoding
    # TODO(synk): embedding gather / PE table add left to XLA (no tiled kernel win).
    X = params["embedding"][tokens] * math.sqrt(H)
    X = (X + params["pos_P"][:, :T, :]).astype(jnp.bfloat16)

    # int32 per-query valid-key counts for masked_softmax:
    #   self-attention (training): dec_valid_lens = [1..T]  -> causal
    #   cross-attention: enc_valid_lens per batch row
    self_valid = jnp.broadcast_to(
        (jnp.arange(T, dtype=jnp.int32) + 1)[None, :, None], (B, T, 1))
    cross_valid = jnp.broadcast_to(
        enc_valid_lens.astype(jnp.int32)[:, None, None], (B, T, 1))

    enc2d = enc_outputs.astype(jnp.bfloat16).reshape(B * Tenc, H)

    state_kv = []                                  # mirrors state[2][i]
    for i in range(num_layers):
        p = params["blocks"][i]
        state_kv.append(X)                         # training: key_values == X
        X2d = X.reshape(B * T, H)

        # --- masked self-attention: one fused QKV matmul; attention reads the
        #     (B, T, 3H) slab directly (col blocks 0/1/2); W_o + AddNorm fused.
        qkv = linear(X2d, p["attn1"]["W_qkv"]).reshape(B, T, 3 * H)
        attn1 = flash_attention(qkv, qkv, self_valid, hidden=H,
                                num_heads=num_heads, q_col=0, k_col=1, v_col=2)
        Y2d = linear_add_norm(attn1.reshape(B * T, H), p["attn1"]["W_o"], None,
                              X2d, p["ln1_g"], p["ln1_b"])

        # --- encoder-decoder attention: fused KV matmul (col blocks 0/1)
        q3 = linear(Y2d, p["attn2"]["W_q"]).reshape(B, T, H)
        kv = linear(enc2d, p["attn2"]["W_kv"]).reshape(B, Tenc, 2 * H)
        attn2 = flash_attention(q3, kv, cross_valid, hidden=H,
                                num_heads=num_heads, q_col=0, k_col=0, v_col=1)
        Z2d = linear_add_norm(attn2.reshape(B * T, H), p["attn2"]["W_o"], None,
                              Y2d, p["ln2_g"], p["ln2_b"])

        # --- position-wise FFN; AddNorm fused into the 2nd matmul's epilogue
        h1 = linear(Z2d, p["ffn_w1"], p["ffn_b1"], apply_relu=True)
        X = linear_add_norm(h1, p["ffn_w2"], p["ffn_b2"], Z2d,
                            p["ln3_g"], p["ln3_b"]).reshape(B, T, H)

    logits = linear(X.reshape(B * T, H), params["dense_w"], params["dense_b"],
                    out_dtype=jnp.float32)
    return logits.reshape(B, T, vocab), (enc_outputs, enc_valid_lens, state_kv)


# ----------------------------- parameter init -------------------------------

def init_params(key, vocab_size, num_hiddens, ffn_num_hiddens, num_layers,
                max_len=1000):
    H = num_hiddens
    scale = 0.1
    keys = iter(jax.random.split(key, 4 + 10 * num_layers))

    def w(shape):                                  # MXU weights stored bf16
        return (jax.random.normal(next(keys), shape, jnp.float32)
                * scale).astype(jnp.bfloat16)

    params = {"embedding": jax.random.normal(next(keys), (vocab_size, H),
                                             jnp.float32) * scale}

    # sinusoidal positional encoding table (PositionalEncoding.P)
    pos = jnp.arange(max_len, dtype=jnp.float32)[:, None]
    div = jnp.power(10000.0, jnp.arange(0, H, 2, dtype=jnp.float32) / H)
    ang = pos / div
    P = jnp.zeros((1, max_len, H), jnp.float32)
    P = P.at[0, :, 0::2].set(jnp.sin(ang))
    P = P.at[0, :, 1::2].set(jnp.cos(ang))
    params["pos_P"] = P

    blocks = []
    for _ in range(num_layers):
        blocks.append({
            # W_qkv / W_kv are the concatenated [W_q|W_k|W_v] / [W_k|W_v]
            # nn.Linear weights, stored (in, out); attention biases are False.
            "attn1": {"W_qkv": w((H, 3 * H)), "W_o": w((H, H))},
            "attn2": {"W_q": w((H, H)), "W_kv": w((H, 2 * H)), "W_o": w((H, H))},
            "ln1_g": jnp.ones((H,), jnp.float32),
            "ln1_b": jnp.zeros((H,), jnp.float32),
            "ln2_g": jnp.ones((H,), jnp.float32),
            "ln2_b": jnp.zeros((H,), jnp.float32),
            "ln3_g": jnp.ones((H,), jnp.float32),
            "ln3_b": jnp.zeros((H,), jnp.float32),
            "ffn_w1": w((H, ffn_num_hiddens)),
            "ffn_b1": jnp.zeros((ffn_num_hiddens,), jnp.float32),
            "ffn_w2": w((ffn_num_hiddens, H)),
            "ffn_b2": jnp.zeros((H,), jnp.float32),
        })
    params["blocks"] = blocks
    params["dense_w"] = w((H, vocab_size))
    params["dense_b"] = jnp.zeros((vocab_size,), jnp.float32)
    return params


# ---------------------------------- main -------------------------------------

if __name__ == "__main__":
    # Small but lane-aligned shapes (hidden a 128-multiple so the fused QKV/KV
    # slab column blocks and attention output stores stay lane-dense).
    vocab_size = 128
    num_hiddens = 128
    num_heads = 4
    num_layers = 2
    ffn_num_hiddens = 256
    batch = 2
    num_steps = 8

    key = jax.random.PRNGKey(0)
    k_tok, k_enc, k_par = jax.random.split(key, 3)

    tokens = jax.random.randint(k_tok, (batch, num_steps), 0, vocab_size,
                                dtype=jnp.int32)
    enc_outputs = jax.random.normal(k_enc, (batch, num_steps, num_hiddens),
                                    jnp.float32)
    enc_valid_lens = jnp.array([6, 8], dtype=jnp.int32)

    params = init_params(k_par, vocab_size, num_hiddens, ffn_num_hiddens,
                         num_layers)

    fwd = jax.jit(transformer_decoder_forward, static_argnums=(4, 5))
    logits, state = fwd(params, tokens, enc_outputs, enc_valid_lens,
                        num_heads, num_layers)
    logits = jax.block_until_ready(logits)

    assert logits.shape == (batch, num_steps, vocab_size)
    assert logits.dtype == jnp.float32
    assert bool(jnp.all(jnp.isfinite(logits)))
    print("KERNEL_OK")
</pallas_src>

<mosaic_0001>
module attributes {stable_mosaic.version = 11 : i64} {
  func.func @_linear_kernel(%arg0: i32, %arg1: i32, %arg2: i32, %arg3: memref<16x128xbf16, #tpu.memory_space<vmem>>, %arg4: memref<128x128xbf16, #tpu.memory_space<vmem>>, %arg5: memref<16x128xbf16, #tpu.memory_space<vmem>>, %arg6: memref<16x128xf32, #tpu.memory_space<vmem>>) attributes {dimension_semantics = [#tpu.dimension_semantics<parallel>, #tpu.dimension_semantics<parallel>, #tpu.dimension_semantics<arbitrary>], iteration_bounds = array<i64: 1, 3, 1>, scalar_prefetch = 0 : i64, scratch_operands = 1 : i64, tpu.core_type = #tpu.core_type<tc>, window_params = [{transform_indices = @transform_0, window_bounds = array<i64: 16, 128>}, {transform_indices = @transform_1, window_bounds = array<i64: 128, 128>}, {transform_indices = @transform_2, window_bounds = array<i64: 16, 128>}]} {
    %c0_i32 = arith.constant 0 : i32
    %0 = arith.cmpi eq, %arg2, %c0_i32 : i32
    %1 = arith.extui %0 : i1 to i32
    %c0_i32_0 = arith.constant 0 : i32
    %2 = arith.cmpi ne, %1, %c0_i32_0 : i32
    scf.if %2 {
      %cst_10 = arith.constant 0.000000e+00 : f32
      %12 = vector.broadcast %cst_10 : f32 to vector<16x128xf32>
      %c0_11 = arith.constant 0 : index
      %c0_12 = arith.constant 0 : index
      %13 = vector.load %arg6[%c0_11, %c0_12] : memref<16x128xf32, #tpu.memory_space<vmem>>, vector<16x128xf32>
      tpu.vector_store %arg6[%c0_11, %c0_12], %12 {strides = array<i32>} : memref<16x128xf32, #tpu.memory_space<vmem>>, vector<16x128xf32>,
    } else {
    }
    %c0 = arith.constant 0 : index
    %c0_1 = arith.constant 0 : index
    %3 = vector.load %arg6[%c0, %c0_1] : memref<16x128xf32, #tpu.memory_space<vmem>>, vector<16x128xf32>
    %c0_2 = arith.constant 0 : index
    %c0_3 = arith.constant 0 : index
    %4 = vector.load %arg3[%c0_2, %c0_3] : memref<16x128xbf16, #tpu.memory_space<vmem>>, vector<16x128xbf16>
    %c0_4 = arith.constant 0 : index
    %c0_5 = arith.constant 0 : index
    %5 = vector.load %arg4[%c0_4, %c0_5] : memref<128x128xbf16, #tpu.memory_space<vmem>>, vector<128x128xbf16>
    %cst = arith.constant dense<0.000000e+00> : vector<16x128xf32>
    %6 = tpu.matmul %4, %5, %cst {dimension_numbers = #tpu.dot_dimension_numbers<[1], [0], [0], [1], [0, 0, 1, 1], [], []>} : vector<16x128xbf16>, vector<128x128xbf16>, vector<16x128xf32> -> vector<16x128xf32>
    %7 = arith.addf %3, %6 : vector<16x128xf32>
    %c0_6 = arith.constant 0 : index
    %c0_7 = arith.constant 0 : index
    %8 = vector.load %arg6[%c0_6, %c0_7] : memref<16x128xf32, #tpu.memory_space<vmem>>, vector<16x128xf32>
    tpu.vector_store %arg6[%c0_6, %c0_7], %7 {strides = array<i32>} : memref<16x128xf32, #tpu.memory_space<vmem>>, vector<16x128xf32>,
    %c0_i32_8 = arith.constant 0 : i32
    %9 = arith.cmpi eq, %arg2, %c0_i32_8 : i32
    %10 = arith.extui %9 : i1 to i32
    %c0_i32_9 = arith.constant 0 : i32
    %11 = arith.cmpi ne, %10, %c0_i32_9 : i32
    scf.if %11 {
      %c0_10 = arith.constant 0 : index
      %c0_11 = arith.constant 0 : index
      %12 = vector.load %arg6[%c0_10, %c0_11] : memref<16x128xf32, #tpu.memory_space<vmem>>, vector<16x128xf32>
      %13 = arith.truncf %12 : vector<16x128xf32> to vector<16x128xbf16>
      %c0_12 = arith.constant 0 : index
      %c0_13 = arith.constant 0 : index
      %14 = vector.load %arg5[%c0_12, %c0_13] : memref<16x128xbf16, #tpu.memory_space<vmem>>, vector<16x128xbf16>
      tpu.vector_store %arg5[%c0_12, %c0_13], %13 {strides = array<i32>} : memref<16x128xbf16, #tpu.memory_space<vmem>>, vector<16x128xbf16>,
    } else {
    }
    return
  }
  func.func @transform_0(%arg0: i32, %arg1: i32, %arg2: i32) -> (i32, i32) {
    %c0_i32 = arith.constant 0 : i32
    return %arg0, %arg2 : i32, i32
  }
  func.func @transform_1(%arg0: i32, %arg1: i32, %arg2: i32) -> (i32, i32) {
    %c0_i32 = arith.constant 0 : i32
    return %arg2, %arg1 : i32, i32
  }
  func.func @transform_2(%arg0: i32, %arg1: i32, %arg2: i32) -> (i32, i32) {
    %c0_i32 = arith.constant 0 : i32
    return %arg0, %arg1 : i32, i32
  }
}

module attributes {stable_mosaic.version = 11 : i64} {
  func.func @_linear_kernel(%arg0: i32, %arg1: i32, %arg2: i32, %arg3: memref<16x128xbf16, #tpu.memory_space<vmem>>, %arg4: memref<128x128xbf16, #tpu.memory_space<vmem>>, %arg5: memref<16x128xbf16, #tpu.memory_space<vmem>>, %arg6: memref<16x128xf32, #tpu.memory_space<vmem>>) attributes {dimension_semantics = [#tpu.dimension_semantics<parallel>, #tpu.dimension_semantics<parallel>, #tpu.dimension_semantics<arbitrary>], iteration_bounds = array<i64: 1, 1, 1>, scalar_prefetch = 0 : i64, scratch_operands = 1 : i64, tpu.core_type = #tpu.core_type<tc>, window_params = [{transform_indices = @transform_0, window_bounds = array<i64: 16, 128>}, {transform_indices = @transform_1, window_bounds = array<i64: 128, 128>}, {transform_indices = @transform_2, window_bounds = array<i64: 16, 128>}]} {
    %c0_i32 = arith.constant 0 : i32
    %0 = arith.cmpi eq, %arg2, %c0_i32 : i32
    %1 = arith.extui %0 : i1 to i32
    %c0_i32_0 = arith.constant 0 : i32
    %2 = arith.cmpi ne, %1, %c0_i32_0 : i32
    scf.if %2 {
      %cst_10 = arith.constant 0.000000e+00 : f32
      %12 = vector.broadcast %cst_10 : f32 to vector<16x128xf32>
      %c0_11 = arith.constant 0 : index
      %c0_12 = arith.constant 0 : index
      %13 = vector.load %arg6[%c0_11, %c0_12] : memref<16x128xf32, #tpu.memory_space<vmem>>, vector<16x128xf32>
      tpu.vector_store %arg6[%c0_11, %c0_12], %12 {strides = array<i32>} : memref<16x128xf32, #tpu.memory_space<vmem>>, vector<16x128xf32>,
    } else {
    }
    %c0 = arith.constant 0 : index
    %c0_1 = arith.constant 0 : index
    %3 = vector.load %arg6[%c0, %c0_1] : memref<16x128xf32, #tpu.memory_space<vmem>>, vector<16x128xf32>
    %c0_2 = arith.constant 0 : index
    %c0_3 = arith.constant 0 : index
    %4 = vector.load %arg3[%c0_2, %c0_3] : memref<16x128xbf16, #tpu.memory_space<vmem>>, vector<16x128xbf16>
    %c0_4 = arith.constant 0 : index
    %c0_5 = arith.constant 0 : index
    %5 = vector.load %arg4[%c0_4, %c0_5] : memref<128x128xbf16, #tpu.memory_space<vmem>>, vector<128x128xbf16>
    %cst = arith.constant dense<0.000000e+00> : vector<16x128xf32>
    %6 = tpu.matmul %4, %5, %cst {dimension_numbers = #tpu.dot_dimension_numbers<[1], [0], [0], [1], [0, 0, 1, 1], [], []>} : vector<16x128xbf16>, vector<128x128xbf16>, vector<16x128xf32> -> vector<16x128xf32>
    %7 = arith.addf %3, %6 : vector<16x128xf32>
    %c0_6 = arith.constant 0 : index
    %c0_7 = arith.constant 0 : index
    %8 = vector.load %arg6[%c0_6, %c0_7] : memref<16x128xf32, #tpu.memory_space<vmem>>, vector<16x128xf32>
    tpu.vector_store %arg6[%c0_6, %c0_7], %7 {strides = array<i32>} : memref<16x128xf32, #tpu.memory_space<vmem>>, vector<16x128xf32>,
    %c0_i32_8 = arith.constant 0 : i32
    %9 = arith.cmpi eq, %arg2, %c0_i32_8 : i32
    %10 = arith.extui %9 : i1 to i32
    %c0_i32_9 = arith.constant 0 : i32
    %11 = arith.cmpi ne, %10, %c0_i32_9 : i32
    scf.if %11 {
      %c0_10 = arith.constant 0 : index
      %c0_11 = arith.constant 0 : index
      %12 = vector.load %arg6[%c0_10, %c0_11] : memref<16x128xf32, #tpu.memory_space<vmem>>, vector<16x128xf32>
      %13 = arith.truncf %12 : vector<16x128xf32> to vector<16x128xbf16>
      %c0_12 = arith.constant 0 : index
      %c0_13 = arith.constant 0 : index
      %14 = vector.load %arg5[%c0_12, %c0_13] : memref<16x128xbf16, #tpu.memory_space<vmem>>, vector<16x128xbf16>
      tpu.vector_store %arg5[%c0_12, %c0_13], %13 {strides = array<i32>} : memref<16x128xbf16, #tpu.memory_space<vmem>>, vector<16x128xbf16>,
    } else {
    }
    return
  }
  func.func @transform_0(%arg0: i32, %arg1: i32, %arg2: i32) -> (i32, i32) {
    %c0_i32 = arith.constant 0 : i32
    return %arg0, %arg2 : i32, i32
  }
  func.func @transform_1(%arg0: i32, %arg1: i32, %arg2: i32) -> (i32, i32) {
    %c0_i32 = arith.constant 0 : i32
    return %arg2, %arg1 : i32, i32
  }
  func.func @transform_2(%arg0: i32, %arg1: i32, %arg2: i32) -> (i32, i32) {
    %c0_i32 = arith.constant 0 : i32
    return %arg0, %arg1 : i32, i32
  }
}

module attributes {stable_mosaic.version = 11 : i64} {
  func.func @_linear_addnorm_kernel(%arg0: i32, %arg1: i32, %arg2: memref<16x128xbf16, #tpu.memory_space<vmem>>, %arg3: memref<128x128xbf16, #tpu.memory_space<vmem>>, %arg4: memref<16x128xbf16, #tpu.memory_space<vmem>>, %arg5: memref<1x128xf32, #tpu.memory_space<vmem>>, %arg6: memref<1x128xf32, #tpu.memory_space<vmem>>, %arg7: memref<16x128xbf16, #tpu.memory_space<vmem>>, %arg8: memref<16x128xf32, #tpu.memory_space<vmem>>) attributes {dimension_semantics = [#tpu.dimension_semantics<parallel>, #tpu.dimension_semantics<arbitrary>], iteration_bounds = array<i64: 1, 1>, scalar_prefetch = 0 : i64, scratch_operands = 1 : i64, tpu.core_type = #tpu.core_type<tc>, window_params = [{transform_indices = @transform_0, window_bounds = array<i64: 16, 128>}, {transform_indices = @transform_1, window_bounds = array<i64: 128, 128>}, {transform_indices = @transform_2, window_bounds = array<i64: 16, 128>}, {pipeline_mode = #tpu.pipeline_mode<synchronous>, transform_indices = @transform_3, window_bounds = array<i64: 1, 128>}, {pipeline_mode = #tpu.pipeline_mode<synchronous>, transform_indices = @transform_4, window_bounds = array<i64: 1, 128>}, {transform_indices = @transform_5, window_bounds = array<i64: 16, 128>}]} {
    %c0_i32 = arith.constant 0 : i32
    %0 = arith.cmpi eq, %arg1, %c0_i32 : i32
    %1 = arith.extui %0 : i1 to i32
    %c0_i32_0 = arith.constant 0 : i32
    %2 = arith.cmpi ne, %1, %c0_i32_0 : i32
    scf.if %2 {
      %cst_10 = arith.constant 0.000000e+00 : f32
      %12 = vector.broadcast %cst_10 : f32 to vector<16x128xf32>
      %c0_11 = arith.constant 0 : index
      %c0_12 = arith.constant 0 : index
      %13 = vector.load %arg8[%c0_11, %c0_12] : memref<16x128xf32, #tpu.memory_space<vmem>>, vector<16x128xf32>
      tpu.vector_store %arg8[%c0_11, %c0_12], %12 {strides = array<i32>} : memref<16x128xf32, #tpu.memory_space<vmem>>, vector<16x128xf32>,
    } else {
    }
    %c0 = arith.constant 0 : index
    %c0_1 = arith.constant 0 : index
    %3 = vector.load %arg8[%c0, %c0_1] : memref<16x128xf32, #tpu.memory_space<vmem>>, vector<16x128xf32>
    %c0_2 = arith.constant 0 : index
    %c0_3 = arith.constant 0 : index
    %4 = vector.load %arg2[%c0_2, %c0_3] : memref<16x128xbf16, #tpu.memory_space<vmem>>, vector<16x128xbf16>
    %c0_4 = arith.constant 0 : index
    %c0_5 = arith.constant 0 : index
    %5 = vector.load %arg3[%c0_4, %c0_5] : memref<128x128xbf16, #tpu.memory_space<vmem>>, vector<128x128xbf16>
    %cst = arith.constant dense<0.000000e+00> : vector<16x128xf32>
    %6 = tpu.matmul %4, %5, %cst {dimension_numbers = #tpu.dot_dimension_numbers<[1], [0], [0], [1], [0, 0, 1, 1], [], []>} : vector<16x128xbf16>, vector<128x128xbf16>, vector<16x128xf32> -> vector<16x128xf32>
    %7 = arith.addf %3, %6 : vector<16x128xf32>
    %c0_6 = arith.constant 0 : index
    %c0_7 = arith.constant 0 : index
    %8 = vector.load %arg8[%c0_6, %c0_7] : memref<16x128xf32, #tpu.memory_space<vmem>>, vector<16x128xf32>
    tpu.vector_store %arg8[%c0_6, %c0_7], %7 {strides = array<i32>} : memref<16x128xf32, #tpu.memory_space<vmem>>, vector<16x128xf32>,
    %c0_i32_8 = arith.constant 0 : i32
    %9 = arith.cmpi eq, %arg1, %c0_i32_8 : i32
    %10 = arith.extui %9 : i1 to i32
    %c0_i32_9 = arith.constant 0 : i32
    %11 = arith.cmpi ne, %10, %c0_i32_9 : i32
    scf.if %11 {
      %c0_10 = arith.constant 0 : index
      %c0_11 = arith.constant 0 : index
      %12 = vector.load %arg8[%c0_10, %c0_11] : memref<16x128xf32, #tpu.memory_space<vmem>>, vector<16x128xf32>
      %c0_12 = arith.constant 0 : index
      %c0_13 = arith.constant 0 : index
      %13 = vector.load %arg4[%c0_12, %c0_13] : memref<16x128xbf16, #tpu.memory_space<vmem>>, vector<16x128xbf16>
      %14 = arith.extf %13 : vector<16x128xbf16> to vector<16x128xf32>
      %15 = arith.addf %12, %14 : vector<16x128xf32>
      %cst_14 = arith.constant dense<0.000000e+00> : vector<16xf32>
      %16 = vector.multi_reduction <add>, %15, %cst_14 [1] : vector<16x128xf32> to vector<16xf32>
      %17 = vector.shape_cast %16 : vector<16xf32> to vector<16x1xf32>
      %cst_15 = arith.constant 1.280000e+02 : f32
      %18 = vector.broadcast %cst_15 : f32 to vector<16x1xf32>
      %19 = arith.divf %17, %18 : vector<16x1xf32>
      %20 = vector.broadcast %19 : vector<16x1xf32> to vector<16x128xf32>
      %21 = arith.subf %15, %20 : vector<16x128xf32>
      %22 = arith.mulf %21, %21 : vector<16x128xf32>
      %cst_16 = arith.constant dense<0.000000e+00> : vector<16xf32>
      %23 = vector.multi_reduction <add>, %22, %cst_16 [1] : vector<16x128xf32> to vector<16xf32>
      %24 = vector.shape_cast %23 : vector<16xf32> to vector<16x1xf32>
      %cst_17 = arith.constant 1.280000e+02 : f32
      %25 = vector.broadcast %cst_17 : f32 to vector<16x1xf32>
      %26 = arith.divf %24, %25 : vector<16x1xf32>
      %27 = vector.broadcast %19 : vector<16x1xf32> to vector<16x128xf32>
      %28 = arith.subf %15, %27 : vector<16x128xf32>
      %cst_18 = arith.constant 9.99999974E-6 : f32
      %29 = vector.broadcast %cst_18 : f32 to vector<16x1xf32>
      %30 = arith.addf %26, %29 : vector<16x1xf32>
      %31 = math.rsqrt %30 : vector<16x1xf32>
      %32 = vector.broadcast %31 : vector<16x1xf32> to vector<16x128xf32>
      %33 = arith.mulf %28, %32 : vector<16x128xf32>
      %c0_19 = arith.constant 0 : index
      %c0_20 = arith.constant 0 : index
      %34 = vector.load %arg5[%c0_19, %c0_20] : memref<1x128xf32, #tpu.memory_space<vmem>>, vector<1x128xf32>
      %35 = vector.broadcast %34 : vector<1x128xf32> to vector<16x128xf32>
      %36 = arith.mulf %33, %35 : vector<16x128xf32>
      %c0_21 = arith.constant 0 : index
      %c0_22 = arith.constant 0 : index
      %37 = vector.load %arg6[%c0_21, %c0_22] : memref<1x128xf32, #tpu.memory_space<vmem>>, vector<1x128xf32>
      %38 = vector.broadcast %37 : vector<1x128xf32> to vector<16x128xf32>
      %39 = arith.addf %36, %38 : vector<16x128xf32>
      %40 = arith.truncf %39 : vector<16x128xf32> to vector<16x128xbf16>
      %c0_23 = arith.constant 0 : index
      %c0_24 = arith.constant 0 : index
      %41 = vector.load %arg7[%c0_23, %c0_24] : memref<16x128xbf16, #tpu.memory_space<vmem>>, vector<16x128xbf16>
      tpu.vector_store %arg7[%c0_23, %c0_24], %40 {strides = array<i32>} : memref<16x128xbf16, #tpu.memory_space<vmem>>, vector<16x128xbf16>,
    } else {
    }
    return
  }
  func.func @transform_0(%arg0: i32, %arg1: i32) -> (i32, i32) {
    %c0_i32 = arith.constant 0 : i32
    return %arg0, %arg1 : i32, i32
  }
  func.func @transform_1(%arg0: i32, %arg1: i32) -> (i32, i32) {
    %c0_i32 = arith.constant 0 : i32
    %c0_i32_0 = arith.constant 0 : i32
    return %arg1, %c0_i32 : i32, i32
  }
  func.func @transform_2(%arg0: i32, %arg1: i32) -> (i32, i32) {
    %c0_i32 = arith.constant 0 : i32
    %c0_i32_0 = arith.constant 0 : i32
    return %arg0, %c0_i32 : i32, i32
  }
  func.func @transform_3(%arg0: i32, %arg1: i32) -> (i32, i32) {
    %c0_i32 = arith.constant 0 : i32
    %c0_i32_0 = arith.constant 0 : i32
    %c0_i32_1 = arith.constant 0 : i32
    return %c0_i32, %c0_i32_0 : i32, i32
  }
  func.func @transform_4(%arg0: i32, %arg1: i32) -> (i32, i32) {
    %c0_i32 = arith.constant 0 : i32
    %c0_i32_0 = arith.constant 0 : i32
    %c0_i32_1 = arith.constant 0 : i32
    return %c0_i32, %c0_i32_0 : i32, i32
  }
  func.func @transform_5(%arg0: i32, %arg1: i32) -> (i32, i32) {
    %c0_i32 = arith.constant 0 : i32
    %c0_i32_0 = arith.constant 0 : i32
    return %arg0, %c0_i32 : i32, i32
  }
}

module attributes {stable_mosaic.version = 11 : i64} {
  func.func @_flash_attn_kernel(%arg0: i32, %arg1: i32, %arg2: i32, %arg3: memref<1x8x128xbf16, #tpu.memory_space<vmem>>, %arg4: memref<1x8x128xbf16, #tpu.memory_space<vmem>>, %arg5: memref<1x8x128xbf16, #tpu.memory_space<vmem>>, %arg6: memref<1x8x1xi32, #tpu.memory_space<vmem>>, %arg7: memref<1x8x128xbf16, #tpu.memory_space<vmem>>, %arg8: memref<8x4xf32, #tpu.memory_space<vmem>>, %arg9: memref<8x4xf32, #tpu.memory_space<vmem>>, %arg10: memref<8x128xf32, #tpu.memory_space<vmem>>) attributes {dimension_semantics = [#tpu.dimension_semantics<parallel>, #tpu.dimension_semantics<parallel>, #tpu.dimension_semantics<arbitrary>], iteration_bounds = array<i64: 2, 1, 1>, scalar_prefetch = 0 : i64, scratch_operands = 3 : i64, tpu.core_type = #tpu.core_type<tc>, window_params = [{transform_indices = @transform_0, window_bounds = array<i64: 1, 8, 128>}, {transform_indices = @transform_1, window_bounds = array<i64: 1, 8, 128>}, {transform_indices = @transform_2, window_bounds = array<i64: 1, 8, 128>}, {transform_indices = @transform_3, window_bounds = array<i64: 1, 8, 1>}, {transform_indices = @transform_4, window_bounds = array<i64: 1, 8, 128>}]} {
    %c0_i32 = arith.constant 0 : i32
    %0 = arith.cmpi eq, %arg2, %c0_i32 : i32
    %1 = arith.extui %0 : i1 to i32
    %c0_i32_0 = arith.constant 0 : i32
    %2 = arith.cmpi ne, %1, %c0_i32_0 : i32
    scf.if %2 {
      %cst_65 = arith.constant 0xFF800000 : f32
      %150 = vector.broadcast %cst_65 : f32 to vector<8x4xf32>
      %c0_66 = arith.constant 0 : index
      %c0_67 = arith.constant 0 : index
      %151 = vector.load %arg8[%c0_66, %c0_67] : memref<8x4xf32, #tpu.memory_space<vmem>>, vector<8x4xf32>
      tpu.vector_store %arg8[%c0_66, %c0_67], %150 {strides = array<i32>} : memref<8x4xf32, #tpu.memory_space<vmem>>, vector<8x4xf32>,
      %cst_68 = arith.constant 0.000000e+00 : f32
      %152 = vector.broadcast %cst_68 : f32 to vector<8x4xf32>
      %c0_69 = arith.constant 0 : index
      %c0_70 = arith.constant 0 : index
      %153 = vector.load %arg9[%c0_69, %c0_70] : memref<8x4xf32, #tpu.memory_space<vmem>>, vector<8x4xf32>
      tpu.vector_store %arg9[%c0_69, %c0_70], %152 {strides = array<i32>} : memref<8x4xf32, #tpu.memory_space<vmem>>, vector<8x4xf32>,
      %cst_71 = arith.constant 0.000000e+00 : f32
      %154 = vector.broadcast %cst_71 : f32 to vector<8x128xf32>
      %c0_72 = arith.constant 0 : index
      %c0_73 = arith.constant 0 : index
      %155 = vector.load %arg10[%c0_72, %c0_73] : memref<8x128xf32, #tpu.memory_space<vmem>>, vector<8x128xf32>
      tpu.vector_store %arg10[%c0_72, %c0_73], %154 {strides = array<i32>} : memref<8x128xf32, #tpu.memory_space<vmem>>, vector<8x128xf32>,
    } else {
    }
    %c0 = arith.constant 0 : index
    %c0_1 = arith.constant 0 : index
    %c0_2 = arith.constant 0 : index
    %3 = vector.load %arg3[%c0, %c0_1, %c0_2] : memref<1x8x128xbf16, #tpu.memory_space<vmem>>, vector<1x8x128xbf16>
    %4 = vector.shape_cast %3 : vector<1x8x128xbf16> to vector<8x128xbf16>
    %c0_3 = arith.constant 0 : index
    %c0_4 = arith.constant 0 : index
    %c0_5 = arith.constant 0 : index
    %5 = vector.load %arg4[%c0_3, %c0_4, %c0_5] : memref<1x8x128xbf16, #tpu.memory_space<vmem>>, vector<1x8x128xbf16>
    %6 = vector.shape_cast %5 : vector<1x8x128xbf16> to vector<8x128xbf16>
    %c0_6 = arith.constant 0 : index
    %c0_7 = arith.constant 0 : index
    %c0_8 = arith.constant 0 : index
    %7 = vector.load %arg5[%c0_6, %c0_7, %c0_8] : memref<1x8x128xbf16, #tpu.memory_space<vmem>>, vector<1x8x128xbf16>
    %8 = vector.shape_cast %7 : vector<1x8x128xbf16> to vector<8x128xbf16>
    %c0_9 = arith.constant 0 : index
    %c0_10 = arith.constant 0 : index
    %c0_11 = arith.constant 0 : index
    %9 = vector.load %arg6[%c0_9, %c0_10, %c0_11] : memref<1x8x1xi32, #tpu.memory_space<vmem>>, vector<1x8x1xi32>
    %10 = vector.shape_cast %9 : vector<1x8x1xi32> to vector<8x1xi32>
    %c8_i32 = arith.constant 8 : i32
    %11 = arith.muli %arg2, %c8_i32 : i32
    %12 = tpu.iota {dimensions = array<i32: 1>} : vector<8x8xi32>
    %13 = vector.broadcast %11 : i32 to vector<8x8xi32>
    %14 = arith.addi %13, %12 : vector<8x8xi32>
    %15 = vector.broadcast %10 : vector<8x1xi32> to vector<8x8xi32>
    %16 = arith.cmpi slt, %14, %15 : vector<8x8xi32>
    %17 = vector.extract_strided_slice %4 {offsets = [0, 0], sizes = [8, 32], strides = [1, 1]} : vector<8x128xbf16> to vector<8x32xbf16>
    %18 = vector.extract_strided_slice %6 {offsets = [0, 0], sizes = [8, 32], strides = [1, 1]} : vector<8x128xbf16> to vector<8x32xbf16>
    %19 = vector.extract_strided_slice %8 {offsets = [0, 0], sizes = [8, 32], strides = [1, 1]} : vector<8x128xbf16> to vector<8x32xbf16>
    %cst = arith.constant dense<0.000000e+00> : vector<8x8xf32>
    %20 = tpu.matmul %17, %18, %cst {dimension_numbers = #tpu.dot_dimension_numbers<[1], [1], [0], [0], [0, 0, 1, 0], [], []>} : vector<8x32xbf16>, vector<8x32xbf16>, vector<8x8xf32> -> vector<8x8xf32>
    %cst_12 = arith.constant 0.176776692 : f32
    %21 = vector.broadcast %cst_12 : f32 to vector<8x8xf32>
    %22 = arith.mulf %20, %21 : vector<8x8xf32>
    %cst_13 = arith.constant -1.000000e+06 : f32
    %23 = vector.broadcast %cst_13 : f32 to vector<8x8xf32>
    %24 = arith.select %16, %22, %23 : vector<8x8xi1>, vector<8x8xf32>
    %c0_14 = arith.constant 0 : index
    %c0_15 = arith.constant 0 : index
    %25 = vector.load %arg8[%c0_14, %c0_15] : memref<8x4xf32, #tpu.memory_space<vmem>>, vector<8x1xf32>
    %cst_16 = arith.constant dense<0xFF800000> : vector<8xf32>
    %26 = vector.multi_reduction <maximumf>, %24, %cst_16 [1] : vector<8x8xf32> to vector<8xf32>
    %27 = vector.shape_cast %26 : vector<8xf32> to vector<8x1xf32>
    %28 = arith.maximumf %25, %27 : vector<8x1xf32>
    %29 = arith.subf %25, %28 : vector<8x1xf32>
    %30 = math.exp %29 : vector<8x1xf32>
    %31 = vector.broadcast %28 : vector<8x1xf32> to vector<8x8xf32>
    %32 = arith.subf %24, %31 : vector<8x8xf32>
    %33 = math.exp %32 : vector<8x8xf32>
    %c0_17 = arith.constant 0 : index
    %c0_18 = arith.constant 0 : index
    %34 = vector.load %arg9[%c0_17, %c0_18] : memref<8x4xf32, #tpu.memory_space<vmem>>, vector<8x1xf32>
    %35 = arith.mulf %30, %34 : vector<8x1xf32>
    %cst_19 = arith.constant 0.000000e+00 : f32
    %36 = vector.broadcast %cst_19 : f32 to vector<8x8xf32>
    %37 = arith.mulf %24, %36 : vector<8x8xf32>
    %38 = arith.addf %37, %33 : vector<8x8xf32>
    %cst_20 = arith.constant dense<0.000000e+00> : vector<8xf32>
    %39 = vector.multi_reduction <add>, %38, %cst_20 [1] : vector<8x8xf32> to vector<8xf32>
    %40 = vector.shape_cast %39 : vector<8xf32> to vector<8x1xf32>
    %41 = arith.addf %35, %40 : vector<8x1xf32>
    %c0_21 = arith.constant 0 : index
    %c0_22 = arith.constant 0 : index
    %42 = vector.load %arg10[%c0_21, %c0_22] : memref<8x128xf32, #tpu.memory_space<vmem>>, vector<8x32xf32>
    %43 = vector.broadcast %30 : vector<8x1xf32> to vector<8x32xf32>
    %44 = arith.mulf %43, %42 : vector<8x32xf32>
    %45 = arith.truncf %33 : vector<8x8xf32> to vector<8x8xbf16>
    %cst_23 = arith.constant dense<0.000000e+00> : vector<8x32xf32>
    %46 = tpu.matmul %45, %19, %cst_23 {dimension_numbers = #tpu.dot_dimension_numbers<[1], [0], [0], [1], [0, 0, 1, 1], [], []>} : vector<8x8xbf16>, vector<8x32xbf16>, vector<8x32xf32> -> vector<8x32xf32>
    %47 = arith.addf %44, %46 : vector<8x32xf32>
    %48 = vector.extract_strided_slice %4 {offsets = [0, 32], sizes = [8, 32], strides = [1, 1]} : vector<8x128xbf16> to vector<8x32xbf16>
    %49 = vector.extract_strided_slice %6 {offsets = [0, 32], sizes = [8, 32], strides = [1, 1]} : vector<8x128xbf16> to vector<8x32xbf16>
    %50 = vector.extract_strided_slice %8 {offsets = [0, 32], sizes = [8, 32], strides = [1, 1]} : vector<8x128xbf16> to vector<8x32xbf16>
    %cst_24 = arith.constant dense<0.000000e+00> : vector<8x8xf32>
    %51 = tpu.matmul %48, %49, %cst_24 {dimension_numbers = #tpu.dot_dimension_numbers<[1], [1], [0], [0], [0, 0, 1, 0], [], []>} : vector<8x32xbf16>, vector<8x32xbf16>, vector<8x8xf32> -> vector<8x8xf32>
    %cst_25 = arith.constant 0.176776692 : f32
    %52 = vector.broadcast %cst_25 : f32 to vector<8x8xf32>
    %53 = arith.mulf %51, %52 : vector<8x8xf32>
    %cst_26 = arith.constant -1.000000e+06 : f32
    %54 = vector.broadcast %cst_26 : f32 to vector<8x8xf32>
    %55 = arith.select %16, %53, %54 : vector<8x8xi1>, vector<8x8xf32>
    %c0_27 = arith.constant 0 : index
    %c1 = arith.constant 1 : index
    %56 = vector.load %arg8[%c0_27, %c1] : memref<8x4xf32, #tpu.memory_space<vmem>>, vector<8x1xf32>
    %cst_28 = arith.constant dense<0xFF800000> : vector<8xf32>
    %57 = vector.multi_reduction <maximumf>, %55, %cst_28 [1] : vector<8x8xf32> to vector<8xf32>
    %58 = vector.shape_cast %57 : vector<8xf32> to vector<8x1xf32>
    %59 = arith.maximumf %56, %58 : vector<8x1xf32>
    %60 = arith.subf %56, %59 : vector<8x1xf32>
    %61 = math.exp %60 : vector<8x1xf32>
    %62 = vector.broadcast %59 : vector<8x1xf32> to vector<8x8xf32>
    %63 = arith.subf %55, %62 : vector<8x8xf32>
    %64 = math.exp %63 : vector<8x8xf32>
    %c0_29 = arith.constant 0 : index
    %c1_30 = arith.constant 1 : index
    %65 = vector.load %arg9[%c0_29, %c1_30] : memref<8x4xf32, #tpu.memory_space<vmem>>, vector<8x1xf32>
    %66 = arith.mulf %61, %65 : vector<8x1xf32>
    %cst_31 = arith.constant 0.000000e+00 : f32
    %67 = vector.broadcast %cst_31 : f32 to vector<8x8xf32>
    %68 = arith.mulf %55, %67 : vector<8x8xf32>
    %69 = arith.addf %68, %64 : vector<8x8xf32>
    %cst_32 = arith.constant dense<0.000000e+00> : vector<8xf32>
    %70 = vector.multi_reduction <add>, %69, %cst_32 [1] : vector<8x8xf32> to vector<8xf32>
    %71 = vector.shape_cast %70 : vector<8xf32> to vector<8x1xf32>
    %72 = arith.addf %66, %71 : vector<8x1xf32>
    %c0_33 = arith.constant 0 : index
    %c32 = arith.constant 32 : index
    %73 = vector.load %arg10[%c0_33, %c32] : memref<8x128xf32, #tpu.memory_space<vmem>>, vector<8x32xf32>
    %74 = vector.broadcast %61 : vector<8x1xf32> to vector<8x32xf32>
    %75 = arith.mulf %74, %73 : vector<8x32xf32>
    %76 = arith.truncf %64 : vector<8x8xf32> to vector<8x8xbf16>
    %cst_34 = arith.constant dense<0.000000e+00> : vector<8x32xf32>
    %77 = tpu.matmul %76, %50, %cst_34 {dimension_numbers = #tpu.dot_dimension_numbers<[1], [0], [0], [1], [0, 0, 1, 1], [], []>} : vector<8x8xbf16>, vector<8x32xbf16>, vector<8x32xf32> -> vector<8x32xf32>
    %78 = arith.addf %75, %77 : vector<8x32xf32>
    %79 = vector.extract_strided_slice %4 {offsets = [0, 64], sizes = [8, 32], strides = [1, 1]} : vector<8x128xbf16> to vector<8x32xbf16>
    %80 = vector.extract_strided_slice %6 {offsets = [0, 64], sizes = [8, 32], strides = [1, 1]} : vector<8x128xbf16> to vector<8x32xbf16>
    %81 = vector.extract_strided_slice %8 {offsets = [0, 64], sizes = [8, 32], strides = [1, 1]} : vector<8x128xbf16> to vector<8x32xbf16>
    %cst_35 = arith.constant dense<0.000000e+00> : vector<8x8xf32>
    %82 = tpu.matmul %79, %80, %cst_35 {dimension_numbers = #tpu.dot_dimension_numbers<[1], [1], [0], [0], [0, 0, 1, 0], [], []>} : vector<8x32xbf16>, vector<8x32xbf16>, vector<8x8xf32> -> vector<8x8xf32>
    %cst_36 = arith.constant 0.176776692 : f32
    %83 = vector.broadcast %cst_36 : f32 to vector<8x8xf32>
    %84 = arith.mulf %82, %83 : vector<8x8xf32>
    %cst_37 = arith.constant -1.000000e+06 : f32
    %85 = vector.broadcast %cst_37 : f32 to vector<8x8xf32>
    %86 = arith.select %16, %84, %85 : vector<8x8xi1>, vector<8x8xf32>
    %c0_38 = arith.constant 0 : index
    %c2 = arith.constant 2 : index
    %87 = vector.load %arg8[%c0_38, %c2] : memref<8x4xf32, #tpu.memory_space<vmem>>, vector<8x1xf32>
    %cst_39 = arith.constant dense<0xFF800000> : vector<8xf32>
    %88 = vector.multi_reduction <maximumf>, %86, %cst_39 [1] : vector<8x8xf32> to vector<8xf32>
    %89 = vector.shape_cast %88 : vector<8xf32> to vector<8x1xf32>
    %90 = arith.maximumf %87, %89 : vector<8x1xf32>
    %91 = arith.subf %87, %90 : vector<8x1xf32>
    %92 = math.exp %91 : vector<8x1xf32>
    %93 = vector.broadcast %90 : vector<8x1xf32> to vector<8x8xf32>
    %94 = arith.subf %86, %93 : vector<8x8xf32>
    %95 = math.exp %94 : vector<8x8xf32>
    %c0_40 = arith.constant 0 : index
    %c2_41 = arith.constant 2 : index
    %96 = vector.load %arg9[%c0_40, %c2_41] : memref<8x4xf32, #tpu.memory_space<vmem>>, vector<8x1xf32>
    %97 = arith.mulf %92, %96 : vector<8x1xf32>
    %cst_42 = arith.constant 0.000000e+00 : f32
    %98 = vector.broadcast %cst_42 : f32 to vector<8x8xf32>
    %99 = arith.mulf %86, %98 : vector<8x8xf32>
    %100 = arith.addf %99, %95 : vector<8x8xf32>
    %cst_43 = arith.constant dense<0.000000e+00> : vector<8xf32>
    %101 = vector.multi_reduction <add>, %100, %cst_43 [1] : vector<8x8xf32> to vector<8xf32>
    %102 = vector.shape_cast %101 : vector<8xf32> to vector<8x1xf32>
    %103 = arith.addf %97, %102 : vector<8x1xf32>
    %c0_44 = arith.constant 0 : index
    %c64 = arith.constant 64 : index
    %104 = vector.load %arg10[%c0_44, %c64] : memref<8x128xf32, #tpu.memory_space<vmem>>, vector<8x32xf32>
    %105 = vector.broadcast %92 : vector<8x1xf32> to vector<8x32xf32>
    %106 = arith.mulf %105, %104 : vector<8x32xf32>
    %107 = arith.truncf %95 : vector<8x8xf32> to vector<8x8xbf16>
    %cst_45 = arith.constant dense<0.000000e+00> : vector<8x32xf32>
    %108 = tpu.matmul %107, %81, %cst_45 {dimension_numbers = #tpu.dot_dimension_numbers<[1], [0], [0], [1], [0, 0, 1, 1], [], []>} : vector<8x8xbf16>, vector<8x32xbf16>, vector<8x32xf32> -> vector<8x32xf32>
    %109 = arith.addf %106, %108 : vector<8x32xf32>
    %110 = vector.extract_strided_slice %4 {offsets = [0, 96], sizes = [8, 32], strides = [1, 1]} : vector<8x128xbf16> to vector<8x32xbf16>
    %111 = vector.extract_strided_slice %6 {offsets = [0, 96], sizes = [8, 32], strides = [1, 1]} : vector<8x128xbf16> to vector<8x32xbf16>
    %112 = vector.extract_strided_slice %8 {offsets = [0, 96], sizes = [8, 32], strides = [1, 1]} : vector<8x128xbf16> to vector<8x32xbf16>
    %cst_46 = arith.constant dense<0.000000e+00> : vector<8x8xf32>
    %113 = tpu.matmul %110, %111, %cst_46 {dimension_numbers = #tpu.dot_dimension_numbers<[1], [1], [0], [0], [0, 0, 1, 0], [], []>} : vector<8x32xbf16>, vector<8x32xbf16>, vector<8x8xf32> -> vector<8x8xf32>
    %cst_47 = arith.constant 0.176776692 : f32
    %114 = vector.broadcast %cst_47 : f32 to vector<8x8xf32>
    %115 = arith.mulf %113, %114 : vector<8x8xf32>
    %cst_48 = arith.constant -1.000000e+06 : f32
    %116 = vector.broadcast %cst_48 : f32 to vector<8x8xf32>
    %117 = arith.select %16, %115, %116 : vector<8x8xi1>, vector<8x8xf32>
    %c0_49 = arith.constant 0 : index
    %c3 = arith.constant 3 : index
    %118 = vector.load %arg8[%c0_49, %c3] : memref<8x4xf32, #tpu.memory_space<vmem>>, vector<8x1xf32>
    %cst_50 = arith.constant dense<0xFF800000> : vector<8xf32>
    %119 = vector.multi_reduction <maximumf>, %117, %cst_50 [1] : vector<8x8xf32> to vector<8xf32>
    %120 = vector.shape_cast %119 : vector<8xf32> to vector<8x1xf32>
    %121 = arith.maximumf %118, %120 : vector<8x1xf32>
    %122 = arith.subf %118, %121 : vector<8x1xf32>
    %123 = math.exp %122 : vector<8x1xf32>
    %124 = vector.broadcast %121 : vector<8x1xf32> to vector<8x8xf32>
    %125 = arith.subf %117, %124 : vector<8x8xf32>
    %126 = math.exp %125 : vector<8x8xf32>
    %c0_51 = arith.constant 0 : index
    %c3_52 = arith.constant 3 : index
    %127 = vector.load %arg9[%c0_51, %c3_52] : memref<8x4xf32, #tpu.memory_space<vmem>>, vector<8x1xf32>
    %128 = arith.mulf %123, %127 : vector<8x1xf32>
    %cst_53 = arith.constant 0.000000e+00 : f32
    %129 = vector.broadcast %cst_53 : f32 to vector<8x8xf32>
    %130 = arith.mulf %117, %129 : vector<8x8xf32>
    %131 = arith.addf %130, %126 : vector<8x8xf32>
    %cst_54 = arith.constant dense<0.000000e+00> : vector<8xf32>
    %132 = vector.multi_reduction <add>, %131, %cst_54 [1] : vector<8x8xf32> to vector<8xf32>
    %133 = vector.shape_cast %132 : vector<8xf32> to vector<8x1xf32>
    %134 = arith.addf %128, %133 : vector<8x1xf32>
    %c0_55 = arith.constant 0 : index
    %c96 = arith.constant 96 : index
    %135 = vector.load %arg10[%c0_55, %c96] : memref<8x128xf32, #tpu.memory_space<vmem>>, vector<8x32xf32>
    %136 = vector.broadcast %123 : vector<8x1xf32> to vector<8x32xf32>
    %137 = arith.mulf %136, %135 : vector<8x32xf32>
    %138 = arith.truncf %126 : vector<8x8xf32> to vector<8x8xbf16>
    %cst_56 = arith.constant dense<0.000000e+00> : vector<8x32xf32>
    %139 = tpu.matmul %138, %112, %cst_56 {dimension_numbers = #tpu.dot_dimension_numbers<[1], [0], [0], [1], [0, 0, 1, 1], [], []>} : vector<8x8xbf16>, vector<8x32xbf16>, vector<8x32xf32> -> vector<8x32xf32>
    %140 = arith.addf %137, %139 : vector<8x32xf32>
    %141 = tpu.concatenate %28, %59, %90, %121 in 1 : vector<8x1xf32>, vector<8x1xf32>, vector<8x1xf32>, vector<8x1xf32> -> vector<8x4xf32>
    %c0_57 = arith.constant 0 : index
    %c0_58 = arith.constant 0 : index
    %142 = vector.load %arg8[%c0_57, %c0_58] : memref<8x4xf32, #tpu.memory_space<vmem>>, vector<8x4xf32>
    tpu.vector_store %arg8[%c0_57, %c0_58], %141 {strides = array<i32>} : memref<8x4xf32, #tpu.memory_space<vmem>>, vector<8x4xf32>,
    %143 = tpu.concatenate %41, %72, %103, %134 in 1 : vector<8x1xf32>, vector<8x1xf32>, vector<8x1xf32>, vector<8x1xf32> -> vector<8x4xf32>
    %c0_59 = arith.constant 0 : index
    %c0_60 = arith.constant 0 : index
    %144 = vector.load %arg9[%c0_59, %c0_60] : memref<8x4xf32, #tpu.memory_space<vmem>>, vector<8x4xf32>
    tpu.vector_store %arg9[%c0_59, %c0_60], %143 {strides = array<i32>} : memref<8x4xf32, #tpu.memory_space<vmem>>, vector<8x4xf32>,
    %145 = tpu.concatenate %47, %78, %109, %140 in 1 : vector<8x32xf32>, vector<8x32xf32>, vector<8x32xf32>, vector<8x32xf32> -> vector<8x128xf32>
    %c0_61 = arith.constant 0 : index
    %c0_62 = arith.constant 0 : index
    %146 = vector.load %arg10[%c0_61, %c0_62] : memref<8x128xf32, #tpu.memory_space<vmem>>, vector<8x128xf32>
    tpu.vector_store %arg10[%c0_61, %c0_62], %145 {strides = array<i32>} : memref<8x128xf32, #tpu.memory_space<vmem>>, vector<8x128xf32>,
    %c0_i32_63 = arith.constant 0 : i32
    %147 = arith.cmpi eq, %arg2, %c0_i32_63 : i32
    %148 = arith.extui %147 : i1 to i32
    %c0_i32_64 = arith.constant 0 : i32
    %149 = arith.cmpi ne, %148, %c0_i32_64 : i32
    scf.if %149 {
      %c0_65 = arith.constant 0 : index
      %c0_66 = arith.constant 0 : index
      %150 = vector.load %arg9[%c0_65, %c0_66] : memref<8x4xf32, #tpu.memory_space<vmem>>, vector<8x1xf32>
      %151 = tpu.reciprocal %150 {approx = true} : vector<8x1xf32> -> vector<8x1xf32>
      %c0_67 = arith.constant 0 : index
      %c0_68 = arith.constant 0 : index
      %152 = vector.load %arg10[%c0_67, %c0_68] : memref<8x128xf32, #tpu.memory_space<vmem>>, vector<8x32xf32>
      %153 = vector.broadcast %151 : vector<8x1xf32> to vector<8x32xf32>
      %154 = arith.mulf %152, %153 : vector<8x32xf32>
      %c0_69 = arith.constant 0 : index
      %c1_70 = arith.constant 1 : index
      %155 = vector.load %arg9[%c0_69, %c1_70] : memref<8x4xf32, #tpu.memory_space<vmem>>, vector<8x1xf32>
      %156 = tpu.reciprocal %155 {approx = true} : vector<8x1xf32> -> vector<8x1xf32>
      %c0_71 = arith.constant 0 : index
      %c32_72 = arith.constant 32 : index
      %157 = vector.load %arg10[%c0_71, %c32_72] : memref<8x128xf32, #tpu.memory_space<vmem>>, vector<8x32xf32>
      %158 = vector.broadcast %156 : vector<8x1xf32> to vector<8x32xf32>
      %159 = arith.mulf %157, %158 : vector<8x32xf32>
      %c0_73 = arith.constant 0 : index
      %c2_74 = arith.constant 2 : index
      %160 = vector.load %arg9[%c0_73, %c2_74] : memref<8x4xf32, #tpu.memory_space<vmem>>, vector<8x1xf32>
      %161 = tpu.reciprocal %160 {approx = true} : vector<8x1xf32> -> vector<8x1xf32>
      %c0_75 = arith.constant 0 : index
      %c64_76 = arith.constant 64 : index
      %162 = vector.load %arg10[%c0_75, %c64_76] : memref<8x128xf32, #tpu.memory_space<vmem>>, vector<8x32xf32>
      %163 = vector.broadcast %161 : vector<8x1xf32> to vector<8x32xf32>
      %164 = arith.mulf %162, %163 : vector<8x32xf32>
      %c0_77 = arith.constant 0 : index
      %c3_78 = arith.constant 3 : index
      %165 = vector.load %arg9[%c0_77, %c3_78] : memref<8x4xf32, #tpu.memory_space<vmem>>, vector<8x1xf32>
      %166 = tpu.reciprocal %165 {approx = true} : vector<8x1xf32> -> vector<8x1xf32>
      %c0_79 = arith.constant 0 : index
      %c96_80 = arith.constant 96 : index
      %167 = vector.load %arg10[%c0_79, %c96_80] : memref<8x128xf32, #tpu.memory_space<vmem>>, vector<8x32xf32>
      %168 = vector.broadcast %166 : vector<8x1xf32> to vector<8x32xf32>
      %169 = arith.mulf %167, %168 : vector<8x32xf32>
      %170 = tpu.concatenate %154, %159, %164, %169 in 1 : vector<8x32xf32>, vector<8x32xf32>, vector<8x32xf32>, vector<8x32xf32> -> vector<8x128xf32>
      %171 = arith.truncf %170 : vector<8x128xf32> to vector<8x128xbf16>
      %c0_81 = arith.constant 0 : index
      %c0_82 = arith.constant 0 : index
      %c0_83 = arith.constant 0 : index
      %172 = vector.load %arg7[%c0_81, %c0_82, %c0_83] : memref<1x8x128xbf16, #tpu.memory_space<vmem>>, vector<1x8x128xbf16>
      %173 = vector.shape_cast %172 : vector<1x8x128xbf16> to vector<8x128xbf16>
      %174 = vector.shape_cast %171 : vector<8x128xbf16> to vector<1x8x128xbf16>
      tpu.vector_store %arg7[%c0_81, %c0_82, %c0_83], %174 {strides = array<i32>} : memref<1x8x128xbf16, #tpu.memory_space<vmem>>, vector<1x8x128xbf16>,
    } else {
    }
    return
  }
  func.func @transform_0(%arg0: i32, %arg1: i32, %arg2: i32) -> (i32, i32, i32) {
    %c0_i32 = arith.constant 0 : i32
    %c0_i32_0 = arith.constant 0 : i32
    return %arg0, %arg1, %c0_i32 : i32, i32, i32
  }
  func.func @transform_1(%arg0: i32, %arg1: i32, %arg2: i32) -> (i32, i32, i32) {
    %c1_i32 = arith.constant 1 : i32
    %c0_i32 = arith.constant 0 : i32
    return %arg0, %arg2, %c1_i32 : i32, i32, i32
  }
  func.func @transform_2(%arg0: i32, %arg1: i32, %arg2: i32) -> (i32, i32, i32) {
    %c2_i32 = arith.constant 2 : i32
    %c0_i32 = arith.constant 0 : i32
    return %arg0, %arg2, %c2_i32 : i32, i32, i32
  }
  func.func @transform_3(%arg0: i32, %arg1: i32, %arg2: i32) -> (i32, i32, i32) {
    %c0_i32 = arith.constant 0 : i32
    %c0_i32_0 = arith.constant 0 : i32
    return %arg0, %arg1, %c0_i32 : i32, i32, i32
  }
  func.func @transform_4(%arg0: i32, %arg1: i32, %arg2: i32) -> (i32, i32, i32) {
    %c0_i32 = arith.constant 0 : i32
    %c0_i32_0 = arith.constant 0 : i32
    return %arg0, %arg1, %c0_i32 : i32, i32, i32
  }
}

module attributes {stable_mosaic.version = 11 : i64} {
  func.func @_linear_kernel(%arg0: i32, %arg1: i32, %arg2: i32, %arg3: memref<16x128xbf16, #tpu.memory_space<vmem>>, %arg4: memref<128x256xbf16, #tpu.memory_space<vmem>>, %arg5: memref<16x256xbf16, #tpu.memory_space<vmem>>, %arg6: memref<16x256xf32, #tpu.memory_space<vmem>>) attributes {dimension_semantics = [#tpu.dimension_semantics<parallel>, #tpu.dimension_semantics<parallel>, #tpu.dimension_semantics<arbitrary>], iteration_bounds = array<i64: 1, 1, 1>, scalar_prefetch = 0 : i64, scratch_operands = 1 : i64, tpu.core_type = #tpu.core_type<tc>, window_params = [{transform_indices = @transform_0, window_bounds = array<i64: 16, 128>}, {transform_indices = @transform_1, window_bounds = array<i64: 128, 256>}, {transform_indices = @transform_2, window_bounds = array<i64: 16, 256>}]} {
    %c0_i32 = arith.constant 0 : i32
    %0 = arith.cmpi eq, %arg2, %c0_i32 : i32
    %1 = arith.extui %0 : i1 to i32
    %c0_i32_0 = arith.constant 0 : i32
    %2 = arith.cmpi ne, %1, %c0_i32_0 : i32
    scf.if %2 {
      %cst_10 = arith.constant 0.000000e+00 : f32
      %12 = vector.broadcast %cst_10 : f32 to vector<16x256xf32>
      %c0_11 = arith.constant 0 : index
      %c0_12 = arith.constant 0 : index
      %13 = vector.load %arg6[%c0_11, %c0_12] : memref<16x256xf32, #tpu.memory_space<vmem>>, vector<16x256xf32>
      tpu.vector_store %arg6[%c0_11, %c0_12], %12 {strides = array<i32>} : memref<16x256xf32, #tpu.memory_space<vmem>>, vector<16x256xf32>,
    } else {
    }
    %c0 = arith.constant 0 : index
    %c0_1 = arith.constant 0 : index
    %3 = vector.load %arg6[%c0, %c0_1] : memref<16x256xf32, #tpu.memory_space<vmem>>, vector<16x256xf32>
    %c0_2 = arith.constant 0 : index
    %c0_3 = arith.constant 0 : index
    %4 = vector.load %arg3[%c0_2, %c0_3] : memref<16x128xbf16, #tpu.memory_space<vmem>>, vector<16x128xbf16>
    %c0_4 = arith.constant 0 : index
    %c0_5 = arith.constant 0 : index
    %5 = vector.load %arg4[%c0_4, %c0_5] : memref<128x256xbf16, #tpu.memory_space<vmem>>, vector<128x256xbf16>
    %cst = arith.constant dense<0.000000e+00> : vector<16x256xf32>
    %6 = tpu.matmul %4, %5, %cst {dimension_numbers = #tpu.dot_dimension_numbers<[1], [0], [0], [1], [0, 0, 1, 1], [], []>} : vector<16x128xbf16>, vector<128x256xbf16>, vector<16x256xf32> -> vector<16x256xf32>
    %7 = arith.addf %3, %6 : vector<16x256xf32>
    %c0_6 = arith.constant 0 : index
    %c0_7 = arith.constant 0 : index
    %8 = vector.load %arg6[%c0_6, %c0_7] : memref<16x256xf32, #tpu.memory_space<vmem>>, vector<16x256xf32>
    tpu.vector_store %arg6[%c0_6, %c0_7], %7 {strides = array<i32>} : memref<16x256xf32, #tpu.memory_space<vmem>>, vector<16x256xf32>,
    %c0_i32_8 = arith.constant 0 : i32
    %9 = arith.cmpi eq, %arg2, %c0_i32_8 : i32
    %10 = arith.extui %9 : i1 to i32
    %c0_i32_9 = arith.constant 0 : i32
    %11 = arith.cmpi ne, %10, %c0_i32_9 : i32
    scf.if %11 {
      %c0_10 = arith.constant 0 : index
      %c0_11 = arith.constant 0 : index
      %12 = vector.load %arg6[%c0_10, %c0_11] : memref<16x256xf32, #tpu.memory_space<vmem>>, vector<16x256xf32>
      %13 = arith.truncf %12 : vector<16x256xf32> to vector<16x256xbf16>
      %c0_12 = arith.constant 0 : index
      %c0_13 = arith.constant 0 : index
      %14 = vector.load %arg5[%c0_12, %c0_13] : memref<16x256xbf16, #tpu.memory_space<vmem>>, vector<16x256xbf16>
      tpu.vector_store %arg5[%c0_12, %c0_13], %13 {strides = array<i32>} : memref<16x256xbf16, #tpu.memory_space<vmem>>, vector<16x256xbf16>,
    } else {
    }
    return
  }
  func.func @transform_0(%arg0: i32, %arg1: i32, %arg2: i32) -> (i32, i32) {
    %c0_i32 = arith.constant 0 : i32
    return %arg0, %arg2 : i32, i32
  }
  func.func @transform_1(%arg0: i32, %arg1: i32, %arg2: i32) -> (i32, i32) {
    %c0_i32 = arith.constant 0 : i32
    return %arg2, %arg1 : i32, i32
  }
  func.func @transform_2(%arg0: i32, %arg1: i32, %arg2: i32) -> (i32, i32) {
    %c0_i32 = arith.constant 0 : i32
    return %arg0, %arg1 : i32, i32
  }
}

module attributes {stable_mosaic.version = 11 : i64} {
  func.func @_linear_kernel(%arg0: i32, %arg1: i32, %arg2: i32, %arg3: memref<16x128xbf16, #tpu.memory_space<vmem>>, %arg4: memref<128x256xbf16, #tpu.memory_space<vmem>>, %arg5: memref<1x256xf32, #tpu.memory_space<vmem>>, %arg6: memref<16x256xbf16, #tpu.memory_space<vmem>>, %arg7: memref<16x256xf32, #tpu.memory_space<vmem>>) attributes {dimension_semantics = [#tpu.dimension_semantics<parallel>, #tpu.dimension_semantics<parallel>, #tpu.dimension_semantics<arbitrary>], iteration_bounds = array<i64: 1, 1, 1>, scalar_prefetch = 0 : i64, scratch_operands = 1 : i64, tpu.core_type = #tpu.core_type<tc>, window_params = [{transform_indices = @transform_0, window_bounds = array<i64: 16, 128>}, {transform_indices = @transform_1, window_bounds = array<i64: 128, 256>}, {transform_indices = @transform_2, window_bounds = array<i64: 1, 256>}, {transform_indices = @transform_3, window_bounds = array<i64: 16, 256>}]} {
    %c0_i32 = arith.constant 0 : i32
    %0 = arith.cmpi eq, %arg2, %c0_i32 : i32
    %1 = arith.extui %0 : i1 to i32
    %c0_i32_0 = arith.constant 0 : i32
    %2 = arith.cmpi ne, %1, %c0_i32_0 : i32
    scf.if %2 {
      %cst_10 = arith.constant 0.000000e+00 : f32
      %12 = vector.broadcast %cst_10 : f32 to vector<16x256xf32>
      %c0_11 = arith.constant 0 : index
      %c0_12 = arith.constant 0 : index
      %13 = vector.load %arg7[%c0_11, %c0_12] : memref<16x256xf32, #tpu.memory_space<vmem>>, vector<16x256xf32>
      tpu.vector_store %arg7[%c0_11, %c0_12], %12 {strides = array<i32>} : memref<16x256xf32, #tpu.memory_space<vmem>>, vector<16x256xf32>,
    } else {
    }
    %c0 = arith.constant 0 : index
    %c0_1 = arith.constant 0 : index
    %3 = vector.load %arg7[%c0, %c0_1] : memref<16x256xf32, #tpu.memory_space<vmem>>, vector<16x256xf32>
    %c0_2 = arith.constant 0 : index
    %c0_3 = arith.constant 0 : index
    %4 = vector.load %arg3[%c0_2, %c0_3] : memref<16x128xbf16, #tpu.memory_space<vmem>>, vector<16x128xbf16>
    %c0_4 = arith.constant 0 : index
    %c0_5 = arith.constant 0 : index
    %5 = vector.load %arg4[%c0_4, %c0_5] : memref<128x256xbf16, #tpu.memory_space<vmem>>, vector<128x256xbf16>
    %cst = arith.constant dense<0.000000e+00> : vector<16x256xf32>
    %6 = tpu.matmul %4, %5, %cst {dimension_numbers = #tpu.dot_dimension_numbers<[1], [0], [0], [1], [0, 0, 1, 1], [], []>} : vector<16x128xbf16>, vector<128x256xbf16>, vector<16x256xf32> -> vector<16x256xf32>
    %7 = arith.addf %3, %6 : vector<16x256xf32>
    %c0_6 = arith.constant 0 : index
    %c0_7 = arith.constant 0 : index
    %8 = vector.load %arg7[%c0_6, %c0_7] : memref<16x256xf32, #tpu.memory_space<vmem>>, vector<16x256xf32>
    tpu.vector_store %arg7[%c0_6, %c0_7], %7 {strides = array<i32>} : memref<16x256xf32, #tpu.memory_space<vmem>>, vector<16x256xf32>,
    %c0_i32_8 = arith.constant 0 : i32
    %9 = arith.cmpi eq, %arg2, %c0_i32_8 : i32
    %10 = arith.extui %9 : i1 to i32
    %c0_i32_9 = arith.constant 0 : i32
    %11 = arith.cmpi ne, %10, %c0_i32_9 : i32
    scf.if %11 {
      %c0_10 = arith.constant 0 : index
      %c0_11 = arith.constant 0 : index
      %12 = vector.load %arg7[%c0_10, %c0_11] : memref<16x256xf32, #tpu.memory_space<vmem>>, vector<16x256xf32>
      %c0_12 = arith.constant 0 : index
      %c0_13 = arith.constant 0 : index
      %13 = vector.load %arg5[%c0_12, %c0_13] : memref<1x256xf32, #tpu.memory_space<vmem>>, vector<1x256xf32>
      %14 = vector.broadcast %13 : vector<1x256xf32> to vector<16x256xf32>
      %15 = arith.addf %12, %14 : vector<16x256xf32>
      %cst_14 = arith.constant 0.000000e+00 : f32
      %16 = vector.broadcast %cst_14 : f32 to vector<16x256xf32>
      %17 = arith.maximumf %15, %16 : vector<16x256xf32>
      %18 = arith.truncf %17 : vector<16x256xf32> to vector<16x256xbf16>
      %c0_15 = arith.constant 0 : index
      %c0_16 = arith.constant 0 : index
      %19 = vector.load %arg6[%c0_15, %c0_16] : memref<16x256xbf16, #tpu.memory_space<vmem>>, vector<16x256xbf16>
      tpu.vector_store %arg6[%c0_15, %c0_16], %18 {strides = array<i32>} : memref<16x256xbf16, #tpu.memory_space<vmem>>, vector<16x256xbf16>,
    } else {
    }
    return
  }
  func.func @transform_0(%arg0: i32, %arg1: i32, %arg2: i32) -> (i32, i32) {
    %c0_i32 = arith.constant 0 : i32
    return %arg0, %arg2 : i32, i32
  }
  func.func @transform_1(%arg0: i32, %arg1: i32, %arg2: i32) -> (i32, i32) {
    %c0_i32 = arith.constant 0 : i32
    return %arg2, %arg1 : i32, i32
  }
  func.func @transform_2(%arg0: i32, %arg1: i32, %arg2: i32) -> (i32, i32) {
    %c0_i32 = arith.constant 0 : i32
    %c0_i32_0 = arith.constant 0 : i32
    return %c0_i32, %arg1 : i32, i32
  }
  func.func @transform_3(%arg0: i32, %arg1: i32, %arg2: i32) -> (i32, i32) {
    %c0_i32 = arith.constant 0 : i32
    return %arg0, %arg1 : i32, i32
  }
}

module attributes {stable_mosaic.version = 11 : i64} {
  func.func @_flash_attn_kernel(%arg0: i32, %arg1: i32, %arg2: i32, %arg3: memref<1x8x128xbf16, #tpu.memory_space<vmem>>, %arg4: memref<1x8x128xbf16, #tpu.memory_space<vmem>>, %arg5: memref<1x8x128xbf16, #tpu.memory_space<vmem>>, %arg6: memref<1x8x1xi32, #tpu.memory_space<vmem>>, %arg7: memref<1x8x128xbf16, #tpu.memory_space<vmem>>, %arg8: memref<8x4xf32, #tpu.memory_space<vmem>>, %arg9: memref<8x4xf32, #tpu.memory_space<vmem>>, %arg10: memref<8x128xf32, #tpu.memory_space<vmem>>) attributes {dimension_semantics = [#tpu.dimension_semantics<parallel>, #tpu.dimension_semantics<parallel>, #tpu.dimension_semantics<arbitrary>], iteration_bounds = array<i64: 2, 1, 1>, scalar_prefetch = 0 : i64, scratch_operands = 3 : i64, tpu.core_type = #tpu.core_type<tc>, window_params = [{transform_indices = @transform_0, window_bounds = array<i64: 1, 8, 128>}, {transform_indices = @transform_1, window_bounds = array<i64: 1, 8, 128>}, {transform_indices = @transform_2, window_bounds = array<i64: 1, 8, 128>}, {transform_indices = @transform_3, window_bounds = array<i64: 1, 8, 1>}, {transform_indices = @transform_4, window_bounds = array<i64: 1, 8, 128>}]} {
    %c0_i32 = arith.constant 0 : i32
    %0 = arith.cmpi eq, %arg2, %c0_i32 : i32
    %1 = arith.extui %0 : i1 to i32
    %c0_i32_0 = arith.constant 0 : i32
    %2 = arith.cmpi ne, %1, %c0_i32_0 : i32
    scf.if %2 {
      %cst_65 = arith.constant 0xFF800000 : f32
      %150 = vector.broadcast %cst_65 : f32 to vector<8x4xf32>
      %c0_66 = arith.constant 0 : index
      %c0_67 = arith.constant 0 : index
      %151 = vector.load %arg8[%c0_66, %c0_67] : memref<8x4xf32, #tpu.memory_space<vmem>>, vector<8x4xf32>
      tpu.vector_store %arg8[%c0_66, %c0_67], %150 {strides = array<i32>} : memref<8x4xf32, #tpu.memory_space<vmem>>, vector<8x4xf32>,
      %cst_68 = arith.constant 0.000000e+00 : f32
      %152 = vector.broadcast %cst_68 : f32 to vector<8x4xf32>
      %c0_69 = arith.constant 0 : index
      %c0_70 = arith.constant 0 : index
      %153 = vector.load %arg9[%c0_69, %c0_70] : memref<8x4xf32, #tpu.memory_space<vmem>>, vector<8x4xf32>
      tpu.vector_store %arg9[%c0_69, %c0_70], %152 {strides = array<i32>} : memref<8x4xf32, #tpu.memory_space<vmem>>, vector<8x4xf32>,
      %cst_71 = arith.constant 0.000000e+00 : f32
      %154 = vector.broadcast %cst_71 : f32 to vector<8x128xf32>
      %c0_72 = arith.constant 0 : index
      %c0_73 = arith.constant 0 : index
      %155 = vector.load %arg10[%c0_72, %c0_73] : memref<8x128xf32, #tpu.memory_space<vmem>>, vector<8x128xf32>
      tpu.vector_store %arg10[%c0_72, %c0_73], %154 {strides = array<i32>} : memref<8x128xf32, #tpu.memory_space<vmem>>, vector<8x128xf32>,
    } else {
    }
    %c0 = arith.constant 0 : index
    %c0_1 = arith.constant 0 : index
    %c0_2 = arith.constant 0 : index
    %3 = vector.load %arg3[%c0, %c0_1, %c0_2] : memref<1x8x128xbf16, #tpu.memory_space<vmem>>, vector<1x8x128xbf16>
    %4 = vector.shape_cast %3 : vector<1x8x128xbf16> to vector<8x128xbf16>
    %c0_3 = arith.constant 0 : index
    %c0_4 = arith.constant 0 : index
    %c0_5 = arith.constant 0 : index
    %5 = vector.load %arg4[%c0_3, %c0_4, %c0_5] : memref<1x8x128xbf16, #tpu.memory_space<vmem>>, vector<1x8x128xbf16>
    %6 = vector.shape_cast %5 : vector<1x8x128xbf16> to vector<8x128xbf16>
    %c0_6 = arith.constant 0 : index
    %c0_7 = arith.constant 0 : index
    %c0_8 = arith.constant 0 : index
    %7 = vector.load %arg5[%c0_6, %c0_7, %c0_8] : memref<1x8x128xbf16, #tpu.memory_space<vmem>>, vector<1x8x128xbf16>
    %8 = vector.shape_cast %7 : vector<1x8x128xbf16> to vector<8x128xbf16>
    %c0_9 = arith.constant 0 : index
    %c0_10 = arith.constant 0 : index
    %c0_11 = arith.constant 0 : index
    %9 = vector.load %arg6[%c0_9, %c0_10, %c0_11] : memref<1x8x1xi32, #tpu.memory_space<vmem>>, vector<1x8x1xi32>
    %10 = vector.shape_cast %9 : vector<1x8x1xi32> to vector<8x1xi32>
    %c8_i32 = arith.constant 8 : i32
    %11 = arith.muli %arg2, %c8_i32 : i32
    %12 = tpu.iota {dimensions = array<i32: 1>} : vector<8x8xi32>
    %13 = vector.broadcast %11 : i32 to vector<8x8xi32>
    %14 = arith.addi %13, %12 : vector<8x8xi32>
    %15 = vector.broadcast %10 : vector<8x1xi32> to vector<8x8xi32>
    %16 = arith.cmpi slt, %14, %15 : vector<8x8xi32>
    %17 = vector.extract_strided_slice %4 {offsets = [0, 0], sizes = [8, 32], strides = [1, 1]} : vector<8x128xbf16> to vector<8x32xbf16>
    %18 = vector.extract_strided_slice %6 {offsets = [0, 0], sizes = [8, 32], strides = [1, 1]} : vector<8x128xbf16> to vector<8x32xbf16>
    %19 = vector.extract_strided_slice %8 {offsets = [0, 0], sizes = [8, 32], strides = [1, 1]} : vector<8x128xbf16> to vector<8x32xbf16>
    %cst = arith.constant dense<0.000000e+00> : vector<8x8xf32>
    %20 = tpu.matmul %17, %18, %cst {dimension_numbers = #tpu.dot_dimension_numbers<[1], [1], [0], [0], [0, 0, 1, 0], [], []>} : vector<8x32xbf16>, vector<8x32xbf16>, vector<8x8xf32> -> vector<8x8xf32>
    %cst_12 = arith.constant 0.176776692 : f32
    %21 = vector.broadcast %cst_12 : f32 to vector<8x8xf32>
    %22 = arith.mulf %20, %21 : vector<8x8xf32>
    %cst_13 = arith.constant -1.000000e+06 : f32
    %23 = vector.broadcast %cst_13 : f32 to vector<8x8xf32>
    %24 = arith.select %16, %22, %23 : vector<8x8xi1>, vector<8x8xf32>
    %c0_14 = arith.constant 0 : index
    %c0_15 = arith.constant 0 : index
    %25 = vector.load %arg8[%c0_14, %c0_15] : memref<8x4xf32, #tpu.memory_space<vmem>>, vector<8x1xf32>
    %cst_16 = arith.constant dense<0xFF800000> : vector<8xf32>
    %26 = vector.multi_reduction <maximumf>, %24, %cst_16 [1] : vector<8x8xf32> to vector<8xf32>
    %27 = vector.shape_cast %26 : vector<8xf32> to vector<8x1xf32>
    %28 = arith.maximumf %25, %27 : vector<8x1xf32>
    %29 = arith.subf %25, %28 : vector<8x1xf32>
    %30 = math.exp %29 : vector<8x1xf32>
    %31 = vector.broadcast %28 : vector<8x1xf32> to vector<8x8xf32>
    %32 = arith.subf %24, %31 : vector<8x8xf32>
    %33 = math.exp %32 : vector<8x8xf32>
    %c0_17 = arith.constant 0 : index
    %c0_18 = arith.constant 0 : index
    %34 = vector.load %arg9[%c0_17, %c0_18] : memref<8x4xf32, #tpu.memory_space<vmem>>, vector<8x1xf32>
    %35 = arith.mulf %30, %34 : vector<8x1xf32>
    %cst_19 = arith.constant 0.000000e+00 : f32
    %36 = vector.broadcast %cst_19 : f32 to vector<8x8xf32>
    %37 = arith.mulf %24, %36 : vector<8x8xf32>
    %38 = arith.addf %37, %33 : vector<8x8xf32>
    %cst_20 = arith.constant dense<0.000000e+00> : vector<8xf32>
    %39 = vector.multi_reduction <add>, %38, %cst_20 [1] : vector<8x8xf32> to vector<8xf32>
    %40 = vector.shape_cast %39 : vector<8xf32> to vector<8x1xf32>
    %41 = arith.addf %35, %40 : vector<8x1xf32>
    %c0_21 = arith.constant 0 : index
    %c0_22 = arith.constant 0 : index
    %42 = vector.load %arg10[%c0_21, %c0_22] : memref<8x128xf32, #tpu.memory_space<vmem>>, vector<8x32xf32>
    %43 = vector.broadcast %30 : vector<8x1xf32> to vector<8x32xf32>
    %44 = arith.mulf %43, %42 : vector<8x32xf32>
    %45 = arith.truncf %33 : vector<8x8xf32> to vector<8x8xbf16>
    %cst_23 = arith.constant dense<0.000000e+00> : vector<8x32xf32>
    %46 = tpu.matmul %45, %19, %cst_23 {dimension_numbers = #tpu.dot_dimension_numbers<[1], [0], [0], [1], [0, 0, 1, 1], [], []>} : vector<8x8xbf16>, vector<8x32xbf16>, vector<8x32xf32> -> vector<8x32xf32>
    %47 = arith.addf %44, %46 : vector<8x32xf32>
    %48 = vector.extract_strided_slice %4 {offsets = [0, 32], sizes = [8, 32], strides = [1, 1]} : vector<8x128xbf16> to vector<8x32xbf16>
    %49 = vector.extract_strided_slice %6 {offsets = [0, 32], sizes = [8, 32], strides = [1, 1]} : vector<8x128xbf16> to vector<8x32xbf16>
    %50 = vector.extract_strided_slice %8 {offsets = [0, 32], sizes = [8, 32], strides = [1, 1]} : vector<8x128xbf16> to vector<8x32xbf16>
    %cst_24 = arith.constant dense<0.000000e+00> : vector<8x8xf32>
    %51 = tpu.matmul %48, %49, %cst_24 {dimension_numbers = #tpu.dot_dimension_numbers<[1], [1], [0], [0], [0, 0, 1, 0], [], []>} : vector<8x32xbf16>, vector<8x32xbf16>, vector<8x8xf32> -> vector<8x8xf32>
    %cst_25 = arith.constant 0.176776692 : f32
    %52 = vector.broadcast %cst_25 : f32 to vector<8x8xf32>
    %53 = arith.mulf %51, %52 : vector<8x8xf32>
    %cst_26 = arith.constant -1.000000e+06 : f32
    %54 = vector.broadcast %cst_26 : f32 to vector<8x8xf32>
    %55 = arith.select %16, %53, %54 : vector<8x8xi1>, vector<8x8xf32>
    %c0_27 = arith.constant 0 : index
    %c1 = arith.constant 1 : index
    %56 = vector.load %arg8[%c0_27, %c1] : memref<8x4xf32, #tpu.memory_space<vmem>>, vector<8x1xf32>
    %cst_28 = arith.constant dense<0xFF800000> : vector<8xf32>
    %57 = vector.multi_reduction <maximumf>, %55, %cst_28 [1] : vector<8x8xf32> to vector<8xf32>
    %58 = vector.shape_cast %57 : vector<8xf32> to vector<8x1xf32>
    %59 = arith.maximumf %56, %58 : vector<8x1xf32>
    %60 = arith.subf %56, %59 : vector<8x1xf32>
    %61 = math.exp %60 : vector<8x1xf32>
    %62 = vector.broadcast %59 : vector<8x1xf32> to vector<8x8xf32>
    %63 = arith.subf %55, %62 : vector<8x8xf32>
    %64 = math.exp %63 : vector<8x8xf32>
    %c0_29 = arith.constant 0 : index
    %c1_30 = arith.constant 1 : index
    %65 = vector.load %arg9[%c0_29, %c1_30] : memref<8x4xf32, #tpu.memory_space<vmem>>, vector<8x1xf32>
    %66 = arith.mulf %61, %65 : vector<8x1xf32>
    %cst_31 = arith.constant 0.000000e+00 : f32
    %67 = vector.broadcast %cst_31 : f32 to vector<8x8xf32>
    %68 = arith.mulf %55, %67 : vector<8x8xf32>
    %69 = arith.addf %68, %64 : vector<8x8xf32>
    %cst_32 = arith.constant dense<0.000000e+00> : vector<8xf32>
    %70 = vector.multi_reduction <add>, %69, %cst_32 [1] : vector<8x8xf32> to vector<8xf32>
    %71 = vector.shape_cast %70 : vector<8xf32> to vector<8x1xf32>
    %72 = arith.addf %66, %71 : vector<8x1xf32>
    %c0_33 = arith.constant 0 : index
    %c32 = arith.constant 32 : index
    %73 = vector.load %arg10[%c0_33, %c32] : memref<8x128xf32, #tpu.memory_space<vmem>>, vector<8x32xf32>
    %74 = vector.broadcast %61 : vector<8x1xf32> to vector<8x32xf32>
    %75 = arith.mulf %74, %73 : vector<8x32xf32>
    %76 = arith.truncf %64 : vector<8x8xf32> to vector<8x8xbf16>
    %cst_34 = arith.constant dense<0.000000e+00> : vector<8x32xf32>
    %77 = tpu.matmul %76, %50, %cst_34 {dimension_numbers = #tpu.dot_dimension_numbers<[1], [0], [0], [1], [0, 0, 1, 1], [], []>} : vector<8x8xbf16>, vector<8x32xbf16>, vector<8x32xf32> -> vector<8x32xf32>
    %78 = arith.addf %75, %77 : vector<8x32xf32>
    %79 = vector.extract_strided_slice %4 {offsets = [0, 64], sizes = [8, 32], strides = [1, 1]} : vector<8x128xbf16> to vector<8x32xbf16>
    %80 = vector.extract_strided_slice %6 {offsets = [0, 64], sizes = [8, 32], strides = [1, 1]} : vector<8x128xbf16> to vector<8x32xbf16>
    %81 = vector.extract_strided_slice %8 {offsets = [0, 64], sizes = [8, 32], strides = [1, 1]} : vector<8x128xbf16> to vector<8x32xbf16>
    %cst_35 = arith.constant dense<0.000000e+00> : vector<8x8xf32>
    %82 = tpu.matmul %79, %80, %cst_35 {dimension_numbers = #tpu.dot_dimension_numbers<[1], [1], [0], [0], [0, 0, 1, 0], [], []>} : vector<8x32xbf16>, vector<8x32xbf16>, vector<8x8xf32> -> vector<8x8xf32>
    %cst_36 = arith.constant 0.176776692 : f32
    %83 = vector.broadcast %cst_36 : f32 to vector<8x8xf32>
    %84 = arith.mulf %82, %83 : vector<8x8xf32>
    %cst_37 = arith.constant -1.000000e+06 : f32
    %85 = vector.broadcast %cst_37 : f32 to vector<8x8xf32>
    %86 = arith.select %16, %84, %85 : vector<8x8xi1>, vector<8x8xf32>
    %c0_38 = arith.constant 0 : index
    %c2 = arith.constant 2 : index
    %87 = vector.load %arg8[%c0_38, %c2] : memref<8x4xf32, #tpu.memory_space<vmem>>, vector<8x1xf32>
    %cst_39 = arith.constant dense<0xFF800000> : vector<8xf32>
    %88 = vector.multi_reduction <maximumf>, %86, %cst_39 [1] : vector<8x8xf32> to vector<8xf32>
    %89 = vector.shape_cast %88 : vector<8xf32> to vector<8x1xf32>
    %90 = arith.maximumf %87, %89 : vector<8x1xf32>
    %91 = arith.subf %87, %90 : vector<8x1xf32>
    %92 = math.exp %91 : vector<8x1xf32>
    %93 = vector.broadcast %90 : vector<8x1xf32> to vector<8x8xf32>
    %94 = arith.subf %86, %93 : vector<8x8xf32>
    %95 = math.exp %94 : vector<8x8xf32>
    %c0_40 = arith.constant 0 : index
    %c2_41 = arith.constant 2 : index
    %96 = vector.load %arg9[%c0_40, %c2_41] : memref<8x4xf32, #tpu.memory_space<vmem>>, vector<8x1xf32>
    %97 = arith.mulf %92, %96 : vector<8x1xf32>
    %cst_42 = arith.constant 0.000000e+00 : f32
    %98 = vector.broadcast %cst_42 : f32 to vector<8x8xf32>
    %99 = arith.mulf %86, %98 : vector<8x8xf32>
    %100 = arith.addf %99, %95 : vector<8x8xf32>
    %cst_43 = arith.constant dense<0.000000e+00> : vector<8xf32>
    %101 = vector.multi_reduction <add>, %100, %cst_43 [1] : vector<8x8xf32> to vector<8xf32>
    %102 = vector.shape_cast %101 : vector<8xf32> to vector<8x1xf32>
    %103 = arith.addf %97, %102 : vector<8x1xf32>
    %c0_44 = arith.constant 0 : index
    %c64 = arith.constant 64 : index
    %104 = vector.load %arg10[%c0_44, %c64] : memref<8x128xf32, #tpu.memory_space<vmem>>, vector<8x32xf32>
    %105 = vector.broadcast %92 : vector<8x1xf32> to vector<8x32xf32>
    %106 = arith.mulf %105, %104 : vector<8x32xf32>
    %107 = arith.truncf %95 : vector<8x8xf32> to vector<8x8xbf16>
    %cst_45 = arith.constant dense<0.000000e+00> : vector<8x32xf32>
    %108 = tpu.matmul %107, %81, %cst_45 {dimension_numbers = #tpu.dot_dimension_numbers<[1], [0], [0], [1], [0, 0, 1, 1], [], []>} : vector<8x8xbf16>, vector<8x32xbf16>, vector<8x32xf32> -> vector<8x32xf32>
    %109 = arith.addf %106, %108 : vector<8x32xf32>
    %110 = vector.extract_strided_slice %4 {offsets = [0, 96], sizes = [8, 32], strides = [1, 1]} : vector<8x128xbf16> to vector<8x32xbf16>
    %111 = vector.extract_strided_slice %6 {offsets = [0, 96], sizes = [8, 32], strides = [1, 1]} : vector<8x128xbf16> to vector<8x32xbf16>
    %112 = vector.extract_strided_slice %8 {offsets = [0, 96], sizes = [8, 32], strides = [1, 1]} : vector<8x128xbf16> to vector<8x32xbf16>
    %cst_46 = arith.constant dense<0.000000e+00> : vector<8x8xf32>
    %113 = tpu.matmul %110, %111, %cst_46 {dimension_numbers = #tpu.dot_dimension_numbers<[1], [1], [0], [0], [0, 0, 1, 0], [], []>} : vector<8x32xbf16>, vector<8x32xbf16>, vector<8x8xf32> -> vector<8x8xf32>
    %cst_47 = arith.constant 0.176776692 : f32
    %114 = vector.broadcast %cst_47 : f32 to vector<8x8xf32>
    %115 = arith.mulf %113, %114 : vector<8x8xf32>
    %cst_48 = arith.constant -1.000000e+06 : f32
    %116 = vector.broadcast %cst_48 : f32 to vector<8x8xf32>
    %117 = arith.select %16, %115, %116 : vector<8x8xi1>, vector<8x8xf32>
    %c0_49 = arith.constant 0 : index
    %c3 = arith.constant 3 : index
    %118 = vector.load %arg8[%c0_49, %c3] : memref<8x4xf32, #tpu.memory_space<vmem>>, vector<8x1xf32>
    %cst_50 = arith.constant dense<0xFF800000> : vector<8xf32>
    %119 = vector.multi_reduction <maximumf>, %117, %cst_50 [1] : vector<8x8xf32> to vector<8xf32>
    %120 = vector.shape_cast %119 : vector<8xf32> to vector<8x1xf32>
    %121 = arith.maximumf %118, %120 : vector<8x1xf32>
    %122 = arith.subf %118, %121 : vector<8x1xf32>
    %123 = math.exp %122 : vector<8x1xf32>
    %124 = vector.broadcast %121 : vector<8x1xf32> to vector<8x8xf32>
    %125 = arith.subf %117, %124 : vector<8x8xf32>
    %126 = math.exp %125 : vector<8x8xf32>
    %c0_51 = arith.constant 0 : index
    %c3_52 = arith.constant 3 : index
    %127 = vector.load %arg9[%c0_51, %c3_52] : memref<8x4xf32, #tpu.memory_space<vmem>>, vector<8x1xf32>
    %128 = arith.mulf %123, %127 : vector<8x1xf32>
    %cst_53 = arith.constant 0.000000e+00 : f32
    %129 = vector.broadcast %cst_53 : f32 to vector<8x8xf32>
    %130 = arith.mulf %117, %129 : vector<8x8xf32>
    %131 = arith.addf %130, %126 : vector<8x8xf32>
    %cst_54 = arith.constant dense<0.000000e+00> : vector<8xf32>
    %132 = vector.multi_reduction <add>, %131, %cst_54 [1] : vector<8x8xf32> to vector<8xf32>
    %133 = vector.shape_cast %132 : vector<8xf32> to vector<8x1xf32>
    %134 = arith.addf %128, %133 : vector<8x1xf32>
    %c0_55 = arith.constant 0 : index
    %c96 = arith.constant 96 : index
    %135 = vector.load %arg10[%c0_55, %c96] : memref<8x128xf32, #tpu.memory_space<vmem>>, vector<8x32xf32>
    %136 = vector.broadcast %123 : vector<8x1xf32> to vector<8x32xf32>
    %137 = arith.mulf %136, %135 : vector<8x32xf32>
    %138 = arith.truncf %126 : vector<8x8xf32> to vector<8x8xbf16>
    %cst_56 = arith.constant dense<0.000000e+00> : vector<8x32xf32>
    %139 = tpu.matmul %138, %112, %cst_56 {dimension_numbers = #tpu.dot_dimension_numbers<[1], [0], [0], [1], [0, 0, 1, 1], [], []>} : vector<8x8xbf16>, vector<8x32xbf16>, vector<8x32xf32> -> vector<8x32xf32>
    %140 = arith.addf %137, %139 : vector<8x32xf32>
    %141 = tpu.concatenate %28, %59, %90, %121 in 1 : vector<8x1xf32>, vector<8x1xf32>, vector<8x1xf32>, vector<8x1xf32> -> vector<8x4xf32>
    %c0_57 = arith.constant 0 : index
    %c0_58 = arith.constant 0 : index
    %142 = vector.load %arg8[%c0_57, %c0_58] : memref<8x4xf32, #tpu.memory_space<vmem>>, vector<8x4xf32>
    tpu.vector_store %arg8[%c0_57, %c0_58], %141 {strides = array<i32>} : memref<8x4xf32, #tpu.memory_space<vmem>>, vector<8x4xf32>,
    %143 = tpu.concatenate %41, %72, %103, %134 in 1 : vector<8x1xf32>, vector<8x1xf32>, vector<8x1xf32>, vector<8x1xf32> -> vector<8x4xf32>
    %c0_59 = arith.constant 0 : index
    %c0_60 = arith.constant 0 : index
    %144 = vector.load %arg9[%c0_59, %c0_60] : memref<8x4xf32, #tpu.memory_space<vmem>>, vector<8x4xf32>
    tpu.vector_store %arg9[%c0_59, %c0_60], %143 {strides = array<i32>} : memref<8x4xf32, #tpu.memory_space<vmem>>, vector<8x4xf32>,
    %145 = tpu.concatenate %47, %78, %109, %140 in 1 : vector<8x32xf32>, vector<8x32xf32>, vector<8x32xf32>, vector<8x32xf32> -> vector<8x128xf32>
    %c0_61 = arith.constant 0 : index
    %c0_62 = arith.constant 0 : index
    %146 = vector.load %arg10[%c0_61, %c0_62] : memref<8x128xf32, #tpu.memory_space<vmem>>, vector<8x128xf32>
    tpu.vector_store %arg10[%c0_61, %c0_62], %145 {strides = array<i32>} : memref<8x128xf32, #tpu.memory_space<vmem>>, vector<8x128xf32>,
    %c0_i32_63 = arith.constant 0 : i32
    %147 = arith.cmpi eq, %arg2, %c0_i32_63 : i32
    %148 = arith.extui %147 : i1 to i32
    %c0_i32_64 = arith.constant 0 : i32
    %149 = arith.cmpi ne, %148, %c0_i32_64 : i32
    scf.if %149 {
      %c0_65 = arith.constant 0 : index
      %c0_66 = arith.constant 0 : index
      %150 = vector.load %arg9[%c0_65, %c0_66] : memref<8x4xf32, #tpu.memory_space<vmem>>, vector<8x1xf32>
      %151 = tpu.reciprocal %150 {approx = true} : vector<8x1xf32> -> vector<8x1xf32>
      %c0_67 = arith.constant 0 : index
      %c0_68 = arith.constant 0 : index
      %152 = vector.load %arg10[%c0_67, %c0_68] : memref<8x128xf32, #tpu.memory_space<vmem>>, vector<8x32xf32>
      %153 = vector.broadcast %151 : vector<8x1xf32> to vector<8x32xf32>
      %154 = arith.mulf %152, %153 : vector<8x32xf32>
      %c0_69 = arith.constant 0 : index
      %c1_70 = arith.constant 1 : index
      %155 = vector.load %arg9[%c0_69, %c1_70] : memref<8x4xf32, #tpu.memory_space<vmem>>, vector<8x1xf32>
      %156 = tpu.reciprocal %155 {approx = true} : vector<8x1xf32> -> vector<8x1xf32>
      %c0_71 = arith.constant 0 : index
      %c32_72 = arith.constant 32 : index
      %157 = vector.load %arg10[%c0_71, %c32_72] : memref<8x128xf32, #tpu.memory_space<vmem>>, vector<8x32xf32>
      %158 = vector.broadcast %156 : vector<8x1xf32> to vector<8x32xf32>
      %159 = arith.mulf %157, %158 : vector<8x32xf32>
      %c0_73 = arith.constant 0 : index
      %c2_74 = arith.constant 2 : index
      %160 = vector.load %arg9[%c0_73, %c2_74] : memref<8x4xf32, #tpu.memory_space<vmem>>, vector<8x1xf32>
      %161 = tpu.reciprocal %160 {approx = true} : vector<8x1xf32> -> vector<8x1xf32>
      %c0_75 = arith.constant 0 : index
      %c64_76 = arith.constant 64 : index
      %162 = vector.load %arg10[%c0_75, %c64_76] : memref<8x128xf32, #tpu.memory_space<vmem>>, vector<8x32xf32>
      %163 = vector.broadcast %161 : vector<8x1xf32> to vector<8x32xf32>
      %164 = arith.mulf %162, %163 : vector<8x32xf32>
      %c0_77 = arith.constant 0 : index
      %c3_78 = arith.constant 3 : index
      %165 = vector.load %arg9[%c0_77, %c3_78] : memref<8x4xf32, #tpu.memory_space<vmem>>, vector<8x1xf32>
      %166 = tpu.reciprocal %165 {approx = true} : vector<8x1xf32> -> vector<8x1xf32>
      %c0_79 = arith.constant 0 : index
      %c96_80 = arith.constant 96 : index
      %167 = vector.load %arg10[%c0_79, %c96_80] : memref<8x128xf32, #tpu.memory_space<vmem>>, vector<8x32xf32>
      %168 = vector.broadcast %166 : vector<8x1xf32> to vector<8x32xf32>
      %169 = arith.mulf %167, %168 : vector<8x32xf32>
      %170 = tpu.concatenate %154, %159, %164, %169 in 1 : vector<8x32xf32>, vector<8x32xf32>, vector<8x32xf32>, vector<8x32xf32> -> vector<8x128xf32>
      %171 = arith.truncf %170 : vector<8x128xf32> to vector<8x128xbf16>
      %c0_81 = arith.constant 0 : index
      %c0_82 = arith.constant 0 : index
      %c0_83 = arith.constant 0 : index
      %172 = vector.load %arg7[%c0_81, %c0_82, %c0_83] : memref<1x8x128xbf16, #tpu.memory_space<vmem>>, vector<1x8x128xbf16>
      %173 = vector.shape_cast %172 : vector<1x8x128xbf16> to vector<8x128xbf16>
      %174 = vector.shape_cast %171 : vector<8x128xbf16> to vector<1x8x128xbf16>
      tpu.vector_store %arg7[%c0_81, %c0_82, %c0_83], %174 {strides = array<i32>} : memref<1x8x128xbf16, #tpu.memory_space<vmem>>, vector<1x8x128xbf16>,
    } else {
    }
    return
  }
  func.func @transform_0(%arg0: i32, %arg1: i32, %arg2: i32) -> (i32, i32, i32) {
    %c0_i32 = arith.constant 0 : i32
    %c0_i32_0 = arith.constant 0 : i32
    return %arg0, %arg1, %c0_i32 : i32, i32, i32
  }
  func.func @transform_1(%arg0: i32, %arg1: i32, %arg2: i32) -> (i32, i32, i32) {
    %c0_i32 = arith.constant 0 : i32
    %c0_i32_0 = arith.constant 0 : i32
    return %arg0, %arg2, %c0_i32 : i32, i32, i32
  }
  func.func @transform_2(%arg0: i32, %arg1: i32, %arg2: i32) -> (i32, i32, i32) {
    %c1_i32 = arith.constant 1 : i32
    %c0_i32 = arith.constant 0 : i32
    return %arg0, %arg2, %c1_i32 : i32, i32, i32
  }
  func.func @transform_3(%arg0: i32, %arg1: i32, %arg2: i32) -> (i32, i32, i32) {
    %c0_i32 = arith.constant 0 : i32
    %c0_i32_0 = arith.constant 0 : i32
    return %arg0, %arg1, %c0_i32 : i32, i32, i32
  }
  func.func @transform_4(%arg0: i32, %arg1: i32, %arg2: i32) -> (i32, i32, i32) {
    %c0_i32 = arith.constant 0 : i32
    %c0_i32_0 = arith.constant 0 : i32
    return %arg0, %arg1, %c0_i32 : i32, i32, i32
  }
}

module attributes {stable_mosaic.version = 11 : i64} {
  func.func @_linear_addnorm_kernel(%arg0: i32, %arg1: i32, %arg2: memref<16x256xbf16, #tpu.memory_space<vmem>>, %arg3: memref<256x128xbf16, #tpu.memory_space<vmem>>, %arg4: memref<1x128xf32, #tpu.memory_space<vmem>>, %arg5: memref<16x128xbf16, #tpu.memory_space<vmem>>, %arg6: memref<1x128xf32, #tpu.memory_space<vmem>>, %arg7: memref<1x128xf32, #tpu.memory_space<vmem>>, %arg8: memref<16x128xbf16, #tpu.memory_space<vmem>>, %arg9: memref<16x128xf32, #tpu.memory_space<vmem>>) attributes {dimension_semantics = [#tpu.dimension_semantics<parallel>, #tpu.dimension_semantics<arbitrary>], iteration_bounds = array<i64: 1, 1>, scalar_prefetch = 0 : i64, scratch_operands = 1 : i64, tpu.core_type = #tpu.core_type<tc>, window_params = [{transform_indices = @transform_0, window_bounds = array<i64: 16, 256>}, {transform_indices = @transform_1, window_bounds = array<i64: 256, 128>}, {pipeline_mode = #tpu.pipeline_mode<synchronous>, transform_indices = @transform_2, window_bounds = array<i64: 1, 128>}, {transform_indices = @transform_3, window_bounds = array<i64: 16, 128>}, {pipeline_mode = #tpu.pipeline_mode<synchronous>, transform_indices = @transform_4, window_bounds = array<i64: 1, 128>}, {pipeline_mode = #tpu.pipeline_mode<synchronous>, transform_indices = @transform_5, window_bounds = array<i64: 1, 128>}, {transform_indices = @transform_6, window_bounds = array<i64: 16, 128>}]} {
    %c0_i32 = arith.constant 0 : i32
    %0 = arith.cmpi eq, %arg1, %c0_i32 : i32
    %1 = arith.extui %0 : i1 to i32
    %c0_i32_0 = arith.constant 0 : i32
    %2 = arith.cmpi ne, %1, %c0_i32_0 : i32
    scf.if %2 {
      %cst_10 = arith.constant 0.000000e+00 : f32
      %12 = vector.broadcast %cst_10 : f32 to vector<16x128xf32>
      %c0_11 = arith.constant 0 : index
      %c0_12 = arith.constant 0 : index
      %13 = vector.load %arg9[%c0_11, %c0_12] : memref<16x128xf32, #tpu.memory_space<vmem>>, vector<16x128xf32>
      tpu.vector_store %arg9[%c0_11, %c0_12], %12 {strides = array<i32>} : memref<16x128xf32, #tpu.memory_space<vmem>>, vector<16x128xf32>,
    } else {
    }
    %c0 = arith.constant 0 : index
    %c0_1 = arith.constant 0 : index
    %3 = vector.load %arg9[%c0, %c0_1] : memref<16x128xf32, #tpu.memory_space<vmem>>, vector<16x128xf32>
    %c0_2 = arith.constant 0 : index
    %c0_3 = arith.constant 0 : index
    %4 = vector.load %arg2[%c0_2, %c0_3] : memref<16x256xbf16, #tpu.memory_space<vmem>>, vector<16x256xbf16>
    %c0_4 = arith.constant 0 : index
    %c0_5 = arith.constant 0 : index
    %5 = vector.load %arg3[%c0_4, %c0_5] : memref<256x128xbf16, #tpu.memory_space<vmem>>, vector<256x128xbf16>
    %cst = arith.constant dense<0.000000e+00> : vector<16x128xf32>
    %6 = tpu.matmul %4, %5, %cst {dimension_numbers = #tpu.dot_dimension_numbers<[1], [0], [0], [1], [0, 0, 1, 1], [], []>} : vector<16x256xbf16>, vector<256x128xbf16>, vector<16x128xf32> -> vector<16x128xf32>
    %7 = arith.addf %3, %6 : vector<16x128xf32>
    %c0_6 = arith.constant 0 : index
    %c0_7 = arith.constant 0 : index
    %8 = vector.load %arg9[%c0_6, %c0_7] : memref<16x128xf32, #tpu.memory_space<vmem>>, vector<16x128xf32>
    tpu.vector_store %arg9[%c0_6, %c0_7], %7 {strides = array<i32>} : memref<16x128xf32, #tpu.memory_space<vmem>>, vector<16x128xf32>,
    %c0_i32_8 = arith.constant 0 : i32
    %9 = arith.cmpi eq, %arg1, %c0_i32_8 : i32
    %10 = arith.extui %9 : i1 to i32
    %c0_i32_9 = arith.constant 0 : i32
    %11 = arith.cmpi ne, %10, %c0_i32_9 : i32
    scf.if %11 {
      %c0_10 = arith.constant 0 : index
      %c0_11 = arith.constant 0 : index
      %12 = vector.load %arg9[%c0_10, %c0_11] : memref<16x128xf32, #tpu.memory_space<vmem>>, vector<16x128xf32>
      %c0_12 = arith.constant 0 : index
      %c0_13 = arith.constant 0 : index
      %13 = vector.load %arg5[%c0_12, %c0_13] : memref<16x128xbf16, #tpu.memory_space<vmem>>, vector<16x128xbf16>
      %14 = arith.extf %13 : vector<16x128xbf16> to vector<16x128xf32>
      %15 = arith.addf %12, %14 : vector<16x128xf32>
      %c0_14 = arith.constant 0 : index
      %c0_15 = arith.constant 0 : index
      %16 = vector.load %arg4[%c0_14, %c0_15] : memref<1x128xf32, #tpu.memory_space<vmem>>, vector<1x128xf32>
      %17 = vector.broadcast %16 : vector<1x128xf32> to vector<16x128xf32>
      %18 = arith.addf %15, %17 : vector<16x128xf32>
      %cst_16 = arith.constant dense<0.000000e+00> : vector<16xf32>
      %19 = vector.multi_reduction <add>, %18, %cst_16 [1] : vector<16x128xf32> to vector<16xf32>
      %20 = vector.shape_cast %19 : vector<16xf32> to vector<16x1xf32>
      %cst_17 = arith.constant 1.280000e+02 : f32
      %21 = vector.broadcast %cst_17 : f32 to vector<16x1xf32>
      %22 = arith.divf %20, %21 : vector<16x1xf32>
      %23 = vector.broadcast %22 : vector<16x1xf32> to vector<16x128xf32>
      %24 = arith.subf %18, %23 : vector<16x128xf32>
      %25 = arith.mulf %24, %24 : vector<16x128xf32>
      %cst_18 = arith.constant dense<0.000000e+00> : vector<16xf32>
      %26 = vector.multi_reduction <add>, %25, %cst_18 [1] : vector<16x128xf32> to vector<16xf32>
      %27 = vector.shape_cast %26 : vector<16xf32> to vector<16x1xf32>
      %cst_19 = arith.constant 1.280000e+02 : f32
      %28 = vector.broadcast %cst_19 : f32 to vector<16x1xf32>
      %29 = arith.divf %27, %28 : vector<16x1xf32>
      %30 = vector.broadcast %22 : vector<16x1xf32> to vector<16x128xf32>
      %31 = arith.subf %18, %30 : vector<16x128xf32>
      %cst_20 = arith.constant 9.99999974E-6 : f32
      %32 = vector.broadcast %cst_20 : f32 to vector<16x1xf32>
      %33 = arith.addf %29, %32 : vector<16x1xf32>
      %34 = math.rsqrt %33 : vector<16x1xf32>
      %35 = vector.broadcast %34 : vector<16x1xf32> to vector<16x128xf32>
      %36 = arith.mulf %31, %35 : vector<16x128xf32>
      %c0_21 = arith.constant 0 : index
      %c0_22 = arith.constant 0 : index
      %37 = vector.load %arg6[%c0_21, %c0_22] : memref<1x128xf32, #tpu.memory_space<vmem>>, vector<1x128xf32>
      %38 = vector.broadcast %37 : vector<1x128xf32> to vector<16x128xf32>
      %39 = arith.mulf %36, %38 : vector<16x128xf32>
      %c0_23 = arith.constant 0 : index
      %c0_24 = arith.constant 0 : index
      %40 = vector.load %arg7[%c0_23, %c0_24] : memref<1x128xf32, #tpu.memory_space<vmem>>, vector<1x128xf32>
      %41 = vector.broadcast %40 : vector<1x128xf32> to vector<16x128xf32>
      %42 = arith.addf %39, %41 : vector<16x128xf32>
      %43 = arith.truncf %42 : vector<16x128xf32> to vector<16x128xbf16>
      %c0_25 = arith.constant 0 : index
      %c0_26 = arith.constant 0 : index
      %44 = vector.load %arg8[%c0_25, %c0_26] : memref<16x128xbf16, #tpu.memory_space<vmem>>, vector<16x128xbf16>
      tpu.vector_store %arg8[%c0_25, %c0_26], %43 {strides = array<i32>} : memref<16x128xbf16, #tpu.memory_space<vmem>>, vector<16x128xbf16>,
    } else {
    }
    return
  }
  func.func @transform_0(%arg0: i32, %arg1: i32) -> (i32, i32) {
    %c0_i32 = arith.constant 0 : i32
    return %arg0, %arg1 : i32, i32
  }
  func.func @transform_1(%arg0: i32, %arg1: i32) -> (i32, i32) {
    %c0_i32 = arith.constant 0 : i32
    %c0_i32_0 = arith.constant 0 : i32
    return %arg1, %c0_i32 : i32, i32
  }
  func.func @transform_2(%arg0: i32, %arg1: i32) -> (i32, i32) {
    %c0_i32 = arith.constant 0 : i32
    %c0_i32_0 = arith.constant 0 : i32
    %c0_i32_1 = arith.constant 0 : i32
    return %c0_i32, %c0_i32_0 : i32, i32
  }
  func.func @transform_3(%arg0: i32, %arg1: i32) -> (i32, i32) {
    %c0_i32 = arith.constant 0 : i32
    %c0_i32_0 = arith.constant 0 : i32
    return %arg0, %c0_i32 : i32, i32
  }
  func.func @transform_4(%arg0: i32, %arg1: i32) -> (i32, i32) {
    %c0_i32 = arith.constant 0 : i32
    %c0_i32_0 = arith.constant 0 : i32
    %c0_i32_1 = arith.constant 0 : i32
    return %c0_i32, %c0_i32_0 : i32, i32
  }
  func.func @transform_5(%arg0: i32, %arg1: i32) -> (i32, i32) {
    %c0_i32 = arith.constant 0 : i32
    %c0_i32_0 = arith.constant 0 : i32
    %c0_i32_1 = arith.constant 0 : i32
    return %c0_i32, %c0_i32_0 : i32, i32
  }
  func.func @transform_6(%arg0: i32, %arg1: i32) -> (i32, i32) {
    %c0_i32 = arith.constant 0 : i32
    %c0_i32_0 = arith.constant 0 : i32
    return %arg0, %c0_i32 : i32, i32
  }
}

module attributes {stable_mosaic.version = 11 : i64} {
  func.func @_linear_kernel(%arg0: i32, %arg1: i32, %arg2: i32, %arg3: memref<16x128xbf16, #tpu.memory_space<vmem>>, %arg4: memref<128x128xbf16, #tpu.memory_space<vmem>>, %arg5: memref<1x128xf32, #tpu.memory_space<vmem>>, %arg6: memref<16x128xf32, #tpu.memory_space<vmem>>, %arg7: memref<16x128xf32, #tpu.memory_space<vmem>>) attributes {dimension_semantics = [#tpu.dimension_semantics<parallel>, #tpu.dimension_semantics<parallel>, #tpu.dimension_semantics<arbitrary>], iteration_bounds = array<i64: 1, 1, 1>, scalar_prefetch = 0 : i64, scratch_operands = 1 : i64, tpu.core_type = #tpu.core_type<tc>, window_params = [{transform_indices = @transform_0, window_bounds = array<i64: 16, 128>}, {transform_indices = @transform_1, window_bounds = array<i64: 128, 128>}, {transform_indices = @transform_2, window_bounds = array<i64: 1, 128>}, {transform_indices = @transform_3, window_bounds = array<i64: 16, 128>}]} {
    %c0_i32 = arith.constant 0 : i32
    %0 = arith.cmpi eq, %arg2, %c0_i32 : i32
    %1 = arith.extui %0 : i1 to i32
    %c0_i32_0 = arith.constant 0 : i32
    %2 = arith.cmpi ne, %1, %c0_i32_0 : i32
    scf.if %2 {
      %cst_10 = arith.constant 0.000000e+00 : f32
      %12 = vector.broadcast %cst_10 : f32 to vector<16x128xf32>
      %c0_11 = arith.constant 0 : index
      %c0_12 = arith.constant 0 : index
      %13 = vector.load %arg7[%c0_11, %c0_12] : memref<16x128xf32, #tpu.memory_space<vmem>>, vector<16x128xf32>
      tpu.vector_store %arg7[%c0_11, %c0_12], %12 {strides = array<i32>} : memref<16x128xf32, #tpu.memory_space<vmem>>, vector<16x128xf32>,
    } else {
    }
    %c0 = arith.constant 0 : index
    %c0_1 = arith.constant 0 : index
    %3 = vector.load %arg7[%c0, %c0_1] : memref<16x128xf32, #tpu.memory_space<vmem>>, vector<16x128xf32>
    %c0_2 = arith.constant 0 : index
    %c0_3 = arith.constant 0 : index
    %4 = vector.load %arg3[%c0_2, %c0_3] : memref<16x128xbf16, #tpu.memory_space<vmem>>, vector<16x128xbf16>
    %c0_4 = arith.constant 0 : index
    %c0_5 = arith.constant 0 : index
    %5 = vector.load %arg4[%c0_4, %c0_5] : memref<128x128xbf16, #tpu.memory_space<vmem>>, vector<128x128xbf16>
    %cst = arith.constant dense<0.000000e+00> : vector<16x128xf32>
    %6 = tpu.matmul %4, %5, %cst {dimension_numbers = #tpu.dot_dimension_numbers<[1], [0], [0], [1], [0, 0, 1, 1], [], []>} : vector<16x128xbf16>, vector<128x128xbf16>, vector<16x128xf32> -> vector<16x128xf32>
    %7 = arith.addf %3, %6 : vector<16x128xf32>
    %c0_6 = arith.constant 0 : index
    %c0_7 = arith.constant 0 : index
    %8 = vector.load %arg7[%c0_6, %c0_7] : memref<16x128xf32, #tpu.memory_space<vmem>>, vector<16x128xf32>
    tpu.vector_store %arg7[%c0_6, %c0_7], %7 {strides = array<i32>} : memref<16x128xf32, #tpu.memory_space<vmem>>, vector<16x128xf32>,
    %c0_i32_8 = arith.constant 0 : i32
    %9 = arith.cmpi eq, %arg2, %c0_i32_8 : i32
    %10 = arith.extui %9 : i1 to i32
    %c0_i32_9 = arith.constant 0 : i32
    %11 = arith.cmpi ne, %10, %c0_i32_9 : i32
    scf.if %11 {
      %c0_10 = arith.constant 0 : index
      %c0_11 = arith.constant 0 : index
      %12 = vector.load %arg7[%c0_10, %c0_11] : memref<16x128xf32, #tpu.memory_space<vmem>>, vector<16x128xf32>
      %c0_12 = arith.constant 0 : index
      %c0_13 = arith.constant 0 : index
      %13 = vector.load %arg5[%c0_12, %c0_13] : memref<1x128xf32, #tpu.memory_space<vmem>>, vector<1x128xf32>
      %14 = vector.broadcast %13 : vector<1x128xf32> to vector<16x128xf32>
      %15 = arith.addf %12, %14 : vector<16x128xf32>
      %c0_14 = arith.constant 0 : index
      %c0_15 = arith.constant 0 : index
      %16 = vector.load %arg6[%c0_14, %c0_15] : memref<16x128xf32, #tpu.memory_space<vmem>>, vector<16x128xf32>
      tpu.vector_store %arg6[%c0_14, %c0_15], %15 {strides = array<i32>} : memref<16x128xf32, #tpu.memory_space<vmem>>, vector<16x128xf32>,
    } else {
    }
    return
  }
  func.func @transform_0(%arg0: i32, %arg1: i32, %arg2: i32) -> (i32, i32) {
    %c0_i32 = arith.constant 0 : i32
    return %arg0, %arg2 : i32, i32
  }
  func.func @transform_1(%arg0: i32, %arg1: i32, %arg2: i32) -> (i32, i32) {
    %c0_i32 = arith.constant 0 : i32
    return %arg2, %arg1 : i32, i32
  }
  func.func @transform_2(%arg0: i32, %arg1: i32, %arg2: i32) -> (i32, i32) {
    %c0_i32 = arith.constant 0 : i32
    %c0_i32_0 = arith.constant 0 : i32
    return %c0_i32, %arg1 : i32, i32
  }
  func.func @transform_3(%arg0: i32, %arg1: i32, %arg2: i32) -> (i32, i32) {
    %c0_i32 = arith.constant 0 : i32
    return %arg0, %arg1 : i32, i32
  }
}

</mosaic_0001>

<llo_original>
// kernel: transformer_decoder_forward.22
$region0: #{transformer_decoder_forward.22}
  #allocation0 [shape = 'u32[]', space=smem, size = 0x4, offset = 0x4, fixed_abs, tag = 'smem constant byte address 0x4 - core index']
  #allocation1 [shape = 'u32[144,128]{1,0:T(1,128)}', space=vmem, size = 0x12000, scoped, tag = 'internal scratch']
  #allocation2 [shape = 'f32[16,128]{1,0:T(8,128)}', space=vmem, size = 0x2000, scoped, tag = 'scratch operand']
  %s0 = inlined_call_operand.vmem [shape: bf16[16,128], index: 0, kind: input, shape index: {}]
  %s1 = inlined_call_operand.vmem [shape: bf16[128,128], index: 1, kind: input, shape index: {}]
  %s2 = inlined_call_operand.vmem [shape: bf16[16,128], index: 2, kind: output, shape index: {}]
  %s3 = sld [smem:[#allocation0]]
  $region26: #{transformer_decoder_forward.22} parent=0
    _
  %s5 = ssub.s32 1, %s3
  %s6 = scalar_select 0, %s5, %s3
  // Predicated region
  $region2: #{transformer_decoder_forward.22} parent=0 // pred_check
    _
  $region3: #{transformer_decoder_forward.22} parent=0 // pred_check_branch
    %8 = sbr.rel (0) target = $region5
  $region4: #{transformer_decoder_forward.22} parent=0 // pred_region
    _
  $region5: #{transformer_decoder_forward.22} parent=0 // pred_fallthru
    _
  // Predicated region
  $region6: #{transformer_decoder_forward.22} parent=0 // pred_check
    _
  $region7: #{transformer_decoder_forward.22} parent=0 // pred_check_branch
    %10 = sbr.rel (0) target = $region9
  $region8: #{transformer_decoder_forward.22} parent=0 // pred_region
    _
  $region9: #{transformer_decoder_forward.22} parent=0 // pred_fallthru
    _
  %p12 = scmp.eq.s32.totalorder 0, 0
  // Predicated region
  $region10: #{transformer_decoder_forward.22} parent=0 // pred_check
    %p13 = pneg %p12
  $region11: #{transformer_decoder_forward.22} parent=0 // pred_check_branch
    %15 = sbr.rel (%p13) target = $region13
  $region12: #{transformer_decoder_forward.22} parent=0 // pred_region
    %16 = vst [vmem:[#allocation2] sm:$0xff] 0.0
    %17 = vst [vmem:[#allocation2 + $0x8] sm:$0xff] 0.0
  $region13: #{transformer_decoder_forward.22} parent=0 // pred_fallthru
    _
  %v18 = vld [vmem:[#allocation2] sm:$0xff]
  %v19 = vld [vmem:[#allocation2 + $0x8] sm:$0xff]
  %v20 = vld [vmem:[%s0] sm:$0xf]
  %v21 = vld [vmem:[%s0 + $0x4] sm:$0xf]
  %v22 = vld [vmem:[%s1] sm:$0xf]
  %v23 = vld [vmem:[%s1 + $0x4] sm:$0xf]
  %v24 = vld [vmem:[%s1 + $0x8] sm:$0xf]
  %v25 = vld [vmem:[%s1 + $0xc] sm:$0xf]
  %v26 = vld [vmem:[%s1 + $0x10] sm:$0xf]
  %v27 = vld [vmem:[%s1 + $0x14] sm:$0xf]
  %v28 = vld [vmem:[%s1 + $0x18] sm:$0xf]
  %v29 = vld [vmem:[%s1 + $0x1c] sm:$0xf]
  %v30 = vld [vmem:[%s1 + $0x20] sm:$0xf]
  %v31 = vld [vmem:[%s1 + $0x24] sm:$0xf]
  %v32 = vld [vmem:[%s1 + $0x28] sm:$0xf]
  %v33 = vld [vmem:[%s1 + $0x2c] sm:$0xf]
  %v34 = vld [vmem:[%s1 + $0x30] sm:$0xf]
  %v35 = vld [vmem:[%s1 + $0x34] sm:$0xf]
  %v36 = vld [vmem:[%s1 + $0x38] sm:$0xf]
  %v37 = vld [vmem:[%s1 + $0x3c] sm:$0xf]
  %v40 = vunpack.c.l.b16 %v20
  %v41 = vunpack.c.l.b16 %v21
  %v42 = vpack.c.b16 %v41, %v40
  %v60 = vunpack.c.l.b16 %v22
  %v61 = vunpack.c.l.b16 %v23
  %v62 = vunpack.c.l.b16 %v24
  %v63 = vunpack.c.l.b16 %v25
  %v64 = vunpack.c.l.b16 %v26
  %v65 = vunpack.c.l.b16 %v27
  %v66 = vunpack.c.l.b16 %v28
  %v67 = vunpack.c.l.b16 %v29
  %v68 = vunpack.c.l.b16 %v30
  %v69 = vunpack.c.l.b16 %v31
  %v70 = vunpack.c.l.b16 %v32
  %v71 = vunpack.c.l.b16 %v33
  %v72 = vunpack.c.l.b16 %v34
  %v73 = vunpack.c.l.b16 %v35
  %v74 = vunpack.c.l.b16 %v36
  %v75 = vunpack.c.l.b16 %v37
  %v76 = vpack.c.b16 %v61, %v60
  %v77 = vpack.c.b16 %v63, %v62
  %v78 = vpack.c.b16 %v65, %v64
  %v79 = vpack.c.b16 %v67, %v66
  %v80 = vpack.c.b16 %v69, %v68
  %v81 = vpack.c.b16 %v71, %v70
  %v82 = vpack.c.b16 %v73, %v72
  %v83 = vpack.c.b16 %v75, %v74
  %92 = vmatprep.subr.bf16.mxu0 0
  %93 = vmatpush1.bf16.msra.mxu0 %v76
  %94 = vmatprep.subr.bf16.mxu0 0
  %95 = vmatpush1.bf16.msra.mxu0 %v77
  %96 = vmatprep.subr.bf16.mxu0 0
  %97 = vmatpush1.bf16.msra.mxu0 %v78
  %98 = vmatprep.subr.bf16.mxu0 0
  %99 = vmatpush1.bf16.msra.mxu0 %v79
  %100 = vmatprep.subr.bf16.mxu0 0
  %101 = vmatpush1.bf16.msra.mxu0 %v80
  %102 = vmatprep.subr.bf16.mxu0 0
  %103 = vmatpush1.bf16.msra.mxu0 %v81
  %104 = vmatprep.subr.bf16.mxu0 0
  %105 = vmatpush1.bf16.msra.mxu0 %v82
  %106 = vmatprep.subr.bf16.mxu0 0
  %107 = vmatpush1.bf16.msra.mxu0 %v83
  %108 = vmatprep.subr.bf16.mxu0 0
  %109 = vmatpush1.bf16.msra.mxu0 0
  %110 = vmatprep.subr.bf16.mxu0 0
  %111 = vmatpush1.bf16.msra.mxu0 0
  %112 = vmatprep.subr.bf16.mxu0 0
  %113 = vmatpush1.bf16.msra.mxu0 0
  %114 = vmatprep.subr.bf16.mxu0 0
  %115 = vmatpush1.bf16.msra.mxu0 0
  %116 = vmatprep.subr.bf16.mxu0 0
  %117 = vmatpush1.bf16.msra.mxu0 0
  %118 = vmatprep.subr.bf16.mxu0 0
  %119 = vmatpush1.bf16.msra.mxu0 0
  %120 = vmatprep.subr.bf16.mxu0 0
  %121 = vmatpush1.bf16.msra.mxu0 0
  %122 = vmatprep.subr.bf16.mxu0 0
  %123 = vmatpush1.bf16.msra.mxu0 0
  %124 = vmatprep.mubr.bf16.mxu0 0
  %125 = vmatmul.mubr.bf16.gmra.mrb[0].mxu0 %v42
  %v126 = vpop.f32.mrb[0].mxu0
  %v127 = vadd.f32 0.0, %v126
  %v128 = vpop.f32.mrb[0].mxu0
  %v129 = vpop.f32.mrb[0].mxu0
  %v130 = vadd.f32 0.0, %v129
  %v131 = vpop.f32.mrb[0].mxu0
  %132 = vdwg.mxu0
  %v133 = vadd.f32 %v18, %v127
  %v134 = vadd.f32 %v19, %v130
  %135 = vst [vmem:[#allocation2] sm:$0xff] %v133
  %136 = vst [vmem:[#allocation2 + $0x8] sm:$0xff] %v134
  // Predicated region
  $region14: #{transformer_decoder_forward.22} parent=0 // pred_check
    %p137 = pneg %p12
  $region15: #{transformer_decoder_forward.22} parent=0 // pred_check_branch
    %139 = sbr.rel (%p137) target = $region17
  $region16: #{transformer_decoder_forward.22} parent=0 // pred_region
    %v140 = vld [vmem:[#allocation2] sm:$0xff]
    %v141 = vld [vmem:[#allocation2 + $0x8] sm:$0xff]
    %v142 = vpack.c.bf16 %v141, %v140
    %v144 = vunpack.c.l.b16 %v142
    %v145 = vunpack.c.h.b16 %v142
    %v146 = vpack.c.b16 %v144, %v144
    %v147 = vpack.c.b16 %v145, %v145
    %150 = vst [vmem:[%s2] sm:$0xf] %v146
    %151 = vst [vmem:[%s2 + $0x4] sm:$0xf] %v147
  $region17: #{transformer_decoder_forward.22} parent=0 // pred_fallthru
    _
  // Predicated region
  $region18: #{transformer_decoder_forward.22} parent=0 // pred_check
    _
  $region19: #{transformer_decoder_forward.22} parent=0 // pred_check_branch
    %153 = sbr.rel (0) target = $region21
  $region20: #{transformer_decoder_forward.22} parent=0 // pred_region
    _
  $region21: #{transformer_decoder_forward.22} parent=0 // pred_fallthru
    _
  // Predicated region
  $region22: #{transformer_decoder_forward.22} parent=0 // pred_check
    _
  $region23: #{transformer_decoder_forward.22} parent=0 // pred_check_branch
    %155 = sbr.rel (0) target = $region25
  $region24: #{transformer_decoder_forward.22} parent=0 // pred_region
    _
  $region25: #{transformer_decoder_forward.22} parent=0 // pred_fallthru
    _

// kernel: transformer_decoder_forward.21
$region0: #{transformer_decoder_forward.21}
  #allocation0 [shape = 'u32[]', space=smem, size = 0x4, offset = 0x4, fixed_abs, tag = 'smem constant byte address 0x4 - core index']
  #allocation1 [shape = 'u32[144,128]{1,0:T(1,128)}', space=vmem, size = 0x12000, scoped, tag = 'internal scratch']
  #allocation2 [shape = 'f32[16,128]{1,0:T(8,128)}', space=vmem, size = 0x2000, scoped, tag = 'scratch operand']
  %s0 = inlined_call_operand.vmem [shape: bf16[16,128], index: 0, kind: input, shape index: {}]
  %s1 = inlined_call_operand.vmem [shape: bf16[128,128], index: 1, kind: input, shape index: {}]
  %s2 = inlined_call_operand.vmem [shape: bf16[16,128], index: 2, kind: input, shape index: {}]
  %s3 = inlined_call_operand.vmem [shape: f32[1,128], index: 3, kind: input, shape index: {}]
  %s4 = inlined_call_operand.vmem [shape: f32[1,128], index: 4, kind: input, shape index: {}]
  %s5 = inlined_call_operand.vmem [shape: bf16[16,128], index: 5, kind: output, shape index: {}]
  %s6 = sld [smem:[#allocation0]]
  $region38: #{transformer_decoder_forward.21} parent=0
    _
  %s8 = ssub.s32 1, %s6
  %s9 = scalar_select 0, %s8, %s6
  // Predicated region
  $region2: #{transformer_decoder_forward.21} parent=0 // pred_check
    _
  $region3: #{transformer_decoder_forward.21} parent=0 // pred_check_branch
    %11 = sbr.rel (0) target = $region5
  $region4: #{transformer_decoder_forward.21} parent=0 // pred_region
    _
  $region5: #{transformer_decoder_forward.21} parent=0 // pred_fallthru
    _
  // Predicated region
  $region6: #{transformer_decoder_forward.21} parent=0 // pred_check
    _
  $region7: #{transformer_decoder_forward.21} parent=0 // pred_check_branch
    %13 = sbr.rel (0) target = $region9
  $region8: #{transformer_decoder_forward.21} parent=0 // pred_region
    _
  $region9: #{transformer_decoder_forward.21} parent=0 // pred_fallthru
    _
  // Predicated region
  $region10: #{transformer_decoder_forward.21} parent=0 // pred_check
    _
  $region11: #{transformer_decoder_forward.21} parent=0 // pred_check_branch
    %15 = sbr.rel (0) target = $region13
  $region12: #{transformer_decoder_forward.21} parent=0 // pred_region
    _
  $region13: #{transformer_decoder_forward.21} parent=0 // pred_fallthru
    _
  // Predicated region
  $region14: #{transformer_decoder_forward.21} parent=0 // pred_check
    _
  $region15: #{transformer_decoder_forward.21} parent=0 // pred_check_branch
    %17 = sbr.rel (0) target = $region17
  $region16: #{transformer_decoder_forward.21} parent=0 // pred_region
    _
  $region17: #{transformer_decoder_forward.21} parent=0 // pred_fallthru
    _
  // Predicated region
  $region18: #{transformer_decoder_forward.21} parent=0 // pred_check
    _
  $region19: #{transformer_decoder_forward.21} parent=0 // pred_check_branch
    %19 = sbr.rel (0) target = $region21
  $region20: #{transformer_decoder_forward.21} parent=0 // pred_region
    _
  $region21: #{transformer_decoder_forward.21} parent=0 // pred_fallthru
    _
  %p21 = scmp.eq.s32.totalorder 0, 0
  // Predicated region
  $region22: #{transformer_decoder_forward.21} parent=0 // pred_check
    %p22 = pneg %p21
  $region23: #{transformer_decoder_forward.21} parent=0 // pred_check_branch
    %24 = sbr.rel (%p22) target = $region25
  $region24: #{transformer_decoder_forward.21} parent=0 // pred_region
    %25 = vst [vmem:[#allocation2] sm:$0xff] 0.0
    %26 = vst [vmem:[#allocation2 + $0x8] sm:$0xff] 0.0
  $region25: #{transformer_decoder_forward.21} parent=0 // pred_fallthru
    _
  %v27 = vld [vmem:[#allocation2] sm:$0xff]
  %v28 = vld [vmem:[#allocation2 + $0x8] sm:$0xff]
  %v29 = vld [vmem:[%s0] sm:$0xf]
  %v30 = vld [vmem:[%s0 + $0x4] sm:$0xf]
  %v31 = vld [vmem:[%s1] sm:$0xf]
  %v32 = vld [vmem:[%s1 + $0x4] sm:$0xf]
  %v33 = vld [vmem:[%s1 + $0x8] sm:$0xf]
  %v34 = vld [vmem:[%s1 + $0xc] sm:$0xf]
  %v35 = vld [vmem:[%s1 + $0x10] sm:$0xf]
  %v36 = vld [vmem:[%s1 + $0x14] sm:$0xf]
  %v37 = vld [vmem:[%s1 + $0x18] sm:$0xf]
  %v38 = vld [vmem:[%s1 + $0x1c] sm:$0xf]
  %v39 = vld [vmem:[%s1 + $0x20] sm:$0xf]
  %v40 = vld [vmem:[%s1 + $0x24] sm:$0xf]
  %v41 = vld [vmem:[%s1 + $0x28] sm:$0xf]
  %v42 = vld [vmem:[%s1 + $0x2c] sm:$0xf]
  %v43 = vld [vmem:[%s1 + $0x30] sm:$0xf]
  %v44 = vld [vmem:[%s1 + $0x34] sm:$0xf]
  %v45 = vld [vmem:[%s1 + $0x38] sm:$0xf]
  %v46 = vld [vmem:[%s1 + $0x3c] sm:$0xf]
  %v49 = vunpack.c.l.b16 %v29
  %v50 = vunpack.c.l.b16 %v30
  %v51 = vpack.c.b16 %v50, %v49
  %v69 = vunpack.c.l.b16 %v31
  %v70 = vunpack.c.l.b16 %v32
  %v71 = vunpack.c.l.b16 %v33
  %v72 = vunpack.c.l.b16 %v34
  %v73 = vunpack.c.l.b16 %v35
  %v74 = vunpack.c.l.b16 %v36
  %v75 = vunpack.c.l.b16 %v37
  %v76 = vunpack.c.l.b16 %v38
  %v77 = vunpack.c.l.b16 %v39
  %v78 = vunpack.c.l.b16 %v40
  %v79 = vunpack.c.l.b16 %v41
  %v80 = vunpack.c.l.b16 %v42
  %v81 = vunpack.c.l.b16 %v43
  %v82 = vunpack.c.l.b16 %v44
  %v83 = vunpack.c.l.b16 %v45
  %v84 = vunpack.c.l.b16 %v46
  %v85 = vpack.c.b16 %v70, %v69
  %v86 = vpack.c.b16 %v72, %v71
  %v87 = vpack.c.b16 %v74, %v73
  %v88 = vpack.c.b16 %v76, %v75
  %v89 = vpack.c.b16 %v78, %v77
  %v90 = vpack.c.b16 %v80, %v79
  %v91 = vpack.c.b16 %v82, %v81
  %v92 = vpack.c.b16 %v84, %v83
  %101 = vmatprep.subr.bf16.mxu0 0
  %102 = vmatpush1.bf16.msra.mxu0 %v85
  %103 = vmatprep.subr.bf16.mxu0 0
  %104 = vmatpush1.bf16.msra.mxu0 %v86
  %105 = vmatprep.subr.bf16.mxu0 0
  %106 = vmatpush1.bf16.msra.mxu0 %v87
  %107 = vmatprep.subr.bf16.mxu0 0
  %108 = vmatpush1.bf16.msra.mxu0 %v88
  %109 = vmatprep.subr.bf16.mxu0 0
  %110 = vmatpush1.bf16.msra.mxu0 %v89
  %111 = vmatprep.subr.bf16.mxu0 0
  %112 = vmatpush1.bf16.msra.mxu0 %v90
  %113 = vmatprep.subr.bf16.mxu0 0
  %114 = vmatpush1.bf16.msra.mxu0 %v91
  %115 = vmatprep.subr.bf16.mxu0 0
  %116 = vmatpush1.bf16.msra.mxu0 %v92
  %117 = vmatprep.subr.bf16.mxu0 0
  %118 = vmatpush1.bf16.msra.mxu0 0
  %119 = vmatprep.subr.bf16.mxu0 0
  %120 = vmatpush1.bf16.msra.mxu0 0
  %121 = vmatprep.subr.bf16.mxu0 0
  %122 = vmatpush1.bf16.msra.mxu0 0
  %123 = vmatprep.subr.bf16.mxu0 0
  %124 = vmatpush1.bf16.msra.mxu0 0
  %125 = vmatprep.subr.bf16.mxu0 0
  %126 = vmatpush1.bf16.msra.mxu0 0
  %127 = vmatprep.subr.bf16.mxu0 0
  %128 = vmatpush1.bf16.msra.mxu0 0
  %129 = vmatprep.subr.bf16.mxu0 0
  %130 = vmatpush1.bf16.msra.mxu0 0
  %131 = vmatprep.subr.bf16.mxu0 0
  %132 = vmatpush1.bf16.msra.mxu0 0
  %133 = vmatprep.mubr.bf16.mxu0 0
  %134 = vmatmul.mubr.bf16.gmra.mrb[0].mxu0 %v51
  %v135 = vpop.f32.mrb[0].mxu0
  %v136 = vadd.f32 0.0, %v135
  %v137 = vpop.f32.mrb[0].mxu0
  %v138 = vpop.f32.mrb[0].mxu0
  %v139 = vadd.f32 0.0, %v138
  %v140 = vpop.f32.mrb[0].mxu0
  %141 = vdwg.mxu0
  %v142 = vadd.f32 %v27, %v136
  %v143 = vadd.f32 %v28, %v139
  %144 = vst [vmem:[#allocation2] sm:$0xff] %v142
  %145 = vst [vmem:[#allocation2 + $0x8] sm:$0xff] %v143
  // Predicated region
  $region26: #{transformer_decoder_forward.21} parent=0 // pred_check
    %p146 = pneg %p21
  $region27: #{transformer_decoder_forward.21} parent=0 // pred_check_branch
    %148 = sbr.rel (%p146) target = $region29
  $region28: #{transformer_decoder_forward.21} parent=0 // pred_region
    %v149 = vld [vmem:[#allocation2] sm:$0xff]
    %v150 = vld [vmem:[#allocation2 + $0x8] sm:$0xff]
    %v151 = vld [vmem:[%s2] sm:$0xf]
    %v152 = vld [vmem:[%s2 + $0x4] sm:$0xf]
    %v153 = vunpack.c.l.bf16 %v151
    %v154 = vunpack.c.l.bf16 %v152
    %v155 = vadd.f32 %v149, %v153
    %v156 = vadd.f32 %v150, %v154
    %157 = vadd.xlane.f32.xlu0 %v155
    %v158 = vpop.xlane.xlu0 %157
    %159 = vadd.xlane.f32.xlu0 %v156
    %v160 = vpop.xlane.xlu0 %159
    %v161 = vrcp.pop 128.0
    %v162 = vmul.f32 %v158, %v161
    %v163 = vmul.f32 %v160, %v161
    %v164 = vsub.f32 %v155, %v162
    %v165 = vsub.f32 %v156, %v163
    %v166 = vmul.f32 %v164, %v164
    %v167 = vmul.f32 %v165, %v165
    %168 = vadd.xlane.f32.xlu0 %v166
    %v169 = vpop.xlane.xlu0 %168
    %170 = vadd.xlane.f32.xlu0 %v167
    %v171 = vpop.xlane.xlu0 %170
    %v172 = vmul.f32 %v169, %v161
    %v173 = vmul.f32 %v171, %v161
    %v174 = vadd.f32 %v172, 1e-05
    %v175 = vadd.f32 %v173, 1e-05
    %v176 = vrsqrt.pop %v174
    %v177 = vrsqrt.pop %v175
    %v178 = vmul.f32 %v164, %v176
    %v179 = vmul.f32 %v165, %v177
    %v180 = vld [vmem:[%s3] sm:$0x1]
    %v182 = vlaneseq
    %v183 = vshrl.u32 %v182, 7
    %v184 = vsub.s32 0, %v183
    %v185 = vrot.slane %v180, %v184
    %v187 = vmul.f32 %v178, %v185
    %v188 = vmul.f32 %v179, %v185
    %v189 = vld [vmem:[%s4] sm:$0x1]
    %v191 = vlaneseq
    %v192 = vshrl.u32 %v191, 7
    %v193 = vsub.s32 0, %v192
    %v194 = vrot.slane %v189, %v193
    %v196 = vadd.f32 %v187, %v194
    %v197 = vadd.f32 %v188, %v194
    %v198 = vpack.c.bf16 %v197, %v196
    %v200 = vunpack.c.l.b16 %v198
    %v201 = vunpack.c.h.b16 %v198
    %v202 = vpack.c.b16 %v200, %v200
    %v203 = vpack.c.b16 %v201, %v201
    %206 = vst [vmem:[%s5] sm:$0xf] %v202
    %207 = vst [vmem:[%s5 + $0x4] sm:$0xf] %v203
  $region29: #{transformer_decoder_forward.21} parent=0 // pred_fallthru
    _
  // Predicated region
  $region30: #{transformer_decoder_forward.21} parent=0 // pred_check
    _
  $region31: #{transformer_decoder_forward.21} parent=0 // pred_check_branch
    %209 = sbr.rel (0) target = $region33
  $region32: #{transformer_decoder_forward.21} parent=0 // pred_region
    _
  $region33: #{transformer_decoder_forward.21} parent=0 // pred_fallthru
    _
  // Predicated region
  $region34: #{transformer_decoder_forward.21} parent=0 // pred_check
    _
  $region35: #{transformer_decoder_forward.21} parent=0 // pred_check_branch
    %211 = sbr.rel (0) target = $region37
  $region36: #{transformer_decoder_forward.21} parent=0 // pred_region
    _
  $region37: #{transformer_decoder_forward.21} parent=0 // pred_fallthru
    _

// kernel: transformer_decoder_forward.19
$region0: #{transformer_decoder_forward.19}
  #allocation0 [shape = 'u32[]', space=smem, size = 0x4, offset = 0x4, fixed_abs, tag = 'smem constant byte address 0x4 - core index']
  #allocation1 [shape = 'u32[144,128]{1,0:T(1,128)}', space=vmem, size = 0x12000, scoped, tag = 'internal scratch']
  #allocation2 [shape = 'f32[16,128]{1,0:T(8,128)}', space=vmem, size = 0x2000, scoped, tag = 'scratch operand']
  %s0 = inlined_call_operand.vmem [shape: bf16[16,128], index: 0, kind: input, shape index: {}]
  %s1 = inlined_call_operand.vmem [shape: bf16[128,384], index: 1, kind: input, shape index: {}]
  %s2 = inlined_call_operand.vmem [shape: bf16[16,384], index: 2, kind: output, shape index: {}]
  %s3 = sld [smem:[#allocation0]]
  $region127: #{transformer_decoder_forward.19} parent=0
    _
  %s5 = ssub.s32 1, %s3
  %s6 = scalar_select 0, %s5, %s3
  $region1: #{transformer_decoder_forward.19} parent=0
    #allocation3 [shape = 'u8[65536]{0}', space=vmem, size = 0x10000, scoped, tag = 'input window, operand 1']
    #allocation4 [shape = 'u8[8192]{0}', space=vmem, size = 0x2000, scoped, tag = 'output window, operand 0']
    loop: start=0, step=1, limit=5
    $region2: #{transformer_decoder_forward.19} parent=1 // loop_pre_header
      _
    $region3: #{transformer_decoder_forward.19} parent=1 // loop_header
      %s8 = sphi 0, %s12
      %p9 = scmp.ge.s32.totalorder %s8, 5
      %s15 = sphi 0, %s34
      %s16 = sphi 0, %s30
      %s17 = sphi 0, %s26
      %s18 = sphi 0, %s15
      %s19 = sphi 0, %s16
      %s20 = sphi 0, %s17
      %s21 = sphi 0, %s18
      %s22 = sphi 0, %s19
      %s23 = sphi 0, %s20
      %s39 = sphi 0, %s41
      %s42 = sphi 0, %s39
      %s43 = sphi 0, %s42
      %s59 = sphi 0, %s43
      %s67 = sphi 0, %s69
      %s70 = sphi 0, %s67
      %s71 = sphi 0, %s70
      %s87 = sphi 0, %s71
      %s95 = sphi 0, %s97
      %s98 = sphi 0, %s95
      %s99 = sphi 0, %s98
      %s115 = sphi 0, %s99
    $region4: #{transformer_decoder_forward.19} parent=1 // loop_header_branch
      %11 = sbr.rel (%p9) target = $region8
    $region5: #{transformer_decoder_forward.19} parent=1 // loop_body
      %s13 = ssub.s32 %s8, 1
      %s14 = ssub.s32 %s8, 2
      %s24 = sadd.s32 1, %s17
      %p25 = scmp.ge.s32.totalorder %s24, 1
      %s26 = scalar_select %p25, 0, %s24
      %s27 = sadd.s32 1, %s16
      %s28 = scalar_select %p25, %s27, %s16
      %p29 = scmp.ge.s32.totalorder %s28, 3
      %s30 = scalar_select %p29, 0, %s28
      %s31 = sadd.s32 1, %s15
      %s32 = scalar_select %p29, %s31, %s15
      %p33 = scmp.ge.s32.totalorder %s32, 1
      %s34 = scalar_select %p33, 0, %s32
      %s35 = ssub.s32 %s15, %s34
      %s36 = ssub.s32 %s17, %s26
      %s37 = sor.u32 %s35, %s36
      %p38 = scmp.eq.s32.totalorder %s37, 0
      %s40 = sadd.s32 %s39, 1
      %s41 = scalar_select %p38, %s39, %s40
      %p44 = pneg %p38
      %p45 = scmp.eq.s32.totalorder %s8, 2
      %p46 = por %p44, %p45
      %p47 = scmp.ne.s32.totalorder %s39, %s42
      %p48 = scmp.eq.s32.totalorder %s8, 0
      %p49 = por %p47, %p48
      %p50 = scmp.ne.s32.totalorder %s39, %s42
      %p51 = scmp.eq.s32.totalorder %s13, 2
      %p52 = por %p50, %p51
      %p53 = scmp.ne.s32.totalorder %s42, %s43
      %p54 = scmp.eq.s32.totalorder %s13, 0
      %p55 = por %p53, %p54
      %p56 = scmp.ne.s32.totalorder %s42, %s43
      %p57 = scmp.eq.s32.totalorder %s14, 2
      %p58 = por %p56, %p57
      %p60 = scmp.ne.s32.totalorder %s43, %s59
      %p61 = scmp.eq.s32.totalorder %s14, 0
      %p62 = por %p60, %p61
      %s63 = ssub.s32 %s17, %s26
      %s64 = ssub.s32 %s16, %s30
      %s65 = sor.u32 %s63, %s64
      %p66 = scmp.eq.s32.totalorder %s65, 0
      %s68 = sadd.s32 %s67, 1
      %s69 = scalar_select %p66, %s67, %s68
      %p72 = pneg %p66
      %p73 = scmp.eq.s32.totalorder %s8, 2
      %p74 = por %p72, %p73
      %p75 = scmp.ne.s32.totalorder %s67, %s70
      %p76 = scmp.eq.s32.totalorder %s8, 0
      %p77 = por %p75, %p76
      %p78 = scmp.ne.s32.totalorder %s67, %s70
      %p79 = scmp.eq.s32.totalorder %s13, 2
      %p80 = por %p78, %p79
      %p81 = scmp.ne.s32.totalorder %s70, %s71
      %p82 = scmp.eq.s32.totalorder %s13, 0
      %p83 = por %p81, %p82
      %p84 = scmp.ne.s32.totalorder %s70, %s71
      %p85 = scmp.eq.s32.totalorder %s14, 2
      %p86 = por %p84, %p85
      %p88 = scmp.ne.s32.totalorder %s71, %s87
      %p89 = scmp.eq.s32.totalorder %s14, 0
      %p90 = por %p88, %p89
      %s91 = ssub.s32 %s15, %s34
      %s92 = ssub.s32 %s16, %s30
      %s93 = sor.u32 %s91, %s92
      %p94 = scmp.eq.s32.totalorder %s93, 0
      %s96 = sadd.s32 %s95, 1
      %s97 = scalar_select %p94, %s95, %s96
      %p100 = pneg %p94
      %p101 = scmp.eq.s32.totalorder %s8, 2
      %p102 = por %p100, %p101
      %p103 = scmp.ne.s32.totalorder %s95, %s98
      %p104 = scmp.eq.s32.totalorder %s8, 0
      %p105 = por %p103, %p104
      %p106 = scmp.ne.s32.totalorder %s95, %s98
      %p107 = scmp.eq.s32.totalorder %s13, 2
      %p108 = por %p106, %p107
      %p109 = scmp.ne.s32.totalorder %s98, %s99
      %p110 = scmp.eq.s32.totalorder %s13, 0
      %p111 = por %p109, %p110
      %p112 = scmp.ne.s32.totalorder %s98, %s99
      %p113 = scmp.eq.s32.totalorder %s14, 2
      %p114 = por %p112, %p113
      %p116 = scmp.ne.s32.totalorder %s99, %s115
      %p117 = scmp.eq.s32.totalorder %s14, 0
      %p118 = por %p116, %p117
      %p119 = scmp.le.s32.totalorder 1, %s8
      %p120 = scmp.lt.s32.totalorder %s8, 4
      %p121 = pnand %p119, %p120
      %p122 = pneg %p121
      // Predicated region
      $region9: #{transformer_decoder_forward.19} parent=5 // pred_check
        _
      $region10: #{transformer_decoder_forward.19} parent=5 // pred_check_branch
        %124 = sbr.rel (%p121) target = $region12
      $region11: #{transformer_decoder_forward.19} parent=5 // pred_region
        %s125 = ssub.s32 %s8, 1
        // Predicated region
        $region13: #{transformer_decoder_forward.19} parent=11 // pred_check
          %p126 = pneg %p55
        $region14: #{transformer_decoder_forward.19} parent=11 // pred_check_branch
          %128 = sbr.rel (%p126) target = $region16
        $region15: #{transformer_decoder_forward.19} parent=11 // pred_region
          %s129 = smul.u32 2, %s18
          %p130 = scmp.lt.s32.totalorder %s129, 1
          %s131 = scalar_select %p130, %s129, 1
          %p132 = scmp.lt.s32.totalorder %s20, 0
          %s133 = scalar_select %p132, %s20, 0
          %s134 = sadd.s32 %s133, %s131
          %s135 = smul.addr %s134, 4
          %s136 = scalar_lea.vmem %s0, %s135
          %s137 = smul.u32 2, %s18
        $region16: #{transformer_decoder_forward.19} parent=11 // pred_fallthru
          _
      $region12: #{transformer_decoder_forward.19} parent=5 // pred_fallthru
        _
      %p138 = scmp.lt.s32.totalorder %s8, 3
      // Predicated region
      $region17: #{transformer_decoder_forward.19} parent=5 // pred_check
        %p139 = pneg %p138
      $region18: #{transformer_decoder_forward.19} parent=5 // pred_check_branch
        %141 = sbr.rel (%p139) target = $region20
      $region19: #{transformer_decoder_forward.19} parent=5 // pred_region
        // Predicated region
        $region21: #{transformer_decoder_forward.19} parent=19 // pred_check
          %p142 = pneg %p77
        $region22: #{transformer_decoder_forward.19} parent=19 // pred_check_branch
          %144 = sbr.rel (%p142) target = $region24
        $region23: #{transformer_decoder_forward.19} parent=19 // pred_region
          %s145 = sand.u32 %s67, 1
          %s146 = sand.u32 %s67, 1
          %s147 = smul.addr %s146, 64
          %s148 = scalar_lea.vmem [#allocation3], %s147
          %s149 = smul.u32 16, %s17
          %s150 = smul.addr %s149, 3
          %s151 = sadd.s32 %s16, %s150
          %s152 = smul.addr %s151, 4
          %s153 = scalar_lea.vmem %s1, %s152
          // Predicated region
          $region25: #{transformer_decoder_forward.19} parent=23 // pred_check
            _
          $region26: #{transformer_decoder_forward.19} parent=23 // pred_check_branch
            %155 = sbr.rel (0) target = $region28
          $region27: #{transformer_decoder_forward.19} parent=23 // pred_region
            // Predicated region
            $region29: #{transformer_decoder_forward.19} parent=27 // pred_check
              _
            $region30: #{transformer_decoder_forward.19} parent=27 // pred_check_branch
              %157 = sbr.rel target = $region32
            $region31: #{transformer_decoder_forward.19} parent=27 // pred_region
              // Predicated region
              $region44: #{transformer_decoder_forward.19} parent=31 // pred_check
                _
              $region45: #{transformer_decoder_forward.19} parent=31 // pred_check_branch
                %202 = sbr.rel (0) target = $region47
              $region46: #{transformer_decoder_forward.19} parent=31 // pred_region
                loop: start=0, step=1, limit=1
                $region48: #{transformer_decoder_forward.19} parent=46 // loop_pre_header
                  _
                $region49: #{transformer_decoder_forward.19} parent=46 // loop_header
                  %s204 = sphi 0, %s208
                  %p205 = scmp.ge.s32.totalorder %s204, 1
                  %s209 = sphi %s153, %s153
                  %s210 = sphi %s148, %s148
                $region50: #{transformer_decoder_forward.19} parent=46 // loop_header_branch
                  %207 = sbr.rel (%p205) target = $region54
                $region51: #{transformer_decoder_forward.19} parent=46 // loop_body
                  _
                $region52: #{transformer_decoder_forward.19} parent=46 // loop_footer
                  %s208 = sadd.s32 1, %s204
                $region53: #{transformer_decoder_forward.19} parent=46 // loop_footer_branch
                  %203 = sbr.rel target = $region49
                $region54: #{transformer_decoder_forward.19} parent=46 // loop_exit
                  _
                loop: start=0, step=1, limit=1
                $region55: #{transformer_decoder_forward.19} parent=46 // loop_pre_header
                  _
                $region56: #{transformer_decoder_forward.19} parent=46 // loop_header
                  %s213 = sphi 0, %s217
                  %p214 = scmp.ge.s32.totalorder %s213, 1
                  %s218 = sphi %s153, %s153
                  %s219 = sphi %s148, %s148
                $region57: #{transformer_decoder_forward.19} parent=46 // loop_header_branch
                  %216 = sbr.rel (%p214) target = $region61
                $region58: #{transformer_decoder_forward.19} parent=46 // loop_body
                  %v220 = vld [vmem:[%s218] sm:$0xf]
                  %221 = vst [vmem:[%s219] sm:$0xf] %v220
                  %v222 = vld [vmem:[%s218 + $0xc] sm:$0xf]
                  %223 = vst [vmem:[%s219 + $0x4] sm:$0xf] %v222
                  %v224 = vld [vmem:[%s218 + $0x18] sm:$0xf]
                  %225 = vst [vmem:[%s219 + $0x8] sm:$0xf] %v224
                  %v226 = vld [vmem:[%s218 + $0x24] sm:$0xf]
                  %227 = vst [vmem:[%s219 + $0xc] sm:$0xf] %v226
                  %v228 = vld [vmem:[%s218 + $0x30] sm:$0xf]
                  %229 = vst [vmem:[%s219 + $0x10] sm:$0xf] %v228
                  %v230 = vld [vmem:[%s218 + $0x3c] sm:$0xf]
                  %231 = vst [vmem:[%s219 + $0x14] sm:$0xf] %v230
                  %v232 = vld [vmem:[%s218 + $0x48] sm:$0xf]
                  %233 = vst [vmem:[%s219 + $0x18] sm:$0xf] %v232
                  %v234 = vld [vmem:[%s218 + $0x54] sm:$0xf]
                  %235 = vst [vmem:[%s219 + $0x1c] sm:$0xf] %v234
                  %v236 = vld [vmem:[%s218 + $0x60] sm:$0xf]
                  %237 = vst [vmem:[%s219 + $0x20] sm:$0xf] %v236
                  %v238 = vld [vmem:[%s218 + $0x6c] sm:$0xf]
                  %239 = vst [vmem:[%s219 + $0x24] sm:$0xf] %v238
                  %v240 = vld [vmem:[%s218 + $0x78] sm:$0xf]
                  %241 = vst [vmem:[%s219 + $0x28] sm:$0xf] %v240
                  %v242 = vld [vmem:[%s218 + $0x84] sm:$0xf]
                  %243 = vst [vmem:[%s219 + $0x2c] sm:$0xf] %v242
                  %v244 = vld [vmem:[%s218 + $0x90] sm:$0xf]
                  %245 = vst [vmem:[%s219 + $0x30] sm:$0xf] %v244
                  %v246 = vld [vmem:[%s218 + $0x9c] sm:$0xf]
                  %247 = vst [vmem:[%s219 + $0x34] sm:$0xf] %v246
                  %v248 = vld [vmem:[%s218 + $0xa8] sm:$0xf]
                  %249 = vst [vmem:[%s219 + $0x38] sm:$0xf] %v248
                  %v250 = vld [vmem:[%s218 + $0xb4] sm:$0xf]
                  %251 = vst [vmem:[%s219 + $0x3c] sm:$0xf] %v250
                $region59: #{transformer_decoder_forward.19} parent=46 // loop_footer
                  %s217 = sadd.s32 1, %s213
                $region60: #{transformer_decoder_forward.19} parent=46 // loop_footer_branch
                  %212 = sbr.rel target = $region56
                $region61: #{transformer_decoder_forward.19} parent=46 // loop_exit
                  _
              $region47: #{transformer_decoder_forward.19} parent=31 // pred_fallthru
                _
            $region32: #{transformer_decoder_forward.19} parent=27 // pred_fallthru
              _
            // Predicated region
            $region33: #{transformer_decoder_forward.19} parent=27 // pred_check
              _
            $region34: #{transformer_decoder_forward.19} parent=27 // pred_check_branch
              %159 = sbr.rel (0) target = $region36
            $region35: #{transformer_decoder_forward.19} parent=27 // pred_region
              loop: start=0, step=1, limit=1
              $region37: #{transformer_decoder_forward.19} parent=35 // loop_pre_header
                _
              $region38: #{transformer_decoder_forward.19} parent=35 // loop_header
                %s162 = sphi 0, %s166
                %p163 = scmp.ge.s32.totalorder %s162, 1
                %s167 = sphi %s153, %s153
                %s168 = sphi %s148, %s148
              $region39: #{transformer_decoder_forward.19} parent=35 // loop_header_branch
                %165 = sbr.rel (%p163) target = $region43
              $region40: #{transformer_decoder_forward.19} parent=35 // loop_body
                %v169 = vld [vmem:[%s167] sm:$0xf]
                %170 = vst [vmem:[%s168] sm:$0xf] %v169
                %v171 = vld [vmem:[%s167 + $0xc] sm:$0xf]
                %172 = vst [vmem:[%s168 + $0x4] sm:$0xf] %v171
                %v173 = vld [vmem:[%s167 + $0x18] sm:$0xf]
                %174 = vst [vmem:[%s168 + $0x8] sm:$0xf] %v173
                %v175 = vld [vmem:[%s167 + $0x24] sm:$0xf]
                %176 = vst [vmem:[%s168 + $0xc] sm:$0xf] %v175
                %v177 = vld [vmem:[%s167 + $0x30] sm:$0xf]
                %178 = vst [vmem:[%s168 + $0x10] sm:$0xf] %v177
                %v179 = vld [vmem:[%s167 + $0x3c] sm:$0xf]
                %180 = vst [vmem:[%s168 + $0x14] sm:$0xf] %v179
                %v181 = vld [vmem:[%s167 + $0x48] sm:$0xf]
                %182 = vst [vmem:[%s168 + $0x18] sm:$0xf] %v181
                %v183 = vld [vmem:[%s167 + $0x54] sm:$0xf]
                %184 = vst [vmem:[%s168 + $0x1c] sm:$0xf] %v183
                %v185 = vld [vmem:[%s167 + $0x60] sm:$0xf]
                %186 = vst [vmem:[%s168 + $0x20] sm:$0xf] %v185
                %v187 = vld [vmem:[%s167 + $0x6c] sm:$0xf]
                %188 = vst [vmem:[%s168 + $0x24] sm:$0xf] %v187
                %v189 = vld [vmem:[%s167 + $0x78] sm:$0xf]
                %190 = vst [vmem:[%s168 + $0x28] sm:$0xf] %v189
                %v191 = vld [vmem:[%s167 + $0x84] sm:$0xf]
                %192 = vst [vmem:[%s168 + $0x2c] sm:$0xf] %v191
                %v193 = vld [vmem:[%s167 + $0x90] sm:$0xf]
                %194 = vst [vmem:[%s168 + $0x30] sm:$0xf] %v193
                %v195 = vld [vmem:[%s167 + $0x9c] sm:$0xf]
                %196 = vst [vmem:[%s168 + $0x34] sm:$0xf] %v195
                %v197 = vld [vmem:[%s167 + $0xa8] sm:$0xf]
                %198 = vst [vmem:[%s168 + $0x38] sm:$0xf] %v197
                %v199 = vld [vmem:[%s167 + $0xb4] sm:$0xf]
                %200 = vst [vmem:[%s168 + $0x3c] sm:$0xf] %v199
              $region41: #{transformer_decoder_forward.19} parent=35 // loop_footer
                %s166 = sadd.s32 1, %s162
              $region42: #{transformer_decoder_forward.19} parent=35 // loop_footer_branch
                %161 = sbr.rel target = $region38
              $region43: #{transformer_decoder_forward.19} parent=35 // loop_exit
                _
            $region36: #{transformer_decoder_forward.19} parent=27 // pred_fallthru
              _
          $region28: #{transformer_decoder_forward.19} parent=23 // pred_fallthru
            _
          %252 = vnop
        $region24: #{transformer_decoder_forward.19} parent=19 // pred_fallthru
          _
      $region20: #{transformer_decoder_forward.19} parent=5 // pred_fallthru
        _
      %p253 = scmp.le.s32.totalorder 1, %s8
      %p254 = scmp.lt.s32.totalorder %s8, 4
      %p255 = pnand %p253, %p254
      %p256 = pneg %p255
      // Predicated region
      $region62: #{transformer_decoder_forward.19} parent=5 // pred_check
        _
      $region63: #{transformer_decoder_forward.19} parent=5 // pred_check_branch
        %258 = sbr.rel (%p255) target = $region65
      $region64: #{transformer_decoder_forward.19} parent=5 // pred_region
        %s259 = ssub.s32 %s8, 1
        %s260 = sand.u32 %s70, 1
        %s261 = sand.u32 %s70, 1
        %s262 = smul.addr %s261, 64
        %s263 = scalar_lea.vmem [#allocation3], %s262
        // Predicated region
        $region66: #{transformer_decoder_forward.19} parent=64 // pred_check
          %p264 = pneg %p83
        $region67: #{transformer_decoder_forward.19} parent=64 // pred_check_branch
          %266 = sbr.rel (%p264) target = $region69
        $region68: #{transformer_decoder_forward.19} parent=64 // pred_region
          _
        $region69: #{transformer_decoder_forward.19} parent=64 // pred_fallthru
          _
        %s267 = smul.u32 2, %s18
        %p268 = scmp.lt.s32.totalorder %s267, 1
        %s269 = scalar_select %p268, %s267, 1
        %p270 = scmp.lt.s32.totalorder %s20, 0
        %s271 = scalar_select %p270, %s20, 0
        %s272 = sadd.s32 %s271, %s269
        %s273 = smul.addr %s272, 4
        %s274 = scalar_lea.vmem %s0, %s273
        %p275 = pneg %p55
        %p276 = pneg %p52
        %s277 = sand.u32 %s70, 1
        %s278 = sand.u32 %s70, 1
        %s279 = smul.addr %s278, 64
        %s280 = scalar_lea.vmem [#allocation3], %s279
        %p281 = pneg %p83
        %p282 = pneg %p80
        %p283 = pneg %p111
        %p284 = pneg %p108
        %s285 = sand.u32 %s98, 1
        %s286 = sand.u32 %s98, 1
        %s287 = smul.addr %s286, 8
        %s288 = scalar_lea.vmem [#allocation4], %s287
        %s289 = smul.u32 2, %s18
        %p290 = scmp.lt.s32.totalorder %s289, 1
        %s291 = scalar_select %p290, %s289, 1
        %p292 = scmp.lt.s32.totalorder %s20, 0
        %s293 = scalar_select %p292, %s20, 0
        %s294 = sadd.s32 %s293, %s291
        %s295 = smul.addr %s294, 4
        %s296 = scalar_lea.vmem %s0, %s295
        %s297 = smul.u32 2, %s18
        %s298 = smul.u32 16, %s20
        %s299 = smul.u32 2, %s18
        %p301 = scmp.eq.s32.totalorder %s20, 0
        // Predicated region
        $region70: #{transformer_decoder_forward.19} parent=64 // pred_check
          %p302 = pneg %p301
        $region71: #{transformer_decoder_forward.19} parent=64 // pred_check_branch
          %304 = sbr.rel (%p302) target = $region73
        $region72: #{transformer_decoder_forward.19} parent=64 // pred_region
          %305 = vst [vmem:[#allocation2] sm:$0xff] 0.0
          %306 = vst [vmem:[#allocation2 + $0x8] sm:$0xff] 0.0
        $region73: #{transformer_decoder_forward.19} parent=64 // pred_fallthru
          _
        %v307 = vld [vmem:[#allocation2] sm:$0xff]
        %v308 = vld [vmem:[#allocation2 + $0x8] sm:$0xff]
        %v309 = vld [vmem:[%s296] sm:$0xf]
        %v310 = vld [vmem:[%s296 + $0x4] sm:$0xf]
        %v311 = vld [vmem:[%s263] sm:$0xf]
        %v312 = vld [vmem:[%s263 + $0x4] sm:$0xf]
        %v313 = vld [vmem:[%s263 + $0x8] sm:$0xf]
        %v314 = vld [vmem:[%s263 + $0xc] sm:$0xf]
        %v315 = vld [vmem:[%s263 + $0x10] sm:$0xf]
        %v316 = vld [vmem:[%s263 + $0x14] sm:$0xf]
        %v317 = vld [vmem:[%s263 + $0x18] sm:$0xf]
        %v318 = vld [vmem:[%s263 + $0x1c] sm:$0xf]
        %v319 = vld [vmem:[%s263 + $0x20] sm:$0xf]
        %v320 = vld [vmem:[%s263 + $0x24] sm:$0xf]
        %v321 = vld [vmem:[%s263 + $0x28] sm:$0xf]
        %v322 = vld [vmem:[%s263 + $0x2c] sm:$0xf]
        %v323 = vld [vmem:[%s263 + $0x30] sm:$0xf]
        %v324 = vld [vmem:[%s263 + $0x34] sm:$0xf]
        %v325 = vld [vmem:[%s263 + $0x38] sm:$0xf]
        %v326 = vld [vmem:[%s263 + $0x3c] sm:$0xf]
        %v329 = vunpack.c.l.b16 %v309
        %v330 = vunpack.c.l.b16 %v310
        %v331 = vpack.c.b16 %v330, %v329
        %v349 = vunpack.c.l.b16 %v311
        %v350 = vunpack.c.l.b16 %v312
        %v351 = vunpack.c.l.b16 %v313
        %v352 = vunpack.c.l.b16 %v314
        %v353 = vunpack.c.l.b16 %v315
        %v354 = vunpack.c.l.b16 %v316
        %v355 = vunpack.c.l.b16 %v317
        %v356 = vunpack.c.l.b16 %v318
        %v357 = vunpack.c.l.b16 %v319
        %v358 = vunpack.c.l.b16 %v320
        %v359 = vunpack.c.l.b16 %v321
        %v360 = vunpack.c.l.b16 %v322
        %v361 = vunpack.c.l.b16 %v323
        %v362 = vunpack.c.l.b16 %v324
        %v363 = vunpack.c.l.b16 %v325
        %v364 = vunpack.c.l.b16 %v326
        %v365 = vpack.c.b16 %v350, %v349
        %v366 = vpack.c.b16 %v352, %v351
        %v367 = vpack.c.b16 %v354, %v353
        %v368 = vpack.c.b16 %v356, %v355
        %v369 = vpack.c.b16 %v358, %v357
        %v370 = vpack.c.b16 %v360, %v359
        %v371 = vpack.c.b16 %v362, %v361
        %v372 = vpack.c.b16 %v364, %v363
        %381 = vmatprep.subr.bf16.mxu0 0
        %382 = vmatpush1.bf16.msra.mxu0 %v365
        %383 = vmatprep.subr.bf16.mxu0 0
        %384 = vmatpush1.bf16.msra.mxu0 %v366
        %385 = vmatprep.subr.bf16.mxu0 0
        %386 = vmatpush1.bf16.msra.mxu0 %v367
        %387 = vmatprep.subr.bf16.mxu0 0
        %388 = vmatpush1.bf16.msra.mxu0 %v368
        %389 = vmatprep.subr.bf16.mxu0 0
        %390 = vmatpush1.bf16.msra.mxu0 %v369
        %391 = vmatprep.subr.bf16.mxu0 0
        %392 = vmatpush1.bf16.msra.mxu0 %v370
        %393 = vmatprep.subr.bf16.mxu0 0
        %394 = vmatpush1.bf16.msra.mxu0 %v371
        %395 = vmatprep.subr.bf16.mxu0 0
        %396 = vmatpush1.bf16.msra.mxu0 %v372
        %397 = vmatprep.subr.bf16.mxu0 0
        %398 = vmatpush1.bf16.msra.mxu0 0
        %399 = vmatprep.subr.bf16.mxu0 0
        %400 = vmatpush1.bf16.msra.mxu0 0
        %401 = vmatprep.subr.bf16.mxu0 0
        %402 = vmatpush1.bf16.msra.mxu0 0
        %403 = vmatprep.subr.bf16.mxu0 0
        %404 = vmatpush1.bf16.msra.mxu0 0
        %405 = vmatprep.subr.bf16.mxu0 0
        %406 = vmatpush1.bf16.msra.mxu0 0
        %407 = vmatprep.subr.bf16.mxu0 0
        %408 = vmatpush1.bf16.msra.mxu0 0
        %409 = vmatprep.subr.bf16.mxu0 0
        %410 = vmatpush1.bf16.msra.mxu0 0
        %411 = vmatprep.subr.bf16.mxu0 0
        %412 = vmatpush1.bf16.msra.mxu0 0
        %413 = vmatprep.mubr.bf16.mxu0 0
        %414 = vmatmul.mubr.bf16.gmra.mrb[0].mxu0 %v331
        %v415 = vpop.f32.mrb[0].mxu0
        %v416 = vadd.f32 0.0, %v415
        %v417 = vpop.f32.mrb[0].mxu0
        %v418 = vpop.f32.mrb[0].mxu0
        %v419 = vadd.f32 0.0, %v418
        %v420 = vpop.f32.mrb[0].mxu0
        %421 = vdwg.mxu0
        %v422 = vadd.f32 %v307, %v416
        %v423 = vadd.f32 %v308, %v419
        %424 = vst [vmem:[#allocation2] sm:$0xff] %v422
        %425 = vst [vmem:[#allocation2 + $0x8] sm:$0xff] %v423
        // Predicated region
        $region74: #{transformer_decoder_forward.19} parent=64 // pred_check
          %p426 = pneg %p301
        $region75: #{transformer_decoder_forward.19} parent=64 // pred_check_branch
          %428 = sbr.rel (%p426) target = $region77
        $region76: #{transformer_decoder_forward.19} parent=64 // pred_region
          %v429 = vld [vmem:[#allocation2] sm:$0xff]
          %v430 = vld [vmem:[#allocation2 + $0x8] sm:$0xff]
          %v431 = vpack.c.bf16 %v430, %v429
          %v433 = vunpack.c.l.b16 %v431
          %v434 = vunpack.c.h.b16 %v431
          %v435 = vpack.c.b16 %v433, %v433
          %v436 = vpack.c.b16 %v434, %v434
          %439 = vst [vmem:[%s288] sm:$0xf] %v435
          %440 = vst [vmem:[%s288 + $0x4] sm:$0xf] %v436
        $region77: #{transformer_decoder_forward.19} parent=64 // pred_fallthru
          _
        %s441 = sand.u32 %s98, 1
        %s442 = sand.u32 %s98, 1
        %s443 = smul.addr %s442, 8
        %s444 = scalar_lea.vmem [#allocation4], %s443
        // Predicated region
        $region78: #{transformer_decoder_forward.19} parent=64 // pred_check
          %p445 = pneg %p108
        $region79: #{transformer_decoder_forward.19} parent=64 // pred_check_branch
          %447 = sbr.rel (%p445) target = $region81
        $region80: #{transformer_decoder_forward.19} parent=64 // pred_region
          %s448 = smul.u32 2, %s18
          %s449 = smul.addr %s448, 3
          %s450 = sadd.s32 %s19, %s449
          %s451 = smul.addr %s450, 4
          %s452 = scalar_lea.vmem %s2, %s451
          // Predicated region
          $region82: #{transformer_decoder_forward.19} parent=80 // pred_check
            _
          $region83: #{transformer_decoder_forward.19} parent=80 // pred_check_branch
            %454 = sbr.rel (0) target = $region85
          $region84: #{transformer_decoder_forward.19} parent=80 // pred_region
            // Predicated region
            $region86: #{transformer_decoder_forward.19} parent=84 // pred_check
              _
            $region87: #{transformer_decoder_forward.19} parent=84 // pred_check_branch
              %456 = sbr.rel target = $region89
            $region88: #{transformer_decoder_forward.19} parent=84 // pred_region
              // Predicated region
              $region101: #{transformer_decoder_forward.19} parent=88 // pred_check
                _
              $region102: #{transformer_decoder_forward.19} parent=88 // pred_check_branch
                %473 = sbr.rel (0) target = $region104
              $region103: #{transformer_decoder_forward.19} parent=88 // pred_region
                loop: start=0, step=1, limit=1
                $region105: #{transformer_decoder_forward.19} parent=103 // loop_pre_header
                  _
                $region106: #{transformer_decoder_forward.19} parent=103 // loop_header
                  %s475 = sphi 0, %s479
                  %p476 = scmp.ge.s32.totalorder %s475, 1
                  %s480 = sphi %s444, %s444
                  %s481 = sphi %s452, %s452
                $region107: #{transformer_decoder_forward.19} parent=103 // loop_header_branch
                  %478 = sbr.rel (%p476) target = $region111
                $region108: #{transformer_decoder_forward.19} parent=103 // loop_body
                  _
                $region109: #{transformer_decoder_forward.19} parent=103 // loop_footer
                  %s479 = sadd.s32 1, %s475
                $region110: #{transformer_decoder_forward.19} parent=103 // loop_footer_branch
                  %474 = sbr.rel target = $region106
                $region111: #{transformer_decoder_forward.19} parent=103 // loop_exit
                  _
                loop: start=0, step=1, limit=1
                $region112: #{transformer_decoder_forward.19} parent=103 // loop_pre_header
                  _
                $region113: #{transformer_decoder_forward.19} parent=103 // loop_header
                  %s484 = sphi 0, %s488
                  %p485 = scmp.ge.s32.totalorder %s484, 1
                  %s489 = sphi %s444, %s444
                  %s490 = sphi %s452, %s452
                $region114: #{transformer_decoder_forward.19} parent=103 // loop_header_branch
                  %487 = sbr.rel (%p485) target = $region118
                $region115: #{transformer_decoder_forward.19} parent=103 // loop_body
                  %v491 = vld [vmem:[%s489] sm:$0xf]
                  %492 = vst [vmem:[%s490] sm:$0xf] %v491
                  %v493 = vld [vmem:[%s489 + $0x4] sm:$0xf]
                  %494 = vst [vmem:[%s490 + $0xc] sm:$0xf] %v493
                $region116: #{transformer_decoder_forward.19} parent=103 // loop_footer
                  %s488 = sadd.s32 1, %s484
                $region117: #{transformer_decoder_forward.19} parent=103 // loop_footer_branch
                  %483 = sbr.rel target = $region113
                $region118: #{transformer_decoder_forward.19} parent=103 // loop_exit
                  _
              $region104: #{transformer_decoder_forward.19} parent=88 // pred_fallthru
                _
            $region89: #{transformer_decoder_forward.19} parent=84 // pred_fallthru
              _
            // Predicated region
            $region90: #{transformer_decoder_forward.19} parent=84 // pred_check
              _
            $region91: #{transformer_decoder_forward.19} parent=84 // pred_check_branch
              %458 = sbr.rel (0) target = $region93
            $region92: #{transformer_decoder_forward.19} parent=84 // pred_region
              loop: start=0, step=1, limit=1
              $region94: #{transformer_decoder_forward.19} parent=92 // loop_pre_header
                _
              $region95: #{transformer_decoder_forward.19} parent=92 // loop_header
                %s461 = sphi 0, %s465
                %p462 = scmp.ge.s32.totalorder %s461, 1
                %s466 = sphi %s444, %s444
                %s467 = sphi %s452, %s452
              $region96: #{transformer_decoder_forward.19} parent=92 // loop_header_branch
                %464 = sbr.rel (%p462) target = $region100
              $region97: #{transformer_decoder_forward.19} parent=92 // loop_body
                %v468 = vld [vmem:[%s466] sm:$0xf]
                %469 = vst [vmem:[%s467] sm:$0xf] %v468
                %v470 = vld [vmem:[%s466 + $0x4] sm:$0xf]
                %471 = vst [vmem:[%s467 + $0xc] sm:$0xf] %v470
              $region98: #{transformer_decoder_forward.19} parent=92 // loop_footer
                %s465 = sadd.s32 1, %s461
              $region99: #{transformer_decoder_forward.19} parent=92 // loop_footer_branch
                %460 = sbr.rel target = $region95
              $region100: #{transformer_decoder_forward.19} parent=92 // loop_exit
                _
            $region93: #{transformer_decoder_forward.19} parent=84 // pred_fallthru
              _
          $region85: #{transformer_decoder_forward.19} parent=80 // pred_fallthru
            _
          %495 = vnop
        $region81: #{transformer_decoder_forward.19} parent=64 // pred_fallthru
          _
      $region65: #{transformer_decoder_forward.19} parent=5 // pred_fallthru
        _
      %p496 = scmp.le.s32.totalorder 2, %s8
      // Predicated region
      $region119: #{transformer_decoder_forward.19} parent=5 // pred_check
        %p497 = pneg %p496
      $region120: #{transformer_decoder_forward.19} parent=5 // pred_check_branch
        %499 = sbr.rel (%p497) target = $region122
      $region121: #{transformer_decoder_forward.19} parent=5 // pred_region
        %s500 = ssub.s32 %s8, 2
        // Predicated region
        $region123: #{transformer_decoder_forward.19} parent=121 // pred_check
          %p501 = pneg %p114
        $region124: #{transformer_decoder_forward.19} parent=121 // pred_check_branch
          %503 = sbr.rel (%p501) target = $region126
        $region125: #{transformer_decoder_forward.19} parent=121 // pred_region
          %s504 = sand.u32 %s99, 1
          %s505 = sand.u32 %s99, 1
          %s506 = smul.addr %s505, 8
          %s507 = scalar_lea.vmem [#allocation4], %s506
        $region126: #{transformer_decoder_forward.19} parent=121 // pred_fallthru
          _
      $region122: #{transformer_decoder_forward.19} parent=5 // pred_fallthru
        _
    $region6: #{transformer_decoder_forward.19} parent=1 // loop_footer
      %s12 = sadd.s32 1, %s8
    $region7: #{transformer_decoder_forward.19} parent=1 // loop_footer_branch
      %7 = sbr.rel target = $region3
    $region8: #{transformer_decoder_forward.19} parent=1 // loop_exit
      _

// kernel: transformer_decoder_forward.20
$region0: #{transformer_decoder_forward.20}
  #allocation0 [shape = 'u32[]', space=smem, size = 0x4, offset = 0x4, fixed_abs, tag = 'smem constant byte address 0x4 - core index']
  #allocation1 [shape = 'u32[144,128]{1,0:T(1,128)}', space=vmem, size = 0x12000, scoped, tag = 'internal scratch']
  #allocation2 [shape = 'f32[8,4]{1,0:T(8,128)}', space=vmem, size = 0x1000, scoped, tag = 'scratch operand']
  #allocation3 [shape = 'f32[8,4]{1,0:T(8,128)}', space=vmem, size = 0x1000, scoped, tag = 'scratch operand']
  #allocation4 [shape = 'f32[8,128]{1,0:T(8,128)}', space=vmem, size = 0x1000, scoped, tag = 'scratch operand']
  %s0 = inlined_call_operand.vmem [shape: bf16[2,8,384], index: 0, kind: input, shape index: {}, may-alias: {0,1,2}]
  %s1 = inlined_call_operand.vmem [shape: bf16[2,8,384], index: 1, kind: input, shape index: {}, may-alias: {0,1,2}]
  %s2 = inlined_call_operand.vmem [shape: bf16[2,8,384], index: 2, kind: input, shape index: {}, may-alias: {0,1,2}]
  %s3 = inlined_call_operand.vmem [shape: s32[2,8,1], index: 3, kind: input, shape index: {}]
  %s4 = inlined_call_operand.vmem [shape: bf16[2,8,128], index: 4, kind: output, shape index: {}]
  %s5 = sld [smem:[#allocation0]]
  $region57: #{transformer_decoder_forward.20} parent=0
    _
  %s7 = ssub.s32 1, %s5
  %s8 = scalar_select 0, %s7, %s5
  loop: start=0, step=1, limit=4
  $region2: #{transformer_decoder_forward.20} parent=0 // loop_pre_header
    _
  $region3: #{transformer_decoder_forward.20} parent=0 // loop_header
    %s10 = sphi 0, %s14
    %p11 = scmp.ge.s32.totalorder %s10, 4
    %s17 = sphi 0, %s36
    %s18 = sphi 0, %s32
    %s19 = sphi 0, %s28
    %s20 = sphi 0, %s17
    %s21 = sphi 0, %s18
    %s22 = sphi 0, %s19
    %s23 = sphi 0, %s20
    %s24 = sphi 0, %s21
    %s25 = sphi 0, %s22
    %s41 = sphi 0, %s43
    %s44 = sphi 0, %s41
    %s45 = sphi 0, %s44
    %s61 = sphi 0, %s45
    %s69 = sphi 0, %s71
    %s72 = sphi 0, %s69
    %s73 = sphi 0, %s72
    %s89 = sphi 0, %s73
    %s97 = sphi 0, %s99
    %s100 = sphi 0, %s97
    %s101 = sphi 0, %s100
    %s117 = sphi 0, %s101
    %s125 = sphi 0, %s127
    %s128 = sphi 0, %s125
    %s129 = sphi 0, %s128
    %s145 = sphi 0, %s129
    %s153 = sphi 0, %s155
    %s156 = sphi 0, %s153
    %s157 = sphi 0, %s156
    %s173 = sphi 0, %s157
  $region4: #{transformer_decoder_forward.20} parent=0 // loop_header_branch
    %13 = sbr.rel (%p11) target = $region8
  $region5: #{transformer_decoder_forward.20} parent=0 // loop_body
    %s15 = ssub.s32 %s10, 1
    %s16 = ssub.s32 %s10, 2
    %s26 = sadd.s32 1, %s19
    %p27 = scmp.ge.s32.totalorder %s26, 1
    %s28 = scalar_select %p27, 0, %s26
    %s29 = sadd.s32 1, %s18
    %s30 = scalar_select %p27, %s29, %s18
    %p31 = scmp.ge.s32.totalorder %s30, 1
    %s32 = scalar_select %p31, 0, %s30
    %s33 = sadd.s32 1, %s17
    %s34 = scalar_select %p31, %s33, %s17
    %p35 = scmp.ge.s32.totalorder %s34, 2
    %s36 = scalar_select %p35, 0, %s34
    %s37 = ssub.s32 %s17, %s36
    %s38 = ssub.s32 %s18, %s32
    %s39 = sor.u32 %s37, %s38
    %p40 = scmp.eq.s32.totalorder %s39, 0
    %s42 = sadd.s32 %s41, 1
    %s43 = scalar_select %p40, %s41, %s42
    %p46 = pneg %p40
    %p47 = scmp.eq.s32.totalorder %s10, 1
    %p48 = por %p46, %p47
    %p49 = scmp.ne.s32.totalorder %s41, %s44
    %p50 = scmp.eq.s32.totalorder %s10, 0
    %p51 = por %p49, %p50
    %p52 = scmp.ne.s32.totalorder %s41, %s44
    %p53 = scmp.eq.s32.totalorder %s15, 1
    %p54 = por %p52, %p53
    %p55 = scmp.ne.s32.totalorder %s44, %s45
    %p56 = scmp.eq.s32.totalorder %s15, 0
    %p57 = por %p55, %p56
    %p58 = scmp.ne.s32.totalorder %s44, %s45
    %p59 = scmp.eq.s32.totalorder %s16, 1
    %p60 = por %p58, %p59
    %p62 = scmp.ne.s32.totalorder %s45, %s61
    %p63 = scmp.eq.s32.totalorder %s16, 0
    %p64 = por %p62, %p63
    %s65 = ssub.s32 %s17, %s36
    %s66 = ssub.s32 %s19, %s28
    %s67 = sor.u32 %s65, %s66
    %p68 = scmp.eq.s32.totalorder %s67, 0
    %s70 = sadd.s32 %s69, 1
    %s71 = scalar_select %p68, %s69, %s70
    %p74 = pneg %p68
    %p75 = scmp.eq.s32.totalorder %s10, 1
    %p76 = por %p74, %p75
    %p77 = scmp.ne.s32.totalorder %s69, %s72
    %p78 = scmp.eq.s32.totalorder %s10, 0
    %p79 = por %p77, %p78
    %p80 = scmp.ne.s32.totalorder %s69, %s72
    %p81 = scmp.eq.s32.totalorder %s15, 1
    %p82 = por %p80, %p81
    %p83 = scmp.ne.s32.totalorder %s72, %s73
    %p84 = scmp.eq.s32.totalorder %s15, 0
    %p85 = por %p83, %p84
    %p86 = scmp.ne.s32.totalorder %s72, %s73
    %p87 = scmp.eq.s32.totalorder %s16, 1
    %p88 = por %p86, %p87
    %p90 = scmp.ne.s32.totalorder %s73, %s89
    %p91 = scmp.eq.s32.totalorder %s16, 0
    %p92 = por %p90, %p91
    %s93 = ssub.s32 %s17, %s36
    %s94 = ssub.s32 %s19, %s28
    %s95 = sor.u32 %s93, %s94
    %p96 = scmp.eq.s32.totalorder %s95, 0
    %s98 = sadd.s32 %s97, 1
    %s99 = scalar_select %p96, %s97, %s98
    %p102 = pneg %p96
    %p103 = scmp.eq.s32.totalorder %s10, 1
    %p104 = por %p102, %p103
    %p105 = scmp.ne.s32.totalorder %s97, %s100
    %p106 = scmp.eq.s32.totalorder %s10, 0
    %p107 = por %p105, %p106
    %p108 = scmp.ne.s32.totalorder %s97, %s100
    %p109 = scmp.eq.s32.totalorder %s15, 1
    %p110 = por %p108, %p109
    %p111 = scmp.ne.s32.totalorder %s100, %s101
    %p112 = scmp.eq.s32.totalorder %s15, 0
    %p113 = por %p111, %p112
    %p114 = scmp.ne.s32.totalorder %s100, %s101
    %p115 = scmp.eq.s32.totalorder %s16, 1
    %p116 = por %p114, %p115
    %p118 = scmp.ne.s32.totalorder %s101, %s117
    %p119 = scmp.eq.s32.totalorder %s16, 0
    %p120 = por %p118, %p119
    %s121 = ssub.s32 %s17, %s36
    %s122 = ssub.s32 %s18, %s32
    %s123 = sor.u32 %s121, %s122
    %p124 = scmp.eq.s32.totalorder %s123, 0
    %s126 = sadd.s32 %s125, 1
    %s127 = scalar_select %p124, %s125, %s126
    %p130 = pneg %p124
    %p131 = scmp.eq.s32.totalorder %s10, 1
    %p132 = por %p130, %p131
    %p133 = scmp.ne.s32.totalorder %s125, %s128
    %p134 = scmp.eq.s32.totalorder %s10, 0
    %p135 = por %p133, %p134
    %p136 = scmp.ne.s32.totalorder %s125, %s128
    %p137 = scmp.eq.s32.totalorder %s15, 1
    %p138 = por %p136, %p137
    %p139 = scmp.ne.s32.totalorder %s128, %s129
    %p140 = scmp.eq.s32.totalorder %s15, 0
    %p141 = por %p139, %p140
    %p142 = scmp.ne.s32.totalorder %s128, %s129
    %p143 = scmp.eq.s32.totalorder %s16, 1
    %p144 = por %p142, %p143
    %p146 = scmp.ne.s32.totalorder %s129, %s145
    %p147 = scmp.eq.s32.totalorder %s16, 0
    %p148 = por %p146, %p147
    %s149 = ssub.s32 %s17, %s36
    %s150 = ssub.s32 %s18, %s32
    %s151 = sor.u32 %s149, %s150
    %p152 = scmp.eq.s32.totalorder %s151, 0
    %s154 = sadd.s32 %s153, 1
    %s155 = scalar_select %p152, %s153, %s154
    %p158 = pneg %p152
    %p159 = scmp.eq.s32.totalorder %s10, 1
    %p160 = por %p158, %p159
    %p161 = scmp.ne.s32.totalorder %s153, %s156
    %p162 = scmp.eq.s32.totalorder %s10, 0
    %p163 = por %p161, %p162
    %p164 = scmp.ne.s32.totalorder %s153, %s156
    %p165 = scmp.eq.s32.totalorder %s15, 1
    %p166 = por %p164, %p165
    %p167 = scmp.ne.s32.totalorder %s156, %s157
    %p168 = scmp.eq.s32.totalorder %s15, 0
    %p169 = por %p167, %p168
    %p170 = scmp.ne.s32.totalorder %s156, %s157
    %p171 = scmp.eq.s32.totalorder %s16, 1
    %p172 = por %p170, %p171
    %p174 = scmp.ne.s32.totalorder %s157, %s173
    %p175 = scmp.eq.s32.totalorder %s16, 0
    %p176 = por %p174, %p175
    %p177 = scmp.le.s32.totalorder 1, %s10
    %p178 = scmp.lt.s32.totalorder %s10, 3
    %p179 = pnand %p177, %p178
    %p180 = pneg %p179
    // Predicated region
    $region9: #{transformer_decoder_forward.20} parent=5 // pred_check
      _
    $region10: #{transformer_decoder_forward.20} parent=5 // pred_check_branch
      %182 = sbr.rel (%p179) target = $region12
    $region11: #{transformer_decoder_forward.20} parent=5 // pred_region
      %s183 = ssub.s32 %s10, 1
    $region12: #{transformer_decoder_forward.20} parent=5 // pred_fallthru
      _
    %p184 = scmp.lt.s32.totalorder %s10, 2
    // Predicated region
    $region13: #{transformer_decoder_forward.20} parent=5 // pred_check
      %p185 = pneg %p184
    $region14: #{transformer_decoder_forward.20} parent=5 // pred_check_branch
      %187 = sbr.rel (%p185) target = $region16
    $region15: #{transformer_decoder_forward.20} parent=5 // pred_region
      // Predicated region
      $region17: #{transformer_decoder_forward.20} parent=15 // pred_check
        %p188 = pneg %p51
      $region18: #{transformer_decoder_forward.20} parent=15 // pred_check_branch
        %190 = sbr.rel (%p188) target = $region20
      $region19: #{transformer_decoder_forward.20} parent=15 // pred_region
        %p191 = scmp.lt.s32.totalorder %s17, 1
        %s192 = scalar_select %p191, %s17, 1
        %p193 = scmp.lt.s32.totalorder %s18, 0
        %s194 = scalar_select %p193, %s18, 0
        %s195 = smul.addr %s194, 3
        %s196 = smul.addr %s192, 3
        %s197 = sadd.s32 %s195, %s196
        %s198 = smul.addr %s197, 4
        %s199 = scalar_lea.vmem %s0, %s198
      $region20: #{transformer_decoder_forward.20} parent=15 // pred_fallthru
        _
      // Predicated region
      $region21: #{transformer_decoder_forward.20} parent=15 // pred_check
        %p200 = pneg %p79
      $region22: #{transformer_decoder_forward.20} parent=15 // pred_check_branch
        %202 = sbr.rel (%p200) target = $region24
      $region23: #{transformer_decoder_forward.20} parent=15 // pred_region
        %p203 = scmp.lt.s32.totalorder %s17, 1
        %s204 = scalar_select %p203, %s17, 1
        %p205 = scmp.lt.s32.totalorder %s19, 0
        %s206 = scalar_select %p205, %s19, 0
        %s207 = smul.addr %s206, 3
        %s208 = sadd.s32 1, %s207
        %s209 = smul.addr %s204, 3
        %s210 = sadd.s32 %s208, %s209
        %s211 = smul.addr %s210, 4
        %s212 = scalar_lea.vmem %s1, %s211
      $region24: #{transformer_decoder_forward.20} parent=15 // pred_fallthru
        _
      // Predicated region
      $region25: #{transformer_decoder_forward.20} parent=15 // pred_check
        %p213 = pneg %p107
      $region26: #{transformer_decoder_forward.20} parent=15 // pred_check_branch
        %215 = sbr.rel (%p213) target = $region28
      $region27: #{transformer_decoder_forward.20} parent=15 // pred_region
        %p216 = scmp.lt.s32.totalorder %s17, 1
        %s217 = scalar_select %p216, %s17, 1
        %p218 = scmp.lt.s32.totalorder %s19, 0
        %s219 = scalar_select %p218, %s19, 0
        %s220 = smul.addr %s219, 3
        %s221 = sadd.s32 2, %s220
        %s222 = smul.addr %s217, 3
        %s223 = sadd.s32 %s221, %s222
        %s224 = smul.addr %s223, 4
        %s225 = scalar_lea.vmem %s2, %s224
      $region28: #{transformer_decoder_forward.20} parent=15 // pred_fallthru
        _
      // Predicated region
      $region29: #{transformer_decoder_forward.20} parent=15 // pred_check
        %p226 = pneg %p135
      $region30: #{transformer_decoder_forward.20} parent=15 // pred_check_branch
        %228 = sbr.rel (%p226) target = $region32
      $region31: #{transformer_decoder_forward.20} parent=15 // pred_region
        %p229 = scmp.lt.s32.totalorder %s17, 1
        %s230 = scalar_select %p229, %s17, 1
        %p231 = scmp.lt.s32.totalorder %s18, 0
        %s232 = scalar_select %p231, %s18, 0
        %s233 = sadd.s32 %s232, %s230
        %s234 = smul.addr %s233, 8
        %s235 = scalar_lea.vmem %s3, %s234
      $region32: #{transformer_decoder_forward.20} parent=15 // pred_fallthru
        _
    $region16: #{transformer_decoder_forward.20} parent=5 // pred_fallthru
      _
    %p236 = scmp.le.s32.totalorder 1, %s10
    %p237 = scmp.lt.s32.totalorder %s10, 3
    %p238 = pnand %p236, %p237
    %p239 = pneg %p238
    // Predicated region
    $region33: #{transformer_decoder_forward.20} parent=5 // pred_check
      _
    $region34: #{transformer_decoder_forward.20} parent=5 // pred_check_branch
      %241 = sbr.rel (%p238) target = $region36
    $region35: #{transformer_decoder_forward.20} parent=5 // pred_region
      %s242 = ssub.s32 %s10, 1
      %p243 = scmp.lt.s32.totalorder %s20, 1
      %s244 = scalar_select %p243, %s20, 1
      %p245 = scmp.lt.s32.totalorder %s21, 0
      %s246 = scalar_select %p245, %s21, 0
      %s247 = smul.addr %s246, 3
      %s248 = smul.addr %s244, 3
      %s249 = sadd.s32 %s247, %s248
      %s250 = smul.addr %s249, 4
      %s251 = scalar_lea.vmem %s0, %s250
      %p252 = pneg %p57
      %p253 = pneg %p54
      %p254 = scmp.lt.s32.totalorder %s20, 1
      %s255 = scalar_select %p254, %s20, 1
      %p256 = scmp.lt.s32.totalorder %s22, 0
      %s257 = scalar_select %p256, %s22, 0
      %s258 = smul.addr %s257, 3
      %s259 = sadd.s32 1, %s258
      %s260 = smul.addr %s255, 3
      %s261 = sadd.s32 %s259, %s260
      %s262 = smul.addr %s261, 4
      %s263 = scalar_lea.vmem %s1, %s262
      %p264 = pneg %p85
      %p265 = pneg %p82
      %p266 = scmp.lt.s32.totalorder %s20, 1
      %s267 = scalar_select %p266, %s20, 1
      %p268 = scmp.lt.s32.totalorder %s22, 0
      %s269 = scalar_select %p268, %s22, 0
      %s270 = smul.addr %s269, 3
      %s271 = sadd.s32 2, %s270
      %s272 = smul.addr %s267, 3
      %s273 = sadd.s32 %s271, %s272
      %s274 = smul.addr %s273, 4
      %s275 = scalar_lea.vmem %s2, %s274
      %p276 = pneg %p113
      %p277 = pneg %p110
      %p278 = scmp.lt.s32.totalorder %s20, 1
      %s279 = scalar_select %p278, %s20, 1
      %p280 = scmp.lt.s32.totalorder %s21, 0
      %s281 = scalar_select %p280, %s21, 0
      %s282 = sadd.s32 %s281, %s279
      %s283 = smul.addr %s282, 8
      %s284 = scalar_lea.vmem %s3, %s283
      %p285 = pneg %p141
      %p286 = pneg %p138
      %p287 = pneg %p169
      %p288 = pneg %p166
      %p289 = scmp.lt.s32.totalorder %s20, 1
      %s290 = scalar_select %p289, %s20, 1
      %p291 = scmp.lt.s32.totalorder %s21, 0
      %s292 = scalar_select %p291, %s21, 0
      %s293 = sadd.s32 %s292, %s290
      %s294 = smul.addr %s293, 4
      %s295 = scalar_lea.vmem %s4, %s294
      %p296 = scmp.lt.s32.totalorder %s20, 1
      %s297 = scalar_select %p296, %s20, 1
      %p298 = scmp.lt.s32.totalorder %s21, 0
      %s299 = scalar_select %p298, %s21, 0
      %s300 = smul.addr %s299, 3
      %s301 = smul.addr %s297, 3
      %s302 = sadd.s32 %s300, %s301
      %s303 = smul.addr %s302, 4
      %s304 = scalar_lea.vmem %s0, %s303
      %p305 = scmp.lt.s32.totalorder %s20, 1
      %s306 = scalar_select %p305, %s20, 1
      %p307 = scmp.lt.s32.totalorder %s22, 0
      %s308 = scalar_select %p307, %s22, 0
      %s309 = smul.addr %s308, 3
      %s310 = sadd.s32 1, %s309
      %s311 = smul.addr %s306, 3
      %s312 = sadd.s32 %s310, %s311
      %s313 = smul.addr %s312, 4
      %s314 = scalar_lea.vmem %s1, %s313
      %p315 = scmp.lt.s32.totalorder %s20, 1
      %s316 = scalar_select %p315, %s20, 1
      %p317 = scmp.lt.s32.totalorder %s22, 0
      %s318 = scalar_select %p317, %s22, 0
      %s319 = smul.addr %s318, 3
      %s320 = sadd.s32 2, %s319
      %s321 = smul.addr %s316, 3
      %s322 = sadd.s32 %s320, %s321
      %s323 = smul.addr %s322, 4
      %s324 = scalar_lea.vmem %s2, %s323
      %p325 = scmp.lt.s32.totalorder %s20, 1
      %s326 = scalar_select %p325, %s20, 1
      %p327 = scmp.lt.s32.totalorder %s21, 0
      %s328 = scalar_select %p327, %s21, 0
      %s329 = sadd.s32 %s328, %s326
      %s330 = smul.addr %s329, 8
      %s331 = scalar_lea.vmem %s3, %s330
      %p332 = scmp.lt.s32.totalorder %s20, 1
      %s333 = scalar_select %p332, %s20, 1
      %p334 = scmp.lt.s32.totalorder %s21, 0
      %s335 = scalar_select %p334, %s21, 0
      %s336 = sadd.s32 %s335, %s333
      %s337 = smul.addr %s336, 4
      %s338 = scalar_lea.vmem %s4, %s337
      %p340 = scmp.eq.s32.totalorder %s22, 0
      // Predicated region
      $region37: #{transformer_decoder_forward.20} parent=35 // pred_check
        %p341 = pneg %p340
      $region38: #{transformer_decoder_forward.20} parent=35 // pred_check_branch
        %343 = sbr.rel (%p341) target = $region40
      $region39: #{transformer_decoder_forward.20} parent=35 // pred_region
        %vm344 = vcmask 31744
        %345 = vst.msk [vmem:[#allocation2] sm:$0xff] %vm344, -inf
        %346 = vst.msk [vmem:[#allocation3] sm:$0xff] %vm344, 0.0
        %347 = vst [vmem:[#allocation4] sm:$0xff] 0.0
      $region40: #{transformer_decoder_forward.20} parent=35 // pred_fallthru
        _
      %v348 = vld [vmem:[%s304] sm:$0xf]
      %v349 = vld [vmem:[%s314] sm:$0xf]
      %v350 = vld [vmem:[%s324] sm:$0xf]
      %v351 = vld [vmem:[%s331] sm:$0xff]
      %s352 = smul.u32 %s22, 8
      %v353 = vlaneseq
      %v354 = vand.u32 %v353, 127
      %v355 = vstv %s352
      %v356 = vadd.s32 %v355, %v354
      %357 = vset.pattern.permute.xlu0 0
      %358 = vperm.xlu0 %357, %v351
      %v359 = vpop.permute.xlu0 %358
      %vm360 = vcmp.lt.s32.totalorder %v356, %v359
      %vm361 = vcmask 261120
      %v363 = vsel %vm361, %v348, 0
      %v366 = vsel %vm361, %v349, 0
      %368 = vmatprep.subr.bf16.mxu0 0
      %369 = vmatpush1.bf16.xpose.msra.mxu0 %v366
      %370 = vmatprep.subr.bf16.mxu0 0
      %371 = vmatpush1.bf16.xpose.msra.mxu0 0
      %372 = vmatprep.subr.bf16.mxu0 0
      %373 = vmatpush1.bf16.xpose.msra.mxu0 0
      %374 = vmatprep.subr.bf16.mxu0 0
      %375 = vmatpush1.bf16.xpose.msra.mxu0 0
      %376 = vmatprep.subr.bf16.mxu0 0
      %377 = vmatpush1.bf16.xpose.msra.mxu0 0
      %378 = vmatprep.subr.bf16.mxu0 0
      %379 = vmatpush1.bf16.xpose.msra.mxu0 0
      %380 = vmatprep.subr.bf16.mxu0 0
      %381 = vmatpush1.bf16.xpose.msra.mxu0 0
      %382 = vmatprep.subr.bf16.mxu0 0
      %383 = vmatpush1.bf16.xpose.msra.mxu0 0
      %384 = vmatprep.subr.bf16.mxu0 0
      %385 = vmatpush1.bf16.xpose.msra.mxu0 0
      %386 = vmatprep.subr.bf16.mxu0 0
      %387 = vmatpush1.bf16.xpose.msra.mxu0 0
      %388 = vmatprep.subr.bf16.mxu0 0
      %389 = vmatpush1.bf16.xpose.msra.mxu0 0
      %390 = vmatprep.subr.bf16.mxu0 0
      %391 = vmatpush1.bf16.xpose.msra.mxu0 0
      %392 = vmatprep.subr.bf16.mxu0 0
      %393 = vmatpush1.bf16.xpose.msra.mxu0 0
      %394 = vmatprep.subr.bf16.mxu0 0
      %395 = vmatpush1.bf16.xpose.msra.mxu0 0
      %396 = vmatprep.subr.bf16.mxu0 0
      %397 = vmatpush1.bf16.xpose.msra.mxu0 0
      %398 = vmatprep.subr.bf16.mxu0 0
      %399 = vmatpush1.bf16.xpose.msra.mxu0 0
      %400 = vmatprep.mubr.bf16.mxu0 0
      %401 = vmatmul.mubr.bf16.gmra.mrb[0].mxu0 %v363
      %v402 = vpop.f32.mrb[0].mxu0
      %v403 = vadd.f32 0.0, %v402
      %v404 = vpop.f32.mrb[0].mxu0
      %v405 = vpop.f32.mrb[0].mxu0
      %v406 = vpop.f32.mrb[0].mxu0
      %407 = vdwg.mxu0
      %v408 = vmul.f32 %v403, 0.17677669
      %v409 = vsel %vm360, %v408, -1000000.0
      %v410 = vld [vmem:[#allocation2] sm:$0xff]
      %vm411 = vcmask 64512
      %v412 = vsel %vm411, %v409, -inf
      %413 = vmax.xlane.f32.xlu0 %v412
      %v414 = vpop.xlane.xlu0 %413
      %v415 = vmax.f32 %v410, %v414
      %v416 = vsub.f32 %v410, %v415
      %v417 = vmul.f32 %v416, 1.442695
      %v418 = vpow.pop %v417
      %420 = vset.pattern.permute.xlu0 0
      %421 = vperm.xlu0 %420, %v415
      %v422 = vpop.permute.xlu0 %421
      %v424 = vsub.f32 %v409, %v422
      %v425 = vmul.f32 %v424, 1.442695
      %v426 = vpow.pop %v425
      %v427 = vld [vmem:[#allocation3] sm:$0xff]
      %v428 = vmul.f32 %v418, %v427
      %v429 = vmul.f32 %v409, 0.0
      %v430 = vadd.f32 %v429, %v426
      %v431 = vsel %vm411, %v430, 0.0
      %432 = vadd.xlane.f32.xlu0 %v431
      %v433 = vpop.xlane.xlu0 %432
      %v434 = vadd.f32 %v428, %v433
      %v435 = vld [vmem:[#allocation4] sm:$0xff]
      %437 = vset.pattern.permute.xlu0 0
      %438 = vperm.xlu0 %437, %v418
      %v439 = vpop.permute.xlu0 %438
      %v441 = vmul.f32 %v439, %v435
      %v442 = vpack.c.bf16 %v426, %v426
      %v444 = vsel %vm411, %v442, 0
      %vm446 = vcmask 1043456
      %v448 = vsel %vm446, %v350, 0
      %450 = vmatprep.subr.bf16.mxu0 0
      %451 = vmatpush1.bf16.msra.mxu0 %v448
      %452 = vmatprep.subr.bf16.mxu0 0
      %453 = vmatpush1.bf16.msra.mxu0 0
      %454 = vmatprep.subr.bf16.mxu0 0
      %455 = vmatpush1.bf16.msra.mxu0 0
      %456 = vmatprep.subr.bf16.mxu0 0
      %457 = vmatpush1.bf16.msra.mxu0 0
      %458 = vmatprep.subr.bf16.mxu0 0
      %459 = vmatpush1.bf16.msra.mxu0 0
      %460 = vmatprep.subr.bf16.mxu0 0
      %461 = vmatpush1.bf16.msra.mxu0 0
      %462 = vmatprep.subr.bf16.mxu0 0
      %463 = vmatpush1.bf16.msra.mxu0 0
      %464 = vmatprep.subr.bf16.mxu0 0
      %465 = vmatpush1.bf16.msra.mxu0 0
      %466 = vmatprep.subr.bf16.mxu0 0
      %467 = vmatpush1.bf16.msra.mxu0 0
      %468 = vmatprep.subr.bf16.mxu0 0
      %469 = vmatpush1.bf16.msra.mxu0 0
      %470 = vmatprep.subr.bf16.mxu0 0
      %471 = vmatpush1.bf16.msra.mxu0 0
      %472 = vmatprep.subr.bf16.mxu0 0
      %473 = vmatpush1.bf16.msra.mxu0 0
      %474 = vmatprep.subr.bf16.mxu0 0
      %475 = vmatpush1.bf16.msra.mxu0 0
      %476 = vmatprep.subr.bf16.mxu0 0
      %477 = vmatpush1.bf16.msra.mxu0 0
      %478 = vmatprep.subr.bf16.mxu0 0
      %479 = vmatpush1.bf16.msra.mxu0 0
      %480 = vmatprep.subr.bf16.mxu0 0
      %481 = vmatpush1.bf16.msra.mxu0 0
      %482 = vmatprep.mubr.bf16.mxu0 0
      %483 = vmatmul.mubr.bf16.gmra.mrb[0].mxu0 %v444
      %v484 = vpop.f32.mrb[0].mxu0
      %v485 = vadd.f32 0.0, %v484
      %v486 = vpop.f32.mrb[0].mxu0
      %v487 = vpop.f32.mrb[0].mxu0
      %v488 = vpop.f32.mrb[0].mxu0
      %489 = vdwg.mxu0
      %v490 = vadd.f32 %v441, %v485
      %v492 = vunpack.c.l.b16 %v348
      %v493 = vpack.c.b16 %v492, %v492
      %494 = vrot.lane.b32.xlu0 %v493, 96
      %v495 = vpop.permute.xlu0 %494
      %v497 = vunpack.c.l.b16 %v349
      %v498 = vpack.c.b16 %v497, %v497
      %499 = vrot.lane.b32.xlu0 %v498, 96
      %v500 = vpop.permute.xlu0 %499
      %v502 = vsel %vm361, %v495, 0
      %v505 = vsel %vm361, %v500, 0
      %507 = vmatprep.subr.bf16.mxu0 0
      %508 = vmatpush1.bf16.xpose.msra.mxu0 %v505
      %509 = vmatprep.subr.bf16.mxu0 0
      %510 = vmatpush1.bf16.xpose.msra.mxu0 0
      %511 = vmatprep.subr.bf16.mxu0 0
      %512 = vmatpush1.bf16.xpose.msra.mxu0 0
      %513 = vmatprep.subr.bf16.mxu0 0
      %514 = vmatpush1.bf16.xpose.msra.mxu0 0
      %515 = vmatprep.subr.bf16.mxu0 0
      %516 = vmatpush1.bf16.xpose.msra.mxu0 0
      %517 = vmatprep.subr.bf16.mxu0 0
      %518 = vmatpush1.bf16.xpose.msra.mxu0 0
      %519 = vmatprep.subr.bf16.mxu0 0
      %520 = vmatpush1.bf16.xpose.msra.mxu0 0
      %521 = vmatprep.subr.bf16.mxu0 0
      %522 = vmatpush1.bf16.xpose.msra.mxu0 0
      %523 = vmatprep.subr.bf16.mxu0 0
      %524 = vmatpush1.bf16.xpose.msra.mxu0 0
      %525 = vmatprep.subr.bf16.mxu0 0
      %526 = vmatpush1.bf16.xpose.msra.mxu0 0
      %527 = vmatprep.subr.bf16.mxu0 0
      %528 = vmatpush1.bf16.xpose.msra.mxu0 0
      %529 = vmatprep.subr.bf16.mxu0 0
      %530 = vmatpush1.bf16.xpose.msra.mxu0 0
      %531 = vmatprep.subr.bf16.mxu0 0
      %532 = vmatpush1.bf16.xpose.msra.mxu0 0
      %533 = vmatprep.subr.bf16.mxu0 0
      %534 = vmatpush1.bf16.xpose.msra.mxu0 0
      %535 = vmatprep.subr.bf16.mxu0 0
      %536 = vmatpush1.bf16.xpose.msra.mxu0 0
      %537 = vmatprep.subr.bf16.mxu0 0
      %538 = vmatpush1.bf16.xpose.msra.mxu0 0
      %539 = vmatprep.mubr.bf16.mxu0 0
      %540 = vmatmul.mubr.bf16.gmra.mrb[0].mxu0 %v502
      %v541 = vpop.f32.mrb[0].mxu0
      %v542 = vadd.f32 0.0, %v541
      %v543 = vpop.f32.mrb[0].mxu0
      %v544 = vpop.f32.mrb[0].mxu0
      %v545 = vpop.f32.mrb[0].mxu0
      %546 = vdwg.mxu0
      %v547 = vmul.f32 %v542, 0.17677669
      %v548 = vsel %vm360, %v547, -1000000.0
      %v549 = vsel %vm411, %v548, -inf
      %550 = vmax.xlane.f32.xlu0 %v549
      %v551 = vpop.xlane.xlu0 %550
      %v552 = vmax.f32 %v410, %v551
      %v553 = vsub.f32 %v410, %v552
      %v554 = vmul.f32 %v553, 1.442695
      %v555 = vpow.pop %v554
      %557 = vset.pattern.permute.xlu0 1
      %558 = vperm.xlu0 %557, %v552
      %v559 = vpop.permute.xlu0 %558
      %v561 = vsub.f32 %v548, %v559
      %v562 = vmul.f32 %v561, 1.442695
      %v563 = vpow.pop %v562
      %v564 = vmul.f32 %v555, %v427
      %v565 = vmul.f32 %v548, 0.0
      %v566 = vadd.f32 %v565, %v563
      %v567 = vsel %vm411, %v566, 0.0
      %568 = vadd.xlane.f32.xlu0 %v567
      %v569 = vpop.xlane.xlu0 %568
      %v570 = vadd.f32 %v564, %v569
      %572 = vset.pattern.permute.xlu0 1
      %573 = vperm.xlu0 %572, %v555
      %v574 = vpop.permute.xlu0 %573
      %v576 = vmul.f32 %v574, %v435
      %v577 = vpack.c.bf16 %v563, %v563
      %v579 = vunpack.c.l.b16 %v350
      %v580 = vpack.c.b16 %v579, %v579
      %581 = vrot.lane.b32.xlu0 %v580, 96
      %v582 = vpop.permute.xlu0 %581
      %v584 = vsel %vm411, %v577, 0
      %v587 = vsel %vm446, %v582, 0
      %589 = vmatprep.subr.bf16.mxu0 0
      %590 = vmatpush1.bf16.msra.mxu0 %v587
      %591 = vmatprep.subr.bf16.mxu0 0
      %592 = vmatpush1.bf16.msra.mxu0 0
      %593 = vmatprep.subr.bf16.mxu0 0
      %594 = vmatpush1.bf16.msra.mxu0 0
      %595 = vmatprep.subr.bf16.mxu0 0
      %596 = vmatpush1.bf16.msra.mxu0 0
      %597 = vmatprep.subr.bf16.mxu0 0
      %598 = vmatpush1.bf16.msra.mxu0 0
      %599 = vmatprep.subr.bf16.mxu0 0
      %600 = vmatpush1.bf16.msra.mxu0 0
      %601 = vmatprep.subr.bf16.mxu0 0
      %602 = vmatpush1.bf16.msra.mxu0 0
      %603 = vmatprep.subr.bf16.mxu0 0
      %604 = vmatpush1.bf16.msra.mxu0 0
      %605 = vmatprep.subr.bf16.mxu0 0
      %606 = vmatpush1.bf16.msra.mxu0 0
      %607 = vmatprep.subr.bf16.mxu0 0
      %608 = vmatpush1.bf16.msra.mxu0 0
      %609 = vmatprep.subr.bf16.mxu0 0
      %610 = vmatpush1.bf16.msra.mxu0 0
      %611 = vmatprep.subr.bf16.mxu0 0
      %612 = vmatpush1.bf16.msra.mxu0 0
      %613 = vmatprep.subr.bf16.mxu0 0
      %614 = vmatpush1.bf16.msra.mxu0 0
      %615 = vmatprep.subr.bf16.mxu0 0
      %616 = vmatpush1.bf16.msra.mxu0 0
      %617 = vmatprep.subr.bf16.mxu0 0
      %618 = vmatpush1.bf16.msra.mxu0 0
      %619 = vmatprep.subr.bf16.mxu0 0
      %620 = vmatpush1.bf16.msra.mxu0 0
      %621 = vmatprep.mubr.bf16.mxu0 0
      %622 = vmatmul.mubr.bf16.gmra.mrb[0].mxu0 %v584
      %v623 = vpop.f32.mrb[0].mxu0
      %v624 = vadd.f32 0.0, %v623
      %v625 = vpop.f32.mrb[0].mxu0
      %v626 = vpop.f32.mrb[0].mxu0
      %v627 = vpop.f32.mrb[0].mxu0
      %628 = vdwg.mxu0
      %630 = vrot.lane.b32.xlu0 %v624, 32
      %v631 = vpop.permute.xlu0 %630
      %v633 = vadd.f32 %v576, %v631
      %634 = vrot.lane.b32.xlu0 %v493, 64
      %v635 = vpop.permute.xlu0 %634
      %636 = vrot.lane.b32.xlu0 %v498, 64
      %v637 = vpop.permute.xlu0 %636
      %v639 = vsel %vm361, %v635, 0
      %v642 = vsel %vm361, %v637, 0
      %644 = vmatprep.subr.bf16.mxu0 0
      %645 = vmatpush1.bf16.xpose.msra.mxu0 %v642
      %646 = vmatprep.subr.bf16.mxu0 0
      %647 = vmatpush1.bf16.xpose.msra.mxu0 0
      %648 = vmatprep.subr.bf16.mxu0 0
      %649 = vmatpush1.bf16.xpose.msra.mxu0 0
      %650 = vmatprep.subr.bf16.mxu0 0
      %651 = vmatpush1.bf16.xpose.msra.mxu0 0
      %652 = vmatprep.subr.bf16.mxu0 0
      %653 = vmatpush1.bf16.xpose.msra.mxu0 0
      %654 = vmatprep.subr.bf16.mxu0 0
      %655 = vmatpush1.bf16.xpose.msra.mxu0 0
      %656 = vmatprep.subr.bf16.mxu0 0
      %657 = vmatpush1.bf16.xpose.msra.mxu0 0
      %658 = vmatprep.subr.bf16.mxu0 0
      %659 = vmatpush1.bf16.xpose.msra.mxu0 0
      %660 = vmatprep.subr.bf16.mxu0 0
      %661 = vmatpush1.bf16.xpose.msra.mxu0 0
      %662 = vmatprep.subr.bf16.mxu0 0
      %663 = vmatpush1.bf16.xpose.msra.mxu0 0
      %664 = vmatprep.subr.bf16.mxu0 0
      %665 = vmatpush1.bf16.xpose.msra.mxu0 0
      %666 = vmatprep.subr.bf16.mxu0 0
      %667 = vmatpush1.bf16.xpose.msra.mxu0 0
      %668 = vmatprep.subr.bf16.mxu0 0
      %669 = vmatpush1.bf16.xpose.msra.mxu0 0
      %670 = vmatprep.subr.bf16.mxu0 0
      %671 = vmatpush1.bf16.xpose.msra.mxu0 0
      %672 = vmatprep.subr.bf16.mxu0 0
      %673 = vmatpush1.bf16.xpose.msra.mxu0 0
      %674 = vmatprep.subr.bf16.mxu0 0
      %675 = vmatpush1.bf16.xpose.msra.mxu0 0
      %676 = vmatprep.mubr.bf16.mxu0 0
      %677 = vmatmul.mubr.bf16.gmra.mrb[0].mxu0 %v639
      %v678 = vpop.f32.mrb[0].mxu0
      %v679 = vadd.f32 0.0, %v678
      %v680 = vpop.f32.mrb[0].mxu0
      %v681 = vpop.f32.mrb[0].mxu0
      %v682 = vpop.f32.mrb[0].mxu0
      %683 = vdwg.mxu0
      %v684 = vmul.f32 %v679, 0.17677669
      %v685 = vsel %vm360, %v684, -1000000.0
      %v686 = vsel %vm411, %v685, -inf
      %687 = vmax.xlane.f32.xlu0 %v686
      %v688 = vpop.xlane.xlu0 %687
      %v689 = vmax.f32 %v410, %v688
      %v690 = vsub.f32 %v410, %v689
      %v691 = vmul.f32 %v690, 1.442695
      %v692 = vpow.pop %v691
      %694 = vset.pattern.permute.xlu0 2
      %695 = vperm.xlu0 %694, %v689
      %v696 = vpop.permute.xlu0 %695
      %v698 = vsub.f32 %v685, %v696
      %v699 = vmul.f32 %v698, 1.442695
      %v700 = vpow.pop %v699
      %v701 = vmul.f32 %v692, %v427
      %v702 = vmul.f32 %v685, 0.0
      %v703 = vadd.f32 %v702, %v700
      %v704 = vsel %vm411, %v703, 0.0
      %705 = vadd.xlane.f32.xlu0 %v704
      %v706 = vpop.xlane.xlu0 %705
      %v707 = vadd.f32 %v701, %v706
      %709 = vset.pattern.permute.xlu0 2
      %710 = vperm.xlu0 %709, %v692
      %v711 = vpop.permute.xlu0 %710
      %v713 = vmul.f32 %v711, %v435
      %v714 = vpack.c.bf16 %v700, %v700
      %715 = vrot.lane.b32.xlu0 %v580, 64
      %v716 = vpop.permute.xlu0 %715
      %v718 = vsel %vm411, %v714, 0
      %v721 = vsel %vm446, %v716, 0
      %723 = vmatprep.subr.bf16.mxu0 0
      %724 = vmatpush1.bf16.msra.mxu0 %v721
      %725 = vmatprep.subr.bf16.mxu0 0
      %726 = vmatpush1.bf16.msra.mxu0 0
      %727 = vmatprep.subr.bf16.mxu0 0
      %728 = vmatpush1.bf16.msra.mxu0 0
      %729 = vmatprep.subr.bf16.mxu0 0
      %730 = vmatpush1.bf16.msra.mxu0 0
      %731 = vmatprep.subr.bf16.mxu0 0
      %732 = vmatpush1.bf16.msra.mxu0 0
      %733 = vmatprep.subr.bf16.mxu0 0
      %734 = vmatpush1.bf16.msra.mxu0 0
      %735 = vmatprep.subr.bf16.mxu0 0
      %736 = vmatpush1.bf16.msra.mxu0 0
      %737 = vmatprep.subr.bf16.mxu0 0
      %738 = vmatpush1.bf16.msra.mxu0 0
      %739 = vmatprep.subr.bf16.mxu0 0
      %740 = vmatpush1.bf16.msra.mxu0 0
      %741 = vmatprep.subr.bf16.mxu0 0
      %742 = vmatpush1.bf16.msra.mxu0 0
      %743 = vmatprep.subr.bf16.mxu0 0
      %744 = vmatpush1.bf16.msra.mxu0 0
      %745 = vmatprep.subr.bf16.mxu0 0
      %746 = vmatpush1.bf16.msra.mxu0 0
      %747 = vmatprep.subr.bf16.mxu0 0
      %748 = vmatpush1.bf16.msra.mxu0 0
      %749 = vmatprep.subr.bf16.mxu0 0
      %750 = vmatpush1.bf16.msra.mxu0 0
      %751 = vmatprep.subr.bf16.mxu0 0
      %752 = vmatpush1.bf16.msra.mxu0 0
      %753 = vmatprep.subr.bf16.mxu0 0
      %754 = vmatpush1.bf16.msra.mxu0 0
      %755 = vmatprep.mubr.bf16.mxu0 0
      %756 = vmatmul.mubr.bf16.gmra.mrb[0].mxu0 %v718
      %v757 = vpop.f32.mrb[0].mxu0
      %v758 = vadd.f32 0.0, %v757
      %v759 = vpop.f32.mrb[0].mxu0
      %v760 = vpop.f32.mrb[0].mxu0
      %v761 = vpop.f32.mrb[0].mxu0
      %762 = vdwg.mxu0
      %764 = vrot.lane.b32.xlu0 %v758, 64
      %v765 = vpop.permute.xlu0 %764
      %v767 = vadd.f32 %v713, %v765
      %768 = vrot.lane.b32.xlu0 %v493, 32
      %v769 = vpop.permute.xlu0 %768
      %770 = vrot.lane.b32.xlu0 %v498, 32
      %v771 = vpop.permute.xlu0 %770
      %v773 = vsel %vm361, %v769, 0
      %v776 = vsel %vm361, %v771, 0
      %778 = vmatprep.subr.bf16.mxu0 0
      %779 = vmatpush1.bf16.xpose.msra.mxu0 %v776
      %780 = vmatprep.subr.bf16.mxu0 0
      %781 = vmatpush1.bf16.xpose.msra.mxu0 0
      %782 = vmatprep.subr.bf16.mxu0 0
      %783 = vmatpush1.bf16.xpose.msra.mxu0 0
      %784 = vmatprep.subr.bf16.mxu0 0
      %785 = vmatpush1.bf16.xpose.msra.mxu0 0
      %786 = vmatprep.subr.bf16.mxu0 0
      %787 = vmatpush1.bf16.xpose.msra.mxu0 0
      %788 = vmatprep.subr.bf16.mxu0 0
      %789 = vmatpush1.bf16.xpose.msra.mxu0 0
      %790 = vmatprep.subr.bf16.mxu0 0
      %791 = vmatpush1.bf16.xpose.msra.mxu0 0
      %792 = vmatprep.subr.bf16.mxu0 0
      %793 = vmatpush1.bf16.xpose.msra.mxu0 0
      %794 = vmatprep.subr.bf16.mxu0 0
      %795 = vmatpush1.bf16.xpose.msra.mxu0 0
      %796 = vmatprep.subr.bf16.mxu0 0
      %797 = vmatpush1.bf16.xpose.msra.mxu0 0
      %798 = vmatprep.subr.bf16.mxu0 0
      %799 = vmatpush1.bf16.xpose.msra.mxu0 0
      %800 = vmatprep.subr.bf16.mxu0 0
      %801 = vmatpush1.bf16.xpose.msra.mxu0 0
      %802 = vmatprep.subr.bf16.mxu0 0
      %803 = vmatpush1.bf16.xpose.msra.mxu0 0
      %804 = vmatprep.subr.bf16.mxu0 0
      %805 = vmatpush1.bf16.xpose.msra.mxu0 0
      %806 = vmatprep.subr.bf16.mxu0 0
      %807 = vmatpush1.bf16.xpose.msra.mxu0 0
      %808 = vmatprep.subr.bf16.mxu0 0
      %809 = vmatpush1.bf16.xpose.msra.mxu0 0
      %810 = vmatprep.mubr.bf16.mxu0 0
      %811 = vmatmul.mubr.bf16.gmra.mrb[0].mxu0 %v773
      %v812 = vpop.f32.mrb[0].mxu0
      %v813 = vadd.f32 0.0, %v812
      %v814 = vpop.f32.mrb[0].mxu0
      %v815 = vpop.f32.mrb[0].mxu0
      %v816 = vpop.f32.mrb[0].mxu0
      %817 = vdwg.mxu0
      %v818 = vmul.f32 %v813, 0.17677669
      %v819 = vsel %vm360, %v818, -1000000.0
      %v820 = vsel %vm411, %v819, -inf
      %821 = vmax.xlane.f32.xlu0 %v820
      %v822 = vpop.xlane.xlu0 %821
      %v823 = vmax.f32 %v410, %v822
      %v824 = vsub.f32 %v410, %v823
      %v825 = vmul.f32 %v824, 1.442695
      %v826 = vpow.pop %v825
      %828 = vset.pattern.permute.xlu0 3
      %829 = vperm.xlu0 %828, %v823
      %v830 = vpop.permute.xlu0 %829
      %v832 = vsub.f32 %v819, %v830
      %v833 = vmul.f32 %v832, 1.442695
      %v834 = vpow.pop %v833
      %v835 = vmul.f32 %v826, %v427
      %v836 = vmul.f32 %v819, 0.0
      %v837 = vadd.f32 %v836, %v834
      %v838 = vsel %vm411, %v837, 0.0
      %839 = vadd.xlane.f32.xlu0 %v838
      %v840 = vpop.xlane.xlu0 %839
      %v841 = vadd.f32 %v835, %v840
      %843 = vset.pattern.permute.xlu0 3
      %844 = vperm.xlu0 %843, %v826
      %v845 = vpop.permute.xlu0 %844
      %v847 = vmul.f32 %v845, %v435
      %v848 = vpack.c.bf16 %v834, %v834
      %849 = vrot.lane.b32.xlu0 %v580, 32
      %v850 = vpop.permute.xlu0 %849
      %v852 = vsel %vm411, %v848, 0
      %v855 = vsel %vm446, %v850, 0
      %857 = vmatprep.subr.bf16.mxu0 0
      %858 = vmatpush1.bf16.msra.mxu0 %v855
      %859 = vmatprep.subr.bf16.mxu0 0
      %860 = vmatpush1.bf16.msra.mxu0 0
      %861 = vmatprep.subr.bf16.mxu0 0
      %862 = vmatpush1.bf16.msra.mxu0 0
      %863 = vmatprep.subr.bf16.mxu0 0
      %864 = vmatpush1.bf16.msra.mxu0 0
      %865 = vmatprep.subr.bf16.mxu0 0
      %866 = vmatpush1.bf16.msra.mxu0 0
      %867 = vmatprep.subr.bf16.mxu0 0
      %868 = vmatpush1.bf16.msra.mxu0 0
      %869 = vmatprep.subr.bf16.mxu0 0
      %870 = vmatpush1.bf16.msra.mxu0 0
      %871 = vmatprep.subr.bf16.mxu0 0
      %872 = vmatpush1.bf16.msra.mxu0 0
      %873 = vmatprep.subr.bf16.mxu0 0
      %874 = vmatpush1.bf16.msra.mxu0 0
      %875 = vmatprep.subr.bf16.mxu0 0
      %876 = vmatpush1.bf16.msra.mxu0 0
      %877 = vmatprep.subr.bf16.mxu0 0
      %878 = vmatpush1.bf16.msra.mxu0 0
      %879 = vmatprep.subr.bf16.mxu0 0
      %880 = vmatpush1.bf16.msra.mxu0 0
      %881 = vmatprep.subr.bf16.mxu0 0
      %882 = vmatpush1.bf16.msra.mxu0 0
      %883 = vmatprep.subr.bf16.mxu0 0
      %884 = vmatpush1.bf16.msra.mxu0 0
      %885 = vmatprep.subr.bf16.mxu0 0
      %886 = vmatpush1.bf16.msra.mxu0 0
      %887 = vmatprep.subr.bf16.mxu0 0
      %888 = vmatpush1.bf16.msra.mxu0 0
      %889 = vmatprep.mubr.bf16.mxu0 0
      %890 = vmatmul.mubr.bf16.gmra.mrb[0].mxu0 %v852
      %v891 = vpop.f32.mrb[0].mxu0
      %v892 = vadd.f32 0.0, %v891
      %v893 = vpop.f32.mrb[0].mxu0
      %v894 = vpop.f32.mrb[0].mxu0
      %v895 = vpop.f32.mrb[0].mxu0
      %896 = vdwg.mxu0
      %898 = vrot.lane.b32.xlu0 %v892, 96
      %v899 = vpop.permute.xlu0 %898
      %v901 = vadd.f32 %v847, %v899
      %vm902 = vcmask 7168
      %v903 = vsel %vm902, %v415, %v552
      %vm904 = vcmask 15360
      %v905 = vsel %vm904, %v903, %v689
      %vm906 = vcmask 23552
      %v907 = vsel %vm906, %v905, %v823
      %vm908 = vcmask 31744
      %909 = vst.msk [vmem:[#allocation2] sm:$0xff] %vm908, %v907
      %v910 = vsel %vm902, %v434, %v570
      %v911 = vsel %vm904, %v910, %v707
      %v912 = vsel %vm906, %v911, %v841
      %913 = vst.msk [vmem:[#allocation3] sm:$0xff] %vm908, %v912
      %v914 = vsel %vm361, %v490, %v633
      %vm915 = vcmask 523264
      %v916 = vsel %vm915, %v914, %v767
      %vm917 = vcmask 785408
      %v918 = vsel %vm917, %v916, %v901
      %919 = vst [vmem:[#allocation4] sm:$0xff] %v918
      // Predicated region
      $region41: #{transformer_decoder_forward.20} parent=35 // pred_check
        %p920 = pneg %p340
      $region42: #{transformer_decoder_forward.20} parent=35 // pred_check_branch
        %922 = sbr.rel (%p920) target = $region44
      $region43: #{transformer_decoder_forward.20} parent=35 // pred_region
        %v923 = vld [vmem:[#allocation3] sm:$0xff]
        %v924 = vrcp.pop %v923
        %v925 = vld [vmem:[#allocation4] sm:$0xff]
        %927 = vset.pattern.permute.xlu0 0
        %928 = vperm.xlu0 %927, %v924
        %v929 = vpop.permute.xlu0 %928
        %v931 = vmul.f32 %v925, %v929
        %932 = vset.pattern.permute.xlu0 1
        %933 = vperm.xlu0 %932, %v924
        %v934 = vpop.permute.xlu0 %933
        %v936 = vmul.f32 %v925, %v934
        %937 = vset.pattern.permute.xlu0 2
        %938 = vperm.xlu0 %937, %v924
        %v939 = vpop.permute.xlu0 %938
        %v941 = vmul.f32 %v925, %v939
        %942 = vset.pattern.permute.xlu0 3
        %943 = vperm.xlu0 %942, %v924
        %v944 = vpop.permute.xlu0 %943
        %v946 = vmul.f32 %v925, %v944
        %v947 = vsel %vm361, %v931, %v936
        %v948 = vsel %vm915, %v947, %v941
        %v949 = vsel %vm917, %v948, %v946
        %v950 = vpack.c.bf16 %v949, %v949
        %951 = vst [vmem:[%s338] sm:$0xf] %v950
      $region44: #{transformer_decoder_forward.20} parent=35 // pred_fallthru
        _
      %p952 = scmp.lt.s32.totalorder %s20, 1
      %s953 = scalar_select %p952, %s20, 1
      %p954 = scmp.lt.s32.totalorder %s21, 0
      %s955 = scalar_select %p954, %s21, 0
      %s956 = sadd.s32 %s955, %s953
      %s957 = smul.addr %s956, 4
      %s958 = scalar_lea.vmem %s4, %s957
      // Predicated region
      $region45: #{transformer_decoder_forward.20} parent=35 // pred_check
        %p959 = pneg %p166
      $region46: #{transformer_decoder_forward.20} parent=35 // pred_check_branch
        %961 = sbr.rel (%p959) target = $region48
      $region47: #{transformer_decoder_forward.20} parent=35 // pred_region
        _
      $region48: #{transformer_decoder_forward.20} parent=35 // pred_fallthru
        _
    $region36: #{transformer_decoder_forward.20} parent=5 // pred_fallthru
      _
    %p962 = scmp.le.s32.totalorder 2, %s10
    // Predicated region
    $region49: #{transformer_decoder_forward.20} parent=5 // pred_check
      %p963 = pneg %p962
    $region50: #{transformer_decoder_forward.20} parent=5 // pred_check_branch
      %965 = sbr.rel (%p963) target = $region52
    $region51: #{transformer_decoder_forward.20} parent=5 // pred_region
      %s966 = ssub.s32 %s10, 2
      // Predicated region
      $region53: #{transformer_decoder_forward.20} parent=51 // pred_check
        %p967 = pneg %p172
      $region54: #{transformer_decoder_forward.20} parent=51 // pred_check_branch
        %969 = sbr.rel (%p967) target = $region56
      $region55: #{transformer_decoder_forward.20} parent=51 // pred_region
        %p970 = scmp.lt.s32.totalorder %s23, 1
        %s971 = scalar_select %p970, %s23, 1
        %p972 = scmp.lt.s32.totalorder %s24, 0
        %s973 = scalar_select %p972, %s24, 0
        %s974 = sadd.s32 %s973, %s971
        %s975 = smul.addr %s974, 4
        %s976 = scalar_lea.vmem %s4, %s975
      $region56: #{transformer_decoder_forward.20} parent=51 // pred_fallthru
        _
    $region52: #{transformer_decoder_forward.20} parent=5 // pred_fallthru
      _
  $region6: #{transformer_decoder_forward.20} parent=0 // loop_footer
    %s14 = sadd.s32 1, %s10
  $region7: #{transformer_decoder_forward.20} parent=0 // loop_footer_branch
    %9 = sbr.rel target = $region3
  $region8: #{transformer_decoder_forward.20} parent=0 // loop_exit
    _

// kernel: transformer_decoder_forward.23
$region0: #{transformer_decoder_forward.23}
  #allocation0 [shape = 'u32[]', space=smem, size = 0x4, offset = 0x4, fixed_abs, tag = 'smem constant byte address 0x4 - core index']
  #allocation1 [shape = 'u32[144,128]{1,0:T(1,128)}', space=vmem, size = 0x12000, scoped, tag = 'internal scratch']
  #allocation2 [shape = 'f32[16,256]{1,0:T(8,128)}', space=vmem, size = 0x4000, scoped, tag = 'scratch operand']
  %s0 = inlined_call_operand.vmem [shape: bf16[16,128], index: 0, kind: input, shape index: {}]
  %s1 = inlined_call_operand.vmem [shape: bf16[128,256], index: 1, kind: input, shape index: {}]
  %s2 = inlined_call_operand.vmem [shape: bf16[16,256], index: 2, kind: output, shape index: {}]
  %s3 = sld [smem:[#allocation0]]
  $region26: #{transformer_decoder_forward.23} parent=0
    _
  %s5 = ssub.s32 1, %s3
  %s6 = scalar_select 0, %s5, %s3
  // Predicated region
  $region2: #{transformer_decoder_forward.23} parent=0 // pred_check
    _
  $region3: #{transformer_decoder_forward.23} parent=0 // pred_check_branch
    %8 = sbr.rel (0) target = $region5
  $region4: #{transformer_decoder_forward.23} parent=0 // pred_region
    _
  $region5: #{transformer_decoder_forward.23} parent=0 // pred_fallthru
    _
  // Predicated region
  $region6: #{transformer_decoder_forward.23} parent=0 // pred_check
    _
  $region7: #{transformer_decoder_forward.23} parent=0 // pred_check_branch
    %10 = sbr.rel (0) target = $region9
  $region8: #{transformer_decoder_forward.23} parent=0 // pred_region
    _
  $region9: #{transformer_decoder_forward.23} parent=0 // pred_fallthru
    _
  %p12 = scmp.eq.s32.totalorder 0, 0
  // Predicated region
  $region10: #{transformer_decoder_forward.23} parent=0 // pred_check
    %p13 = pneg %p12
  $region11: #{transformer_decoder_forward.23} parent=0 // pred_check_branch
    %15 = sbr.rel (%p13) target = $region13
  $region12: #{transformer_decoder_forward.23} parent=0 // pred_region
    %16 = vst [vmem:[#allocation2] sm:$0xff] 0.0
    %17 = vst [vmem:[#allocation2 + $0x8] sm:$0xff] 0.0
    %18 = vst [vmem:[#allocation2 + $0x10] sm:$0xff] 0.0
    %19 = vst [vmem:[#allocation2 + $0x18] sm:$0xff] 0.0
  $region13: #{transformer_decoder_forward.23} parent=0 // pred_fallthru
    _
  %v20 = vld [vmem:[#allocation2] sm:$0xff]
  %v21 = vld [vmem:[#allocation2 + $0x8] sm:$0xff]
  %v22 = vld [vmem:[#allocation2 + $0x10] sm:$0xff]
  %v23 = vld [vmem:[#allocation2 + $0x18] sm:$0xff]
  %v24 = vld [vmem:[%s0] sm:$0xf]
  %v25 = vld [vmem:[%s0 + $0x4] sm:$0xf]
  %v26 = vld [vmem:[%s1] sm:$0xff]
  %v27 = vld [vmem:[%s1 + $0x8] sm:$0xff]
  %v28 = vld [vmem:[%s1 + $0x10] sm:$0xff]
  %v29 = vld [vmem:[%s1 + $0x18] sm:$0xff]
  %v30 = vld [vmem:[%s1 + $0x20] sm:$0xff]
  %v31 = vld [vmem:[%s1 + $0x28] sm:$0xff]
  %v32 = vld [vmem:[%s1 + $0x30] sm:$0xff]
  %v33 = vld [vmem:[%s1 + $0x38] sm:$0xff]
  %v34 = vld [vmem:[%s1 + $0x40] sm:$0xff]
  %v35 = vld [vmem:[%s1 + $0x48] sm:$0xff]
  %v36 = vld [vmem:[%s1 + $0x50] sm:$0xff]
  %v37 = vld [vmem:[%s1 + $0x58] sm:$0xff]
  %v38 = vld [vmem:[%s1 + $0x60] sm:$0xff]
  %v39 = vld [vmem:[%s1 + $0x68] sm:$0xff]
  %v40 = vld [vmem:[%s1 + $0x70] sm:$0xff]
  %v41 = vld [vmem:[%s1 + $0x78] sm:$0xff]
  %v44 = vunpack.c.l.b16 %v24
  %v45 = vunpack.c.l.b16 %v25
  %v46 = vpack.c.b16 %v45, %v44
  %v64 = vunpack.c.l.b16 %v26
  %v65 = vunpack.c.h.b16 %v26
  %v66 = vunpack.c.l.b16 %v27
  %v67 = vunpack.c.h.b16 %v27
  %v68 = vunpack.c.l.b16 %v28
  %v69 = vunpack.c.h.b16 %v28
  %v70 = vunpack.c.l.b16 %v29
  %v71 = vunpack.c.h.b16 %v29
  %v72 = vunpack.c.l.b16 %v30
  %v73 = vunpack.c.h.b16 %v30
  %v74 = vunpack.c.l.b16 %v31
  %v75 = vunpack.c.h.b16 %v31
  %v76 = vunpack.c.l.b16 %v32
  %v77 = vunpack.c.h.b16 %v32
  %v78 = vunpack.c.l.b16 %v33
  %v79 = vunpack.c.h.b16 %v33
  %v80 = vunpack.c.l.b16 %v34
  %v81 = vunpack.c.h.b16 %v34
  %v82 = vunpack.c.l.b16 %v35
  %v83 = vunpack.c.h.b16 %v35
  %v84 = vunpack.c.l.b16 %v36
  %v85 = vunpack.c.h.b16 %v36
  %v86 = vunpack.c.l.b16 %v37
  %v87 = vunpack.c.h.b16 %v37
  %v88 = vunpack.c.l.b16 %v38
  %v89 = vunpack.c.h.b16 %v38
  %v90 = vunpack.c.l.b16 %v39
  %v91 = vunpack.c.h.b16 %v39
  %v92 = vunpack.c.l.b16 %v40
  %v93 = vunpack.c.h.b16 %v40
  %v94 = vunpack.c.l.b16 %v41
  %v95 = vunpack.c.h.b16 %v41
  %v96 = vpack.c.b16 %v66, %v64
  %v97 = vpack.c.b16 %v67, %v65
  %v98 = vpack.c.b16 %v70, %v68
  %v99 = vpack.c.b16 %v71, %v69
  %v100 = vpack.c.b16 %v74, %v72
  %v101 = vpack.c.b16 %v75, %v73
  %v102 = vpack.c.b16 %v78, %v76
  %v103 = vpack.c.b16 %v79, %v77
  %v104 = vpack.c.b16 %v82, %v80
  %v105 = vpack.c.b16 %v83, %v81
  %v106 = vpack.c.b16 %v86, %v84
  %v107 = vpack.c.b16 %v87, %v85
  %v108 = vpack.c.b16 %v90, %v88
  %v109 = vpack.c.b16 %v91, %v89
  %v110 = vpack.c.b16 %v94, %v92
  %v111 = vpack.c.b16 %v95, %v93
  %128 = vmatprep.subr.bf16.mxu0 %v97
  %129 = vmatpush1.bf16.msra.mxu0 %v96
  %130 = vmatprep.subr.bf16.mxu0 %v99
  %131 = vmatpush1.bf16.msra.mxu0 %v98
  %132 = vmatprep.subr.bf16.mxu0 %v101
  %133 = vmatpush1.bf16.msra.mxu0 %v100
  %134 = vmatprep.subr.bf16.mxu0 %v103
  %135 = vmatpush1.bf16.msra.mxu0 %v102
  %136 = vmatprep.subr.bf16.mxu0 %v105
  %137 = vmatpush1.bf16.msra.mxu0 %v104
  %138 = vmatprep.subr.bf16.mxu0 %v107
  %139 = vmatpush1.bf16.msra.mxu0 %v106
  %140 = vmatprep.subr.bf16.mxu0 %v109
  %141 = vmatpush1.bf16.msra.mxu0 %v108
  %142 = vmatprep.subr.bf16.mxu0 %v111
  %143 = vmatpush1.bf16.msra.mxu0 %v110
  %144 = vmatprep.subr.bf16.mxu0 0
  %145 = vmatpush1.bf16.msra.mxu0 0
  %146 = vmatprep.subr.bf16.mxu0 0
  %147 = vmatpush1.bf16.msra.mxu0 0
  %148 = vmatprep.subr.bf16.mxu0 0
  %149 = vmatpush1.bf16.msra.mxu0 0
  %150 = vmatprep.subr.bf16.mxu0 0
  %151 = vmatpush1.bf16.msra.mxu0 0
  %152 = vmatprep.subr.bf16.mxu0 0
  %153 = vmatpush1.bf16.msra.mxu0 0
  %154 = vmatprep.subr.bf16.mxu0 0
  %155 = vmatpush1.bf16.msra.mxu0 0
  %156 = vmatprep.subr.bf16.mxu0 0
  %157 = vmatpush1.bf16.msra.mxu0 0
  %158 = vmatprep.subr.bf16.mxu0 0
  %159 = vmatpush1.bf16.msra.mxu0 0
  %160 = vmatprep.mubr.bf16.mxu0 0
  %161 = vmatmul.mubr.bf16.gmra.mrb[0].mxu0 %v46
  %v162 = vpop.f32.mrb[0].mxu0
  %v163 = vadd.f32 0.0, %v162
  %v164 = vpop.f32.mrb[0].mxu0
  %v165 = vadd.f32 0.0, %v164
  %v166 = vpop.f32.mrb[0].mxu0
  %v167 = vadd.f32 0.0, %v166
  %v168 = vpop.f32.mrb[0].mxu0
  %v169 = vadd.f32 0.0, %v168
  %170 = vdwg.mxu0
  %v171 = vadd.f32 %v20, %v163
  %v172 = vadd.f32 %v21, %v165
  %v173 = vadd.f32 %v22, %v167
  %v174 = vadd.f32 %v23, %v169
  %175 = vst [vmem:[#allocation2] sm:$0xff] %v171
  %176 = vst [vmem:[#allocation2 + $0x8] sm:$0xff] %v172
  %177 = vst [vmem:[#allocation2 + $0x10] sm:$0xff] %v173
  %178 = vst [vmem:[#allocation2 + $0x18] sm:$0xff] %v174
  // Predicated region
  $region14: #{transformer_decoder_forward.23} parent=0 // pred_check
    %p179 = pneg %p12
  $region15: #{transformer_decoder_forward.23} parent=0 // pred_check_branch
    %181 = sbr.rel (%p179) target = $region17
  $region16: #{transformer_decoder_forward.23} parent=0 // pred_region
    %v182 = vld [vmem:[#allocation2] sm:$0xff]
    %v183 = vld [vmem:[#allocation2 + $0x8] sm:$0xff]
    %v184 = vld [vmem:[#allocation2 + $0x10] sm:$0xff]
    %v185 = vld [vmem:[#allocation2 + $0x18] sm:$0xff]
    %v186 = vpack.c.bf16 %v184, %v182
    %v187 = vpack.c.bf16 %v185, %v183
    %v190 = vunpack.c.l.b16 %v186
    %v191 = vunpack.c.l.b16 %v187
    %v192 = vunpack.c.h.b16 %v186
    %v193 = vunpack.c.h.b16 %v187
    %v194 = vpack.c.b16 %v191, %v190
    %v195 = vpack.c.b16 %v193, %v192
    %198 = vst [vmem:[%s2] sm:$0xff] %v194
    %199 = vst [vmem:[%s2 + $0x8] sm:$0xff] %v195
  $region17: #{transformer_decoder_forward.23} parent=0 // pred_fallthru
    _
  // Predicated region
  $region18: #{transformer_decoder_forward.23} parent=0 // pred_check
    _
  $region19: #{transformer_decoder_forward.23} parent=0 // pred_check_branch
    %201 = sbr.rel (0) target = $region21
  $region20: #{transformer_decoder_forward.23} parent=0 // pred_region
    _
  $region21: #{transformer_decoder_forward.23} parent=0 // pred_fallthru
    _
  // Predicated region
  $region22: #{transformer_decoder_forward.23} parent=0 // pred_check
    _
  $region23: #{transformer_decoder_forward.23} parent=0 // pred_check_branch
    %203 = sbr.rel (0) target = $region25
  $region24: #{transformer_decoder_forward.23} parent=0 // pred_region
    _
  $region25: #{transformer_decoder_forward.23} parent=0 // pred_fallthru
    _

// kernel: transformer_decoder_forward.26
$region0: #{transformer_decoder_forward.26}
  #allocation0 [shape = 'u32[]', space=smem, size = 0x4, offset = 0x4, fixed_abs, tag = 'smem constant byte address 0x4 - core index']
  #allocation1 [shape = 'u32[144,128]{1,0:T(1,128)}', space=vmem, size = 0x12000, scoped, tag = 'internal scratch']
  #allocation2 [shape = 'f32[16,256]{1,0:T(8,128)}', space=vmem, size = 0x4000, scoped, tag = 'scratch operand']
  %s0 = inlined_call_operand.vmem [shape: bf16[16,128], index: 0, kind: input, shape index: {}]
  %s1 = inlined_call_operand.vmem [shape: bf16[128,256], index: 1, kind: input, shape index: {}]
  %s2 = inlined_call_operand.vmem [shape: f32[1,256], index: 2, kind: input, shape index: {}]
  %s3 = inlined_call_operand.vmem [shape: bf16[16,256], index: 3, kind: output, shape index: {}]
  %s4 = sld [smem:[#allocation0]]
  $region30: #{transformer_decoder_forward.26} parent=0
    _
  %s6 = ssub.s32 1, %s4
  %s7 = scalar_select 0, %s6, %s4
  // Predicated region
  $region2: #{transformer_decoder_forward.26} parent=0 // pred_check
    _
  $region3: #{transformer_decoder_forward.26} parent=0 // pred_check_branch
    %9 = sbr.rel (0) target = $region5
  $region4: #{transformer_decoder_forward.26} parent=0 // pred_region
    _
  $region5: #{transformer_decoder_forward.26} parent=0 // pred_fallthru
    _
  // Predicated region
  $region6: #{transformer_decoder_forward.26} parent=0 // pred_check
    _
  $region7: #{transformer_decoder_forward.26} parent=0 // pred_check_branch
    %11 = sbr.rel (0) target = $region9
  $region8: #{transformer_decoder_forward.26} parent=0 // pred_region
    _
  $region9: #{transformer_decoder_forward.26} parent=0 // pred_fallthru
    _
  // Predicated region
  $region10: #{transformer_decoder_forward.26} parent=0 // pred_check
    _
  $region11: #{transformer_decoder_forward.26} parent=0 // pred_check_branch
    %13 = sbr.rel (0) target = $region13
  $region12: #{transformer_decoder_forward.26} parent=0 // pred_region
    _
  $region13: #{transformer_decoder_forward.26} parent=0 // pred_fallthru
    _
  %p15 = scmp.eq.s32.totalorder 0, 0
  // Predicated region
  $region14: #{transformer_decoder_forward.26} parent=0 // pred_check
    %p16 = pneg %p15
  $region15: #{transformer_decoder_forward.26} parent=0 // pred_check_branch
    %18 = sbr.rel (%p16) target = $region17
  $region16: #{transformer_decoder_forward.26} parent=0 // pred_region
    %19 = vst [vmem:[#allocation2] sm:$0xff] 0.0
    %20 = vst [vmem:[#allocation2 + $0x8] sm:$0xff] 0.0
    %21 = vst [vmem:[#allocation2 + $0x10] sm:$0xff] 0.0
    %22 = vst [vmem:[#allocation2 + $0x18] sm:$0xff] 0.0
  $region17: #{transformer_decoder_forward.26} parent=0 // pred_fallthru
    _
  %v23 = vld [vmem:[#allocation2] sm:$0xff]
  %v24 = vld [vmem:[#allocation2 + $0x8] sm:$0xff]
  %v25 = vld [vmem:[#allocation2 + $0x10] sm:$0xff]
  %v26 = vld [vmem:[#allocation2 + $0x18] sm:$0xff]
  %v27 = vld [vmem:[%s0] sm:$0xf]
  %v28 = vld [vmem:[%s0 + $0x4] sm:$0xf]
  %v29 = vld [vmem:[%s1] sm:$0xff]
  %v30 = vld [vmem:[%s1 + $0x8] sm:$0xff]
  %v31 = vld [vmem:[%s1 + $0x10] sm:$0xff]
  %v32 = vld [vmem:[%s1 + $0x18] sm:$0xff]
  %v33 = vld [vmem:[%s1 + $0x20] sm:$0xff]
  %v34 = vld [vmem:[%s1 + $0x28] sm:$0xff]
  %v35 = vld [vmem:[%s1 + $0x30] sm:$0xff]
  %v36 = vld [vmem:[%s1 + $0x38] sm:$0xff]
  %v37 = vld [vmem:[%s1 + $0x40] sm:$0xff]
  %v38 = vld [vmem:[%s1 + $0x48] sm:$0xff]
  %v39 = vld [vmem:[%s1 + $0x50] sm:$0xff]
  %v40 = vld [vmem:[%s1 + $0x58] sm:$0xff]
  %v41 = vld [vmem:[%s1 + $0x60] sm:$0xff]
  %v42 = vld [vmem:[%s1 + $0x68] sm:$0xff]
  %v43 = vld [vmem:[%s1 + $0x70] sm:$0xff]
  %v44 = vld [vmem:[%s1 + $0x78] sm:$0xff]
  %v47 = vunpack.c.l.b16 %v27
  %v48 = vunpack.c.l.b16 %v28
  %v49 = vpack.c.b16 %v48, %v47
  %v67 = vunpack.c.l.b16 %v29
  %v68 = vunpack.c.h.b16 %v29
  %v69 = vunpack.c.l.b16 %v30
  %v70 = vunpack.c.h.b16 %v30
  %v71 = vunpack.c.l.b16 %v31
  %v72 = vunpack.c.h.b16 %v31
  %v73 = vunpack.c.l.b16 %v32
  %v74 = vunpack.c.h.b16 %v32
  %v75 = vunpack.c.l.b16 %v33
  %v76 = vunpack.c.h.b16 %v33
  %v77 = vunpack.c.l.b16 %v34
  %v78 = vunpack.c.h.b16 %v34
  %v79 = vunpack.c.l.b16 %v35
  %v80 = vunpack.c.h.b16 %v35
  %v81 = vunpack.c.l.b16 %v36
  %v82 = vunpack.c.h.b16 %v36
  %v83 = vunpack.c.l.b16 %v37
  %v84 = vunpack.c.h.b16 %v37
  %v85 = vunpack.c.l.b16 %v38
  %v86 = vunpack.c.h.b16 %v38
  %v87 = vunpack.c.l.b16 %v39
  %v88 = vunpack.c.h.b16 %v39
  %v89 = vunpack.c.l.b16 %v40
  %v90 = vunpack.c.h.b16 %v40
  %v91 = vunpack.c.l.b16 %v41
  %v92 = vunpack.c.h.b16 %v41
  %v93 = vunpack.c.l.b16 %v42
  %v94 = vunpack.c.h.b16 %v42
  %v95 = vunpack.c.l.b16 %v43
  %v96 = vunpack.c.h.b16 %v43
  %v97 = vunpack.c.l.b16 %v44
  %v98 = vunpack.c.h.b16 %v44
  %v99 = vpack.c.b16 %v69, %v67
  %v100 = vpack.c.b16 %v70, %v68
  %v101 = vpack.c.b16 %v73, %v71
  %v102 = vpack.c.b16 %v74, %v72
  %v103 = vpack.c.b16 %v77, %v75
  %v104 = vpack.c.b16 %v78, %v76
  %v105 = vpack.c.b16 %v81, %v79
  %v106 = vpack.c.b16 %v82, %v80
  %v107 = vpack.c.b16 %v85, %v83
  %v108 = vpack.c.b16 %v86, %v84
  %v109 = vpack.c.b16 %v89, %v87
  %v110 = vpack.c.b16 %v90, %v88
  %v111 = vpack.c.b16 %v93, %v91
  %v112 = vpack.c.b16 %v94, %v92
  %v113 = vpack.c.b16 %v97, %v95
  %v114 = vpack.c.b16 %v98, %v96
  %131 = vmatprep.subr.bf16.mxu0 %v100
  %132 = vmatpush1.bf16.msra.mxu0 %v99
  %133 = vmatprep.subr.bf16.mxu0 %v102
  %134 = vmatpush1.bf16.msra.mxu0 %v101
  %135 = vmatprep.subr.bf16.mxu0 %v104
  %136 = vmatpush1.bf16.msra.mxu0 %v103
  %137 = vmatprep.subr.bf16.mxu0 %v106
  %138 = vmatpush1.bf16.msra.mxu0 %v105
  %139 = vmatprep.subr.bf16.mxu0 %v108
  %140 = vmatpush1.bf16.msra.mxu0 %v107
  %141 = vmatprep.subr.bf16.mxu0 %v110
  %142 = vmatpush1.bf16.msra.mxu0 %v109
  %143 = vmatprep.subr.bf16.mxu0 %v112
  %144 = vmatpush1.bf16.msra.mxu0 %v111
  %145 = vmatprep.subr.bf16.mxu0 %v114
  %146 = vmatpush1.bf16.msra.mxu0 %v113
  %147 = vmatprep.subr.bf16.mxu0 0
  %148 = vmatpush1.bf16.msra.mxu0 0
  %149 = vmatprep.subr.bf16.mxu0 0
  %150 = vmatpush1.bf16.msra.mxu0 0
  %151 = vmatprep.subr.bf16.mxu0 0
  %152 = vmatpush1.bf16.msra.mxu0 0
  %153 = vmatprep.subr.bf16.mxu0 0
  %154 = vmatpush1.bf16.msra.mxu0 0
  %155 = vmatprep.subr.bf16.mxu0 0
  %156 = vmatpush1.bf16.msra.mxu0 0
  %157 = vmatprep.subr.bf16.mxu0 0
  %158 = vmatpush1.bf16.msra.mxu0 0
  %159 = vmatprep.subr.bf16.mxu0 0
  %160 = vmatpush1.bf16.msra.mxu0 0
  %161 = vmatprep.subr.bf16.mxu0 0
  %162 = vmatpush1.bf16.msra.mxu0 0
  %163 = vmatprep.mubr.bf16.mxu0 0
  %164 = vmatmul.mubr.bf16.gmra.mrb[0].mxu0 %v49
  %v165 = vpop.f32.mrb[0].mxu0
  %v166 = vadd.f32 0.0, %v165
  %v167 = vpop.f32.mrb[0].mxu0
  %v168 = vadd.f32 0.0, %v167
  %v169 = vpop.f32.mrb[0].mxu0
  %v170 = vadd.f32 0.0, %v169
  %v171 = vpop.f32.mrb[0].mxu0
  %v172 = vadd.f32 0.0, %v171
  %173 = vdwg.mxu0
  %v174 = vadd.f32 %v23, %v166
  %v175 = vadd.f32 %v24, %v168
  %v176 = vadd.f32 %v25, %v170
  %v177 = vadd.f32 %v26, %v172
  %178 = vst [vmem:[#allocation2] sm:$0xff] %v174
  %179 = vst [vmem:[#allocation2 + $0x8] sm:$0xff] %v175
  %180 = vst [vmem:[#allocation2 + $0x10] sm:$0xff] %v176
  %181 = vst [vmem:[#allocation2 + $0x18] sm:$0xff] %v177
  // Predicated region
  $region18: #{transformer_decoder_forward.26} parent=0 // pred_check
    %p182 = pneg %p15
  $region19: #{transformer_decoder_forward.26} parent=0 // pred_check_branch
    %184 = sbr.rel (%p182) target = $region21
  $region20: #{transformer_decoder_forward.26} parent=0 // pred_region
    %v185 = vld [vmem:[#allocation2] sm:$0xff]
    %v186 = vld [vmem:[#allocation2 + $0x8] sm:$0xff]
    %v187 = vld [vmem:[#allocation2 + $0x10] sm:$0xff]
    %v188 = vld [vmem:[#allocation2 + $0x18] sm:$0xff]
    %v189 = vld [vmem:[%s2] sm:$0x3]
    %v191 = vlaneseq
    %v192 = vshrl.u32 %v191, 7
    %v193 = vsub.s32 0, %v192
    %v194 = vrot.slane %v189, %v193
    %v195 = vlaneseq
    %v196 = vshrl.u32 %v195, 7
    %v197 = vsub.s32 1, %v196
    %v198 = vrot.slane %v189, %v197
    %v201 = vadd.f32 %v185, %v194
    %v202 = vadd.f32 %v186, %v198
    %v203 = vadd.f32 %v187, %v194
    %v204 = vadd.f32 %v188, %v198
    %v205 = vmax.f32 %v201, 0.0
    %v206 = vmax.f32 %v202, 0.0
    %v207 = vmax.f32 %v203, 0.0
    %v208 = vmax.f32 %v204, 0.0
    %v209 = vpack.c.bf16 %v207, %v205
    %v210 = vpack.c.bf16 %v208, %v206
    %v213 = vunpack.c.l.b16 %v209
    %v214 = vunpack.c.l.b16 %v210
    %v215 = vunpack.c.h.b16 %v209
    %v216 = vunpack.c.h.b16 %v210
    %v217 = vpack.c.b16 %v214, %v213
    %v218 = vpack.c.b16 %v216, %v215
    %221 = vst [vmem:[%s3] sm:$0xff] %v217
    %222 = vst [vmem:[%s3 + $0x8] sm:$0xff] %v218
  $region21: #{transformer_decoder_forward.26} parent=0 // pred_fallthru
    _
  // Predicated region
  $region22: #{transformer_decoder_forward.26} parent=0 // pred_check
    _
  $region23: #{transformer_decoder_forward.26} parent=0 // pred_check_branch
    %224 = sbr.rel (0) target = $region25
  $region24: #{transformer_decoder_forward.26} parent=0 // pred_region
    _
  $region25: #{transformer_decoder_forward.26} parent=0 // pred_fallthru
    _
  // Predicated region
  $region26: #{transformer_decoder_forward.26} parent=0 // pred_check
    _
  $region27: #{transformer_decoder_forward.26} parent=0 // pred_check_branch
    %226 = sbr.rel (0) target = $region29
  $region28: #{transformer_decoder_forward.26} parent=0 // pred_region
    _
  $region29: #{transformer_decoder_forward.26} parent=0 // pred_fallthru
    _

// kernel: transformer_decoder_forward.27
$region0: #{transformer_decoder_forward.27}
  #allocation0 [shape = 'u32[]', space=smem, size = 0x4, offset = 0x4, fixed_abs, tag = 'smem constant byte address 0x4 - core index']
  #allocation1 [shape = 'u32[144,128]{1,0:T(1,128)}', space=vmem, size = 0x12000, scoped, tag = 'internal scratch']
  #allocation2 [shape = 'f32[16,128]{1,0:T(8,128)}', space=vmem, size = 0x2000, scoped, tag = 'scratch operand']
  %s0 = inlined_call_operand.vmem [shape: bf16[16,256], index: 0, kind: input, shape index: {}]
  %s1 = inlined_call_operand.vmem [shape: bf16[256,128], index: 1, kind: input, shape index: {}]
  %s2 = inlined_call_operand.vmem [shape: f32[1,128], index: 2, kind: input, shape index: {}]
  %s3 = inlined_call_operand.vmem [shape: bf16[16,128], index: 3, kind: input, shape index: {}]
  %s4 = inlined_call_operand.vmem [shape: f32[1,128], index: 4, kind: input, shape index: {}]
  %s5 = inlined_call_operand.vmem [shape: f32[1,128], index: 5, kind: input, shape index: {}]
  %s6 = inlined_call_operand.vmem [shape: bf16[16,128], index: 6, kind: output, shape index: {}]
  %s7 = sld [smem:[#allocation0]]
  $region42: #{transformer_decoder_forward.27} parent=0
    _
  %s9 = ssub.s32 1, %s7
  %s10 = scalar_select 0, %s9, %s7
  // Predicated region
  $region2: #{transformer_decoder_forward.27} parent=0 // pred_check
    _
  $region3: #{transformer_decoder_forward.27} parent=0 // pred_check_branch
    %12 = sbr.rel (0) target = $region5
  $region4: #{transformer_decoder_forward.27} parent=0 // pred_region
    _
  $region5: #{transformer_decoder_forward.27} parent=0 // pred_fallthru
    _
  // Predicated region
  $region6: #{transformer_decoder_forward.27} parent=0 // pred_check
    _
  $region7: #{transformer_decoder_forward.27} parent=0 // pred_check_branch
    %14 = sbr.rel (0) target = $region9
  $region8: #{transformer_decoder_forward.27} parent=0 // pred_region
    _
  $region9: #{transformer_decoder_forward.27} parent=0 // pred_fallthru
    _
  // Predicated region
  $region10: #{transformer_decoder_forward.27} parent=0 // pred_check
    _
  $region11: #{transformer_decoder_forward.27} parent=0 // pred_check_branch
    %16 = sbr.rel (0) target = $region13
  $region12: #{transformer_decoder_forward.27} parent=0 // pred_region
    _
  $region13: #{transformer_decoder_forward.27} parent=0 // pred_fallthru
    _
  // Predicated region
  $region14: #{transformer_decoder_forward.27} parent=0 // pred_check
    _
  $region15: #{transformer_decoder_forward.27} parent=0 // pred_check_branch
    %18 = sbr.rel (0) target = $region17
  $region16: #{transformer_decoder_forward.27} parent=0 // pred_region
    _
  $region17: #{transformer_decoder_forward.27} parent=0 // pred_fallthru
    _
  // Predicated region
  $region18: #{transformer_decoder_forward.27} parent=0 // pred_check
    _
  $region19: #{transformer_decoder_forward.27} parent=0 // pred_check_branch
    %20 = sbr.rel (0) target = $region21
  $region20: #{transformer_decoder_forward.27} parent=0 // pred_region
    _
  $region21: #{transformer_decoder_forward.27} parent=0 // pred_fallthru
    _
  // Predicated region
  $region22: #{transformer_decoder_forward.27} parent=0 // pred_check
    _
  $region23: #{transformer_decoder_forward.27} parent=0 // pred_check_branch
    %22 = sbr.rel (0) target = $region25
  $region24: #{transformer_decoder_forward.27} parent=0 // pred_region
    _
  $region25: #{transformer_decoder_forward.27} parent=0 // pred_fallthru
    _
  %p24 = scmp.eq.s32.totalorder 0, 0
  // Predicated region
  $region26: #{transformer_decoder_forward.27} parent=0 // pred_check
    %p25 = pneg %p24
  $region27: #{transformer_decoder_forward.27} parent=0 // pred_check_branch
    %27 = sbr.rel (%p25) target = $region29
  $region28: #{transformer_decoder_forward.27} parent=0 // pred_region
    %28 = vst [vmem:[#allocation2] sm:$0xff] 0.0
    %29 = vst [vmem:[#allocation2 + $0x8] sm:$0xff] 0.0
  $region29: #{transformer_decoder_forward.27} parent=0 // pred_fallthru
    _
  %v30 = vld [vmem:[#allocation2] sm:$0xff]
  %v31 = vld [vmem:[#allocation2 + $0x8] sm:$0xff]
  %v32 = vld [vmem:[%s0] sm:$0xff]
  %v33 = vld [vmem:[%s0 + $0x8] sm:$0xff]
  %v34 = vld [vmem:[%s1] sm:$0xf]
  %v35 = vld [vmem:[%s1 + $0x4] sm:$0xf]
  %v36 = vld [vmem:[%s1 + $0x8] sm:$0xf]
  %v37 = vld [vmem:[%s1 + $0xc] sm:$0xf]
  %v38 = vld [vmem:[%s1 + $0x10] sm:$0xf]
  %v39 = vld [vmem:[%s1 + $0x14] sm:$0xf]
  %v40 = vld [vmem:[%s1 + $0x18] sm:$0xf]
  %v41 = vld [vmem:[%s1 + $0x1c] sm:$0xf]
  %v42 = vld [vmem:[%s1 + $0x20] sm:$0xf]
  %v43 = vld [vmem:[%s1 + $0x24] sm:$0xf]
  %v44 = vld [vmem:[%s1 + $0x28] sm:$0xf]
  %v45 = vld [vmem:[%s1 + $0x2c] sm:$0xf]
  %v46 = vld [vmem:[%s1 + $0x30] sm:$0xf]
  %v47 = vld [vmem:[%s1 + $0x34] sm:$0xf]
  %v48 = vld [vmem:[%s1 + $0x38] sm:$0xf]
  %v49 = vld [vmem:[%s1 + $0x3c] sm:$0xf]
  %v50 = vld [vmem:[%s1 + $0x40] sm:$0xf]
  %v51 = vld [vmem:[%s1 + $0x44] sm:$0xf]
  %v52 = vld [vmem:[%s1 + $0x48] sm:$0xf]
  %v53 = vld [vmem:[%s1 + $0x4c] sm:$0xf]
  %v54 = vld [vmem:[%s1 + $0x50] sm:$0xf]
  %v55 = vld [vmem:[%s1 + $0x54] sm:$0xf]
  %v56 = vld [vmem:[%s1 + $0x58] sm:$0xf]
  %v57 = vld [vmem:[%s1 + $0x5c] sm:$0xf]
  %v58 = vld [vmem:[%s1 + $0x60] sm:$0xf]
  %v59 = vld [vmem:[%s1 + $0x64] sm:$0xf]
  %v60 = vld [vmem:[%s1 + $0x68] sm:$0xf]
  %v61 = vld [vmem:[%s1 + $0x6c] sm:$0xf]
  %v62 = vld [vmem:[%s1 + $0x70] sm:$0xf]
  %v63 = vld [vmem:[%s1 + $0x74] sm:$0xf]
  %v64 = vld [vmem:[%s1 + $0x78] sm:$0xf]
  %v65 = vld [vmem:[%s1 + $0x7c] sm:$0xf]
  %v68 = vunpack.c.l.b16 %v32
  %v69 = vunpack.c.h.b16 %v32
  %v70 = vunpack.c.l.b16 %v33
  %v71 = vunpack.c.h.b16 %v33
  %v72 = vpack.c.b16 %v70, %v68
  %v73 = vpack.c.b16 %v71, %v69
  %v108 = vunpack.c.l.b16 %v34
  %v109 = vunpack.c.l.b16 %v35
  %v110 = vunpack.c.l.b16 %v36
  %v111 = vunpack.c.l.b16 %v37
  %v112 = vunpack.c.l.b16 %v38
  %v113 = vunpack.c.l.b16 %v39
  %v114 = vunpack.c.l.b16 %v40
  %v115 = vunpack.c.l.b16 %v41
  %v116 = vunpack.c.l.b16 %v42
  %v117 = vunpack.c.l.b16 %v43
  %v118 = vunpack.c.l.b16 %v44
  %v119 = vunpack.c.l.b16 %v45
  %v120 = vunpack.c.l.b16 %v46
  %v121 = vunpack.c.l.b16 %v47
  %v122 = vunpack.c.l.b16 %v48
  %v123 = vunpack.c.l.b16 %v49
  %v124 = vunpack.c.l.b16 %v50
  %v125 = vunpack.c.l.b16 %v51
  %v126 = vunpack.c.l.b16 %v52
  %v127 = vunpack.c.l.b16 %v53
  %v128 = vunpack.c.l.b16 %v54
  %v129 = vunpack.c.l.b16 %v55
  %v130 = vunpack.c.l.b16 %v56
  %v131 = vunpack.c.l.b16 %v57
  %v132 = vunpack.c.l.b16 %v58
  %v133 = vunpack.c.l.b16 %v59
  %v134 = vunpack.c.l.b16 %v60
  %v135 = vunpack.c.l.b16 %v61
  %v136 = vunpack.c.l.b16 %v62
  %v137 = vunpack.c.l.b16 %v63
  %v138 = vunpack.c.l.b16 %v64
  %v139 = vunpack.c.l.b16 %v65
  %v140 = vpack.c.b16 %v109, %v108
  %v141 = vpack.c.b16 %v111, %v110
  %v142 = vpack.c.b16 %v113, %v112
  %v143 = vpack.c.b16 %v115, %v114
  %v144 = vpack.c.b16 %v117, %v116
  %v145 = vpack.c.b16 %v119, %v118
  %v146 = vpack.c.b16 %v121, %v120
  %v147 = vpack.c.b16 %v123, %v122
  %v148 = vpack.c.b16 %v125, %v124
  %v149 = vpack.c.b16 %v127, %v126
  %v150 = vpack.c.b16 %v129, %v128
  %v151 = vpack.c.b16 %v131, %v130
  %v152 = vpack.c.b16 %v133, %v132
  %v153 = vpack.c.b16 %v135, %v134
  %v154 = vpack.c.b16 %v137, %v136
  %v155 = vpack.c.b16 %v139, %v138
  %172 = vmatprep.subr.bf16.mxu0 0
  %173 = vmatpush1.bf16.msra.mxu0 %v140
  %174 = vmatprep.subr.bf16.mxu0 0
  %175 = vmatpush1.bf16.msra.mxu0 %v141
  %176 = vmatprep.subr.bf16.mxu0 0
  %177 = vmatpush1.bf16.msra.mxu0 %v142
  %178 = vmatprep.subr.bf16.mxu0 0
  %179 = vmatpush1.bf16.msra.mxu0 %v143
  %180 = vmatprep.subr.bf16.mxu0 0
  %181 = vmatpush1.bf16.msra.mxu0 %v144
  %182 = vmatprep.subr.bf16.mxu0 0
  %183 = vmatpush1.bf16.msra.mxu0 %v145
  %184 = vmatprep.subr.bf16.mxu0 0
  %185 = vmatpush1.bf16.msra.mxu0 %v146
  %186 = vmatprep.subr.bf16.mxu0 0
  %187 = vmatpush1.bf16.msra.mxu0 %v147
  %188 = vmatprep.subr.bf16.mxu0 0
  %189 = vmatpush1.bf16.msra.mxu0 %v148
  %190 = vmatprep.subr.bf16.mxu0 0
  %191 = vmatpush1.bf16.msra.mxu0 %v149
  %192 = vmatprep.subr.bf16.mxu0 0
  %193 = vmatpush1.bf16.msra.mxu0 %v150
  %194 = vmatprep.subr.bf16.mxu0 0
  %195 = vmatpush1.bf16.msra.mxu0 %v151
  %196 = vmatprep.subr.bf16.mxu0 0
  %197 = vmatpush1.bf16.msra.mxu0 %v152
  %198 = vmatprep.subr.bf16.mxu0 0
  %199 = vmatpush1.bf16.msra.mxu0 %v153
  %200 = vmatprep.subr.bf16.mxu0 0
  %201 = vmatpush1.bf16.msra.mxu0 %v154
  %202 = vmatprep.subr.bf16.mxu0 0
  %203 = vmatpush1.bf16.msra.mxu0 %v155
  %204 = vmatprep.mubr.bf16.mxu0 %v73
  %205 = vmatmul.mubr.bf16.gmra.mrb[0].mxu0 %v72
  %v206 = vpop.f32.mrb[0].mxu0
  %v207 = vadd.f32 0.0, %v206
  %v208 = vpop.f32.mrb[0].mxu0
  %v209 = vpop.f32.mrb[0].mxu0
  %v210 = vadd.f32 0.0, %v209
  %v211 = vpop.f32.mrb[0].mxu0
  %212 = vdwg.mxu0
  %v213 = vadd.f32 %v30, %v207
  %v214 = vadd.f32 %v31, %v210
  %215 = vst [vmem:[#allocation2] sm:$0xff] %v213
  %216 = vst [vmem:[#allocation2 + $0x8] sm:$0xff] %v214
  // Predicated region
  $region30: #{transformer_decoder_forward.27} parent=0 // pred_check
    %p217 = pneg %p24
  $region31: #{transformer_decoder_forward.27} parent=0 // pred_check_branch
    %219 = sbr.rel (%p217) target = $region33
  $region32: #{transformer_decoder_forward.27} parent=0 // pred_region
    %v220 = vld [vmem:[#allocation2] sm:$0xff]
    %v221 = vld [vmem:[#allocation2 + $0x8] sm:$0xff]
    %v222 = vld [vmem:[%s3] sm:$0xf]
    %v223 = vld [vmem:[%s3 + $0x4] sm:$0xf]
    %v224 = vunpack.c.l.bf16 %v222
    %v225 = vunpack.c.l.bf16 %v223
    %v226 = vadd.f32 %v220, %v224
    %v227 = vadd.f32 %v221, %v225
    %v228 = vld [vmem:[%s2] sm:$0x1]
    %v230 = vlaneseq
    %v231 = vshrl.u32 %v230, 7
    %v232 = vsub.s32 0, %v231
    %v233 = vrot.slane %v228, %v232
    %v235 = vadd.f32 %v226, %v233
    %v236 = vadd.f32 %v227, %v233
    %237 = vadd.xlane.f32.xlu0 %v235
    %v238 = vpop.xlane.xlu0 %237
    %239 = vadd.xlane.f32.xlu0 %v236
    %v240 = vpop.xlane.xlu0 %239
    %v241 = vrcp.pop 128.0
    %v242 = vmul.f32 %v238, %v241
    %v243 = vmul.f32 %v240, %v241
    %v244 = vsub.f32 %v235, %v242
    %v245 = vsub.f32 %v236, %v243
    %v246 = vmul.f32 %v244, %v244
    %v247 = vmul.f32 %v245, %v245
    %248 = vadd.xlane.f32.xlu0 %v246
    %v249 = vpop.xlane.xlu0 %248
    %250 = vadd.xlane.f32.xlu0 %v247
    %v251 = vpop.xlane.xlu0 %250
    %v252 = vmul.f32 %v249, %v241
    %v253 = vmul.f32 %v251, %v241
    %v254 = vadd.f32 %v252, 1e-05
    %v255 = vadd.f32 %v253, 1e-05
    %v256 = vrsqrt.pop %v254
    %v257 = vrsqrt.pop %v255
    %v258 = vmul.f32 %v244, %v256
    %v259 = vmul.f32 %v245, %v257
    %v260 = vld [vmem:[%s4] sm:$0x1]
    %v262 = vlaneseq
    %v263 = vshrl.u32 %v262, 7
    %v264 = vsub.s32 0, %v263
    %v265 = vrot.slane %v260, %v264
    %v267 = vmul.f32 %v258, %v265
    %v268 = vmul.f32 %v259, %v265
    %v269 = vld [vmem:[%s5] sm:$0x1]
    %v271 = vlaneseq
    %v272 = vshrl.u32 %v271, 7
    %v273 = vsub.s32 0, %v272
    %v274 = vrot.slane %v269, %v273
    %v276 = vadd.f32 %v267, %v274
    %v277 = vadd.f32 %v268, %v274
    %v278 = vpack.c.bf16 %v277, %v276
    %v280 = vunpack.c.l.b16 %v278
    %v281 = vunpack.c.h.b16 %v278
    %v282 = vpack.c.b16 %v280, %v280
    %v283 = vpack.c.b16 %v281, %v281
    %286 = vst [vmem:[%s6] sm:$0xf] %v282
    %287 = vst [vmem:[%s6 + $0x4] sm:$0xf] %v283
  $region33: #{transformer_decoder_forward.27} parent=0 // pred_fallthru
    _
  // Predicated region
  $region34: #{transformer_decoder_forward.27} parent=0 // pred_check
    _
  $region35: #{transformer_decoder_forward.27} parent=0 // pred_check_branch
    %289 = sbr.rel (0) target = $region37
  $region36: #{transformer_decoder_forward.27} parent=0 // pred_region
    _
  $region37: #{transformer_decoder_forward.27} parent=0 // pred_fallthru
    _
  // Predicated region
  $region38: #{transformer_decoder_forward.27} parent=0 // pred_check
    _
  $region39: #{transformer_decoder_forward.27} parent=0 // pred_check_branch
    %291 = sbr.rel (0) target = $region41
  $region40: #{transformer_decoder_forward.27} parent=0 // pred_region
    _
  $region41: #{transformer_decoder_forward.27} parent=0 // pred_fallthru
    _

// kernel: transformer_decoder_forward.37
$region0: #{transformer_decoder_forward.37}
  #allocation0 [shape = 'u32[]', space=smem, size = 0x4, offset = 0x4, fixed_abs, tag = 'smem constant byte address 0x4 - core index']
  #allocation1 [shape = 'u32[144,128]{1,0:T(1,128)}', space=vmem, size = 0x12000, scoped, tag = 'internal scratch']
  #allocation2 [shape = 'f32[16,128]{1,0:T(8,128)}', space=vmem, size = 0x2000, scoped, tag = 'scratch operand']
  %s0 = inlined_call_operand.vmem [shape: bf16[16,128], index: 0, kind: input, shape index: {}]
  %s1 = inlined_call_operand.vmem [shape: bf16[128,128], index: 1, kind: input, shape index: {}]
  %s2 = inlined_call_operand.vmem [shape: f32[1,128], index: 2, kind: input, shape index: {}]
  %s3 = inlined_call_operand.hbm [shape: f32[16,128], index: 3, kind: output, shape index: {}]
  %s4 = sld [smem:[#allocation0]]
  $region30: #{transformer_decoder_forward.37} parent=0
    _
  %s6 = ssub.s32 1, %s4
  %s7 = scalar_select 0, %s6, %s4
  $region1: #{transformer_decoder_forward.37} parent=0
    #allocation3 [shape = 'u8[8192]{0}', space=vmem, size = 0x2000, scoped, tag = 'output window, operand 0, single buffered']
    #allocation4 [shape = 's32[1]{0}', space=sflag, size = 0x4, scoped, tag = 'scoped memory for transformer_decoder_forward.37']
    %8 = vsyncpa [#allocation4], 0
    // Predicated region
    $region2: #{transformer_decoder_forward.37} parent=1 // pred_check
      _
    $region3: #{transformer_decoder_forward.37} parent=1 // pred_check_branch
      %10 = sbr.rel (0) target = $region5
    $region4: #{transformer_decoder_forward.37} parent=1 // pred_region
      _
    $region5: #{transformer_decoder_forward.37} parent=1 // pred_fallthru
      _
    // Predicated region
    $region6: #{transformer_decoder_forward.37} parent=1 // pred_check
      _
    $region7: #{transformer_decoder_forward.37} parent=1 // pred_check_branch
      %12 = sbr.rel (0) target = $region9
    $region8: #{transformer_decoder_forward.37} parent=1 // pred_region
      _
    $region9: #{transformer_decoder_forward.37} parent=1 // pred_fallthru
      _
    // Predicated region
    $region10: #{transformer_decoder_forward.37} parent=1 // pred_check
      _
    $region11: #{transformer_decoder_forward.37} parent=1 // pred_check_branch
      %14 = sbr.rel (0) target = $region13
    $region12: #{transformer_decoder_forward.37} parent=1 // pred_region
      _
    $region13: #{transformer_decoder_forward.37} parent=1 // pred_fallthru
      _
    %p16 = scmp.eq.s32.totalorder 0, 0
    // Predicated region
    $region14: #{transformer_decoder_forward.37} parent=1 // pred_check
      %p17 = pneg %p16
    $region15: #{transformer_decoder_forward.37} parent=1 // pred_check_branch
      %19 = sbr.rel (%p17) target = $region17
    $region16: #{transformer_decoder_forward.37} parent=1 // pred_region
      %20 = vst [vmem:[#allocation2] sm:$0xff] 0.0
      %21 = vst [vmem:[#allocation2 + $0x8] sm:$0xff] 0.0
    $region17: #{transformer_decoder_forward.37} parent=1 // pred_fallthru
      _
    %v22 = vld [vmem:[#allocation2] sm:$0xff]
    %v23 = vld [vmem:[#allocation2 + $0x8] sm:$0xff]
    %v24 = vld [vmem:[%s0] sm:$0xf]
    %v25 = vld [vmem:[%s0 + $0x4] sm:$0xf]
    %v26 = vld [vmem:[%s1] sm:$0xf]
    %v27 = vld [vmem:[%s1 + $0x4] sm:$0xf]
    %v28 = vld [vmem:[%s1 + $0x8] sm:$0xf]
    %v29 = vld [vmem:[%s1 + $0xc] sm:$0xf]
    %v30 = vld [vmem:[%s1 + $0x10] sm:$0xf]
    %v31 = vld [vmem:[%s1 + $0x14] sm:$0xf]
    %v32 = vld [vmem:[%s1 + $0x18] sm:$0xf]
    %v33 = vld [vmem:[%s1 + $0x1c] sm:$0xf]
    %v34 = vld [vmem:[%s1 + $0x20] sm:$0xf]
    %v35 = vld [vmem:[%s1 + $0x24] sm:$0xf]
    %v36 = vld [vmem:[%s1 + $0x28] sm:$0xf]
    %v37 = vld [vmem:[%s1 + $0x2c] sm:$0xf]
    %v38 = vld [vmem:[%s1 + $0x30] sm:$0xf]
    %v39 = vld [vmem:[%s1 + $0x34] sm:$0xf]
    %v40 = vld [vmem:[%s1 + $0x38] sm:$0xf]
    %v41 = vld [vmem:[%s1 + $0x3c] sm:$0xf]
    %v44 = vunpack.c.l.b16 %v24
    %v45 = vunpack.c.l.b16 %v25
    %v46 = vpack.c.b16 %v45, %v44
    %v64 = vunpack.c.l.b16 %v26
    %v65 = vunpack.c.l.b16 %v27
    %v66 = vunpack.c.l.b16 %v28
    %v67 = vunpack.c.l.b16 %v29
    %v68 = vunpack.c.l.b16 %v30
    %v69 = vunpack.c.l.b16 %v31
    %v70 = vunpack.c.l.b16 %v32
    %v71 = vunpack.c.l.b16 %v33
    %v72 = vunpack.c.l.b16 %v34
    %v73 = vunpack.c.l.b16 %v35
    %v74 = vunpack.c.l.b16 %v36
    %v75 = vunpack.c.l.b16 %v37
    %v76 = vunpack.c.l.b16 %v38
    %v77 = vunpack.c.l.b16 %v39
    %v78 = vunpack.c.l.b16 %v40
    %v79 = vunpack.c.l.b16 %v41
    %v80 = vpack.c.b16 %v65, %v64
    %v81 = vpack.c.b16 %v67, %v66
    %v82 = vpack.c.b16 %v69, %v68
    %v83 = vpack.c.b16 %v71, %v70
    %v84 = vpack.c.b16 %v73, %v72
    %v85 = vpack.c.b16 %v75, %v74
    %v86 = vpack.c.b16 %v77, %v76
    %v87 = vpack.c.b16 %v79, %v78
    %96 = vmatprep.subr.bf16.mxu0 0
    %97 = vmatpush1.bf16.msra.mxu0 %v80
    %98 = vmatprep.subr.bf16.mxu0 0
    %99 = vmatpush1.bf16.msra.mxu0 %v81
    %100 = vmatprep.subr.bf16.mxu0 0
    %101 = vmatpush1.bf16.msra.mxu0 %v82
    %102 = vmatprep.subr.bf16.mxu0 0
    %103 = vmatpush1.bf16.msra.mxu0 %v83
    %104 = vmatprep.subr.bf16.mxu0 0
    %105 = vmatpush1.bf16.msra.mxu0 %v84
    %106 = vmatprep.subr.bf16.mxu0 0
    %107 = vmatpush1.bf16.msra.mxu0 %v85
    %108 = vmatprep.subr.bf16.mxu0 0
    %109 = vmatpush1.bf16.msra.mxu0 %v86
    %110 = vmatprep.subr.bf16.mxu0 0
    %111 = vmatpush1.bf16.msra.mxu0 %v87
    %112 = vmatprep.subr.bf16.mxu0 0
    %113 = vmatpush1.bf16.msra.mxu0 0
    %114 = vmatprep.subr.bf16.mxu0 0
    %115 = vmatpush1.bf16.msra.mxu0 0
    %116 = vmatprep.subr.bf16.mxu0 0
    %117 = vmatpush1.bf16.msra.mxu0 0
    %118 = vmatprep.subr.bf16.mxu0 0
    %119 = vmatpush1.bf16.msra.mxu0 0
    %120 = vmatprep.subr.bf16.mxu0 0
    %121 = vmatpush1.bf16.msra.mxu0 0
    %122 = vmatprep.subr.bf16.mxu0 0
    %123 = vmatpush1.bf16.msra.mxu0 0
    %124 = vmatprep.subr.bf16.mxu0 0
    %125 = vmatpush1.bf16.msra.mxu0 0
    %126 = vmatprep.subr.bf16.mxu0 0
    %127 = vmatpush1.bf16.msra.mxu0 0
    %128 = vmatprep.mubr.bf16.mxu0 0
    %129 = vmatmul.mubr.bf16.gmra.mrb[0].mxu0 %v46
    %v130 = vpop.f32.mrb[0].mxu0
    %v131 = vadd.f32 0.0, %v130
    %v132 = vpop.f32.mrb[0].mxu0
    %v133 = vpop.f32.mrb[0].mxu0
    %v134 = vadd.f32 0.0, %v133
    %v135 = vpop.f32.mrb[0].mxu0
    %136 = vdwg.mxu0
    %v137 = vadd.f32 %v22, %v131
    %v138 = vadd.f32 %v23, %v134
    %139 = vst [vmem:[#allocation2] sm:$0xff] %v137
    %140 = vst [vmem:[#allocation2 + $0x8] sm:$0xff] %v138
    // Predicated region
    $region18: #{transformer_decoder_forward.37} parent=1 // pred_check
      %p141 = pneg %p16
    $region19: #{transformer_decoder_forward.37} parent=1 // pred_check_branch
      %143 = sbr.rel (%p141) target = $region21
    $region20: #{transformer_decoder_forward.37} parent=1 // pred_region
      %v144 = vld [vmem:[#allocation2] sm:$0xff]
      %v145 = vld [vmem:[#allocation2 + $0x8] sm:$0xff]
      %v146 = vld [vmem:[%s2] sm:$0x1]
      %v148 = vlaneseq
      %v149 = vshrl.u32 %v148, 7
      %v150 = vsub.s32 0, %v149
      %v151 = vrot.slane %v146, %v150
      %v153 = vadd.f32 %v144, %v151
      %v154 = vadd.f32 %v145, %v151
      %155 = vst [vmem:[#allocation3] sm:$0xff] %v153
      %156 = vst [vmem:[#allocation3 + $0x8] sm:$0xff] %v154
    $region21: #{transformer_decoder_forward.37} parent=1 // pred_fallthru
      _
    // Predicated region
    $region22: #{transformer_decoder_forward.37} parent=1 // pred_check
      _
    $region23: #{transformer_decoder_forward.37} parent=1 // pred_check_branch
      %158 = sbr.rel (0) target = $region25
    $region24: #{transformer_decoder_forward.37} parent=1 // pred_region
      %s160 = ssub.s32 256, 256
      %161 = vsyncadd [#allocation4], %s160
      %s162 = sshll.u32 [#allocation3], 4
      %s163 = int_to_ptr.vmem [resolvable:$true] %s162
      %168 = dma.vmem_to_hbm [thread:$0]  %s163, 256, %s3, [#allocation4], 128, 128, 8
    $region25: #{transformer_decoder_forward.37} parent=1 // pred_fallthru
      _
    // Predicated region
    $region26: #{transformer_decoder_forward.37} parent=1 // pred_check
      _
    $region27: #{transformer_decoder_forward.37} parent=1 // pred_check_branch
      %170 = sbr.rel (0) target = $region29
    $region28: #{transformer_decoder_forward.37} parent=1 // pred_region
      %171 = dma.done [#allocation4], 256
    $region29: #{transformer_decoder_forward.37} parent=1 // pred_fallthru
      _
    %172 = vsyncpa [#allocation4], 1

// kernel: transformer_decoder_forward.24
$region0: #{transformer_decoder_forward.24}
  #allocation0 [shape = 'u32[]', space=smem, size = 0x4, offset = 0x4, fixed_abs, tag = 'smem constant byte address 0x4 - core index']
  #allocation1 [shape = 'u32[144,128]{1,0:T(1,128)}', space=vmem, size = 0x12000, scoped, tag = 'internal scratch']
  #allocation2 [shape = 'f32[8,4]{1,0:T(8,128)}', space=vmem, size = 0x1000, scoped, tag = 'scratch operand']
  #allocation3 [shape = 'f32[8,4]{1,0:T(8,128)}', space=vmem, size = 0x1000, scoped, tag = 'scratch operand']
  #allocation4 [shape = 'f32[8,128]{1,0:T(8,128)}', space=vmem, size = 0x1000, scoped, tag = 'scratch operand']
  %s0 = inlined_call_operand.vmem [shape: bf16[2,8,128], index: 0, kind: input, shape index: {}]
  %s1 = inlined_call_operand.vmem [shape: bf16[2,8,256], index: 1, kind: input, shape index: {}, may-alias: {1,2}]
  %s2 = inlined_call_operand.vmem [shape: bf16[2,8,256], index: 2, kind: input, shape index: {}, may-alias: {1,2}]
  %s3 = inlined_call_operand.vmem [shape: s32[2,8,1], index: 3, kind: input, shape index: {}]
  %s4 = inlined_call_operand.vmem [shape: bf16[2,8,128], index: 4, kind: output, shape index: {}]
  %s5 = sld [smem:[#allocation0]]
  $region57: #{transformer_decoder_forward.24} parent=0
    _
  %s7 = ssub.s32 1, %s5
  %s8 = scalar_select 0, %s7, %s5
  loop: start=0, step=1, limit=4
  $region2: #{transformer_decoder_forward.24} parent=0 // loop_pre_header
    _
  $region3: #{transformer_decoder_forward.24} parent=0 // loop_header
    %s10 = sphi 0, %s14
    %p11 = scmp.ge.s32.totalorder %s10, 4
    %s17 = sphi 0, %s36
    %s18 = sphi 0, %s32
    %s19 = sphi 0, %s28
    %s20 = sphi 0, %s17
    %s21 = sphi 0, %s18
    %s22 = sphi 0, %s19
    %s23 = sphi 0, %s20
    %s24 = sphi 0, %s21
    %s25 = sphi 0, %s22
    %s41 = sphi 0, %s43
    %s44 = sphi 0, %s41
    %s45 = sphi 0, %s44
    %s61 = sphi 0, %s45
    %s69 = sphi 0, %s71
    %s72 = sphi 0, %s69
    %s73 = sphi 0, %s72
    %s89 = sphi 0, %s73
    %s97 = sphi 0, %s99
    %s100 = sphi 0, %s97
    %s101 = sphi 0, %s100
    %s117 = sphi 0, %s101
    %s125 = sphi 0, %s127
    %s128 = sphi 0, %s125
    %s129 = sphi 0, %s128
    %s145 = sphi 0, %s129
    %s153 = sphi 0, %s155
    %s156 = sphi 0, %s153
    %s157 = sphi 0, %s156
    %s173 = sphi 0, %s157
  $region4: #{transformer_decoder_forward.24} parent=0 // loop_header_branch
    %13 = sbr.rel (%p11) target = $region8
  $region5: #{transformer_decoder_forward.24} parent=0 // loop_body
    %s15 = ssub.s32 %s10, 1
    %s16 = ssub.s32 %s10, 2
    %s26 = sadd.s32 1, %s19
    %p27 = scmp.ge.s32.totalorder %s26, 1
    %s28 = scalar_select %p27, 0, %s26
    %s29 = sadd.s32 1, %s18
    %s30 = scalar_select %p27, %s29, %s18
    %p31 = scmp.ge.s32.totalorder %s30, 1
    %s32 = scalar_select %p31, 0, %s30
    %s33 = sadd.s32 1, %s17
    %s34 = scalar_select %p31, %s33, %s17
    %p35 = scmp.ge.s32.totalorder %s34, 2
    %s36 = scalar_select %p35, 0, %s34
    %s37 = ssub.s32 %s17, %s36
    %s38 = ssub.s32 %s18, %s32
    %s39 = sor.u32 %s37, %s38
    %p40 = scmp.eq.s32.totalorder %s39, 0
    %s42 = sadd.s32 %s41, 1
    %s43 = scalar_select %p40, %s41, %s42
    %p46 = pneg %p40
    %p47 = scmp.eq.s32.totalorder %s10, 1
    %p48 = por %p46, %p47
    %p49 = scmp.ne.s32.totalorder %s41, %s44
    %p50 = scmp.eq.s32.totalorder %s10, 0
    %p51 = por %p49, %p50
    %p52 = scmp.ne.s32.totalorder %s41, %s44
    %p53 = scmp.eq.s32.totalorder %s15, 1
    %p54 = por %p52, %p53
    %p55 = scmp.ne.s32.totalorder %s44, %s45
    %p56 = scmp.eq.s32.totalorder %s15, 0
    %p57 = por %p55, %p56
    %p58 = scmp.ne.s32.totalorder %s44, %s45
    %p59 = scmp.eq.s32.totalorder %s16, 1
    %p60 = por %p58, %p59
    %p62 = scmp.ne.s32.totalorder %s45, %s61
    %p63 = scmp.eq.s32.totalorder %s16, 0
    %p64 = por %p62, %p63
    %s65 = ssub.s32 %s17, %s36
    %s66 = ssub.s32 %s19, %s28
    %s67 = sor.u32 %s65, %s66
    %p68 = scmp.eq.s32.totalorder %s67, 0
    %s70 = sadd.s32 %s69, 1
    %s71 = scalar_select %p68, %s69, %s70
    %p74 = pneg %p68
    %p75 = scmp.eq.s32.totalorder %s10, 1
    %p76 = por %p74, %p75
    %p77 = scmp.ne.s32.totalorder %s69, %s72
    %p78 = scmp.eq.s32.totalorder %s10, 0
    %p79 = por %p77, %p78
    %p80 = scmp.ne.s32.totalorder %s69, %s72
    %p81 = scmp.eq.s32.totalorder %s15, 1
    %p82 = por %p80, %p81
    %p83 = scmp.ne.s32.totalorder %s72, %s73
    %p84 = scmp.eq.s32.totalorder %s15, 0
    %p85 = por %p83, %p84
    %p86 = scmp.ne.s32.totalorder %s72, %s73
    %p87 = scmp.eq.s32.totalorder %s16, 1
    %p88 = por %p86, %p87
    %p90 = scmp.ne.s32.totalorder %s73, %s89
    %p91 = scmp.eq.s32.totalorder %s16, 0
    %p92 = por %p90, %p91
    %s93 = ssub.s32 %s17, %s36
    %s94 = ssub.s32 %s19, %s28
    %s95 = sor.u32 %s93, %s94
    %p96 = scmp.eq.s32.totalorder %s95, 0
    %s98 = sadd.s32 %s97, 1
    %s99 = scalar_select %p96, %s97, %s98
    %p102 = pneg %p96
    %p103 = scmp.eq.s32.totalorder %s10, 1
    %p104 = por %p102, %p103
    %p105 = scmp.ne.s32.totalorder %s97, %s100
    %p106 = scmp.eq.s32.totalorder %s10, 0
    %p107 = por %p105, %p106
    %p108 = scmp.ne.s32.totalorder %s97, %s100
    %p109 = scmp.eq.s32.totalorder %s15, 1
    %p110 = por %p108, %p109
    %p111 = scmp.ne.s32.totalorder %s100, %s101
    %p112 = scmp.eq.s32.totalorder %s15, 0
    %p113 = por %p111, %p112
    %p114 = scmp.ne.s32.totalorder %s100, %s101
    %p115 = scmp.eq.s32.totalorder %s16, 1
    %p116 = por %p114, %p115
    %p118 = scmp.ne.s32.totalorder %s101, %s117
    %p119 = scmp.eq.s32.totalorder %s16, 0
    %p120 = por %p118, %p119
    %s121 = ssub.s32 %s17, %s36
    %s122 = ssub.s32 %s18, %s32
    %s123 = sor.u32 %s121, %s122
    %p124 = scmp.eq.s32.totalorder %s123, 0
    %s126 = sadd.s32 %s125, 1
    %s127 = scalar_select %p124, %s125, %s126
    %p130 = pneg %p124
    %p131 = scmp.eq.s32.totalorder %s10, 1
    %p132 = por %p130, %p131
    %p133 = scmp.ne.s32.totalorder %s125, %s128
    %p134 = scmp.eq.s32.totalorder %s10, 0
    %p135 = por %p133, %p134
    %p136 = scmp.ne.s32.totalorder %s125, %s128
    %p137 = scmp.eq.s32.totalorder %s15, 1
    %p138 = por %p136, %p137
    %p139 = scmp.ne.s32.totalorder %s128, %s129
    %p140 = scmp.eq.s32.totalorder %s15, 0
    %p141 = por %p139, %p140
    %p142 = scmp.ne.s32.totalorder %s128, %s129
    %p143 = scmp.eq.s32.totalorder %s16, 1
    %p144 = por %p142, %p143
    %p146 = scmp.ne.s32.totalorder %s129, %s145
    %p147 = scmp.eq.s32.totalorder %s16, 0
    %p148 = por %p146, %p147
    %s149 = ssub.s32 %s17, %s36
    %s150 = ssub.s32 %s18, %s32
    %s151 = sor.u32 %s149, %s150
    %p152 = scmp.eq.s32.totalorder %s151, 0
    %s154 = sadd.s32 %s153, 1
    %s155 = scalar_select %p152, %s153, %s154
    %p158 = pneg %p152
    %p159 = scmp.eq.s32.totalorder %s10, 1
    %p160 = por %p158, %p159
    %p161 = scmp.ne.s32.totalorder %s153, %s156
    %p162 = scmp.eq.s32.totalorder %s10, 0
    %p163 = por %p161, %p162
    %p164 = scmp.ne.s32.totalorder %s153, %s156
    %p165 = scmp.eq.s32.totalorder %s15, 1
    %p166 = por %p164, %p165
    %p167 = scmp.ne.s32.totalorder %s156, %s157
    %p168 = scmp.eq.s32.totalorder %s15, 0
    %p169 = por %p167, %p168
    %p170 = scmp.ne.s32.totalorder %s156, %s157
    %p171 = scmp.eq.s32.totalorder %s16, 1
    %p172 = por %p170, %p171
    %p174 = scmp.ne.s32.totalorder %s157, %s173
    %p175 = scmp.eq.s32.totalorder %s16, 0
    %p176 = por %p174, %p175
    %p177 = scmp.le.s32.totalorder 1, %s10
    %p178 = scmp.lt.s32.totalorder %s10, 3
    %p179 = pnand %p177, %p178
    %p180 = pneg %p179
    // Predicated region
    $region9: #{transformer_decoder_forward.24} parent=5 // pred_check
      _
    $region10: #{transformer_decoder_forward.24} parent=5 // pred_check_branch
      %182 = sbr.rel (%p179) target = $region12
    $region11: #{transformer_decoder_forward.24} parent=5 // pred_region
      %s183 = ssub.s32 %s10, 1
    $region12: #{transformer_decoder_forward.24} parent=5 // pred_fallthru
      _
    %p184 = scmp.lt.s32.totalorder %s10, 2
    // Predicated region
    $region13: #{transformer_decoder_forward.24} parent=5 // pred_check
      %p185 = pneg %p184
    $region14: #{transformer_decoder_forward.24} parent=5 // pred_check_branch
      %187 = sbr.rel (%p185) target = $region16
    $region15: #{transformer_decoder_forward.24} parent=5 // pred_region
      // Predicated region
      $region17: #{transformer_decoder_forward.24} parent=15 // pred_check
        %p188 = pneg %p51
      $region18: #{transformer_decoder_forward.24} parent=15 // pred_check_branch
        %190 = sbr.rel (%p188) target = $region20
      $region19: #{transformer_decoder_forward.24} parent=15 // pred_region
        %p191 = scmp.lt.s32.totalorder %s17, 1
        %s192 = scalar_select %p191, %s17, 1
        %p193 = scmp.lt.s32.totalorder %s18, 0
        %s194 = scalar_select %p193, %s18, 0
        %s195 = sadd.s32 %s194, %s192
        %s196 = smul.addr %s195, 4
        %s197 = scalar_lea.vmem %s0, %s196
      $region20: #{transformer_decoder_forward.24} parent=15 // pred_fallthru
        _
      // Predicated region
      $region21: #{transformer_decoder_forward.24} parent=15 // pred_check
        %p198 = pneg %p79
      $region22: #{transformer_decoder_forward.24} parent=15 // pred_check_branch
        %200 = sbr.rel (%p198) target = $region24
      $region23: #{transformer_decoder_forward.24} parent=15 // pred_region
        %p201 = scmp.lt.s32.totalorder %s17, 1
        %s202 = scalar_select %p201, %s17, 1
        %p203 = scmp.lt.s32.totalorder %s19, 0
        %s204 = scalar_select %p203, %s19, 0
        %s205 = smul.addr %s204, 2
        %s206 = smul.addr %s202, 2
        %s207 = sadd.s32 %s205, %s206
        %s208 = smul.addr %s207, 4
        %s209 = scalar_lea.vmem %s1, %s208
      $region24: #{transformer_decoder_forward.24} parent=15 // pred_fallthru
        _
      // Predicated region
      $region25: #{transformer_decoder_forward.24} parent=15 // pred_check
        %p210 = pneg %p107
      $region26: #{transformer_decoder_forward.24} parent=15 // pred_check_branch
        %212 = sbr.rel (%p210) target = $region28
      $region27: #{transformer_decoder_forward.24} parent=15 // pred_region
        %p213 = scmp.lt.s32.totalorder %s17, 1
        %s214 = scalar_select %p213, %s17, 1
        %p215 = scmp.lt.s32.totalorder %s19, 0
        %s216 = scalar_select %p215, %s19, 0
        %s217 = smul.addr %s216, 2
        %s218 = sadd.s32 1, %s217
        %s219 = smul.addr %s214, 2
        %s220 = sadd.s32 %s218, %s219
        %s221 = smul.addr %s220, 4
        %s222 = scalar_lea.vmem %s2, %s221
      $region28: #{transformer_decoder_forward.24} parent=15 // pred_fallthru
        _
      // Predicated region
      $region29: #{transformer_decoder_forward.24} parent=15 // pred_check
        %p223 = pneg %p135
      $region30: #{transformer_decoder_forward.24} parent=15 // pred_check_branch
        %225 = sbr.rel (%p223) target = $region32
      $region31: #{transformer_decoder_forward.24} parent=15 // pred_region
        %p226 = scmp.lt.s32.totalorder %s17, 1
        %s227 = scalar_select %p226, %s17, 1
        %p228 = scmp.lt.s32.totalorder %s18, 0
        %s229 = scalar_select %p228, %s18, 0
        %s230 = sadd.s32 %s229, %s227
        %s231 = smul.addr %s230, 8
        %s232 = scalar_lea.vmem %s3, %s231
      $region32: #{transformer_decoder_forward.24} parent=15 // pred_fallthru
        _
    $region16: #{transformer_decoder_forward.24} parent=5 // pred_fallthru
      _
    %p233 = scmp.le.s32.totalorder 1, %s10
    %p234 = scmp.lt.s32.totalorder %s10, 3
    %p235 = pnand %p233, %p234
    %p236 = pneg %p235
    // Predicated region
    $region33: #{transformer_decoder_forward.24} parent=5 // pred_check
      _
    $region34: #{transformer_decoder_forward.24} parent=5 // pred_check_branch
      %238 = sbr.rel (%p235) target = $region36
    $region35: #{transformer_decoder_forward.24} parent=5 // pred_region
      %s239 = ssub.s32 %s10, 1
      %p240 = scmp.lt.s32.totalorder %s20, 1
      %s241 = scalar_select %p240, %s20, 1
      %p242 = scmp.lt.s32.totalorder %s21, 0
      %s243 = scalar_select %p242, %s21, 0
      %s244 = sadd.s32 %s243, %s241
      %s245 = smul.addr %s244, 4
      %s246 = scalar_lea.vmem %s0, %s245
      %p247 = pneg %p57
      %p248 = pneg %p54
      %p249 = scmp.lt.s32.totalorder %s20, 1
      %s250 = scalar_select %p249, %s20, 1
      %p251 = scmp.lt.s32.totalorder %s22, 0
      %s252 = scalar_select %p251, %s22, 0
      %s253 = smul.addr %s252, 2
      %s254 = smul.addr %s250, 2
      %s255 = sadd.s32 %s253, %s254
      %s256 = smul.addr %s255, 4
      %s257 = scalar_lea.vmem %s1, %s256
      %p258 = pneg %p85
      %p259 = pneg %p82
      %p260 = scmp.lt.s32.totalorder %s20, 1
      %s261 = scalar_select %p260, %s20, 1
      %p262 = scmp.lt.s32.totalorder %s22, 0
      %s263 = scalar_select %p262, %s22, 0
      %s264 = smul.addr %s263, 2
      %s265 = sadd.s32 1, %s264
      %s266 = smul.addr %s261, 2
      %s267 = sadd.s32 %s265, %s266
      %s268 = smul.addr %s267, 4
      %s269 = scalar_lea.vmem %s2, %s268
      %p270 = pneg %p113
      %p271 = pneg %p110
      %p272 = scmp.lt.s32.totalorder %s20, 1
      %s273 = scalar_select %p272, %s20, 1
      %p274 = scmp.lt.s32.totalorder %s21, 0
      %s275 = scalar_select %p274, %s21, 0
      %s276 = sadd.s32 %s275, %s273
      %s277 = smul.addr %s276, 8
      %s278 = scalar_lea.vmem %s3, %s277
      %p279 = pneg %p141
      %p280 = pneg %p138
      %p281 = pneg %p169
      %p282 = pneg %p166
      %p283 = scmp.lt.s32.totalorder %s20, 1
      %s284 = scalar_select %p283, %s20, 1
      %p285 = scmp.lt.s32.totalorder %s21, 0
      %s286 = scalar_select %p285, %s21, 0
      %s287 = sadd.s32 %s286, %s284
      %s288 = smul.addr %s287, 4
      %s289 = scalar_lea.vmem %s4, %s288
      %p290 = scmp.lt.s32.totalorder %s20, 1
      %s291 = scalar_select %p290, %s20, 1
      %p292 = scmp.lt.s32.totalorder %s21, 0
      %s293 = scalar_select %p292, %s21, 0
      %s294 = sadd.s32 %s293, %s291
      %s295 = smul.addr %s294, 4
      %s296 = scalar_lea.vmem %s0, %s295
      %p297 = scmp.lt.s32.totalorder %s20, 1
      %s298 = scalar_select %p297, %s20, 1
      %p299 = scmp.lt.s32.totalorder %s22, 0
      %s300 = scalar_select %p299, %s22, 0
      %s301 = smul.addr %s300, 2
      %s302 = smul.addr %s298, 2
      %s303 = sadd.s32 %s301, %s302
      %s304 = smul.addr %s303, 4
      %s305 = scalar_lea.vmem %s1, %s304
      %p306 = scmp.lt.s32.totalorder %s20, 1
      %s307 = scalar_select %p306, %s20, 1
      %p308 = scmp.lt.s32.totalorder %s22, 0
      %s309 = scalar_select %p308, %s22, 0
      %s310 = smul.addr %s309, 2
      %s311 = sadd.s32 1, %s310
      %s312 = smul.addr %s307, 2
      %s313 = sadd.s32 %s311, %s312
      %s314 = smul.addr %s313, 4
      %s315 = scalar_lea.vmem %s2, %s314
      %p316 = scmp.lt.s32.totalorder %s20, 1
      %s317 = scalar_select %p316, %s20, 1
      %p318 = scmp.lt.s32.totalorder %s21, 0
      %s319 = scalar_select %p318, %s21, 0
      %s320 = sadd.s32 %s319, %s317
      %s321 = smul.addr %s320, 8
      %s322 = scalar_lea.vmem %s3, %s321
      %p323 = scmp.lt.s32.totalorder %s20, 1
      %s324 = scalar_select %p323, %s20, 1
      %p325 = scmp.lt.s32.totalorder %s21, 0
      %s326 = scalar_select %p325, %s21, 0
      %s327 = sadd.s32 %s326, %s324
      %s328 = smul.addr %s327, 4
      %s329 = scalar_lea.vmem %s4, %s328
      %p331 = scmp.eq.s32.totalorder %s22, 0
      // Predicated region
      $region37: #{transformer_decoder_forward.24} parent=35 // pred_check
        %p332 = pneg %p331
      $region38: #{transformer_decoder_forward.24} parent=35 // pred_check_branch
        %334 = sbr.rel (%p332) target = $region40
      $region39: #{transformer_decoder_forward.24} parent=35 // pred_region
        %vm335 = vcmask 31744
        %336 = vst.msk [vmem:[#allocation2] sm:$0xff] %vm335, -inf
        %337 = vst.msk [vmem:[#allocation3] sm:$0xff] %vm335, 0.0
        %338 = vst [vmem:[#allocation4] sm:$0xff] 0.0
      $region40: #{transformer_decoder_forward.24} parent=35 // pred_fallthru
        _
      %v339 = vld [vmem:[%s296] sm:$0xf]
      %v340 = vld [vmem:[%s305] sm:$0xf]
      %v341 = vld [vmem:[%s315] sm:$0xf]
      %v342 = vld [vmem:[%s322] sm:$0xff]
      %s343 = smul.u32 %s22, 8
      %v344 = vlaneseq
      %v345 = vand.u32 %v344, 127
      %v346 = vstv %s343
      %v347 = vadd.s32 %v346, %v345
      %348 = vset.pattern.permute.xlu0 0
      %349 = vperm.xlu0 %348, %v342
      %v350 = vpop.permute.xlu0 %349
      %vm351 = vcmp.lt.s32.totalorder %v347, %v350
      %vm352 = vcmask 261120
      %v354 = vsel %vm352, %v339, 0
      %v357 = vsel %vm352, %v340, 0
      %359 = vmatprep.subr.bf16.mxu0 0
      %360 = vmatpush1.bf16.xpose.msra.mxu0 %v357
      %361 = vmatprep.subr.bf16.mxu0 0
      %362 = vmatpush1.bf16.xpose.msra.mxu0 0
      %363 = vmatprep.subr.bf16.mxu0 0
      %364 = vmatpush1.bf16.xpose.msra.mxu0 0
      %365 = vmatprep.subr.bf16.mxu0 0
      %366 = vmatpush1.bf16.xpose.msra.mxu0 0
      %367 = vmatprep.subr.bf16.mxu0 0
      %368 = vmatpush1.bf16.xpose.msra.mxu0 0
      %369 = vmatprep.subr.bf16.mxu0 0
      %370 = vmatpush1.bf16.xpose.msra.mxu0 0
      %371 = vmatprep.subr.bf16.mxu0 0
      %372 = vmatpush1.bf16.xpose.msra.mxu0 0
      %373 = vmatprep.subr.bf16.mxu0 0
      %374 = vmatpush1.bf16.xpose.msra.mxu0 0
      %375 = vmatprep.subr.bf16.mxu0 0
      %376 = vmatpush1.bf16.xpose.msra.mxu0 0
      %377 = vmatprep.subr.bf16.mxu0 0
      %378 = vmatpush1.bf16.xpose.msra.mxu0 0
      %379 = vmatprep.subr.bf16.mxu0 0
      %380 = vmatpush1.bf16.xpose.msra.mxu0 0
      %381 = vmatprep.subr.bf16.mxu0 0
      %382 = vmatpush1.bf16.xpose.msra.mxu0 0
      %383 = vmatprep.subr.bf16.mxu0 0
      %384 = vmatpush1.bf16.xpose.msra.mxu0 0
      %385 = vmatprep.subr.bf16.mxu0 0
      %386 = vmatpush1.bf16.xpose.msra.mxu0 0
      %387 = vmatprep.subr.bf16.mxu0 0
      %388 = vmatpush1.bf16.xpose.msra.mxu0 0
      %389 = vmatprep.subr.bf16.mxu0 0
      %390 = vmatpush1.bf16.xpose.msra.mxu0 0
      %391 = vmatprep.mubr.bf16.mxu0 0
      %392 = vmatmul.mubr.bf16.gmra.mrb[0].mxu0 %v354
      %v393 = vpop.f32.mrb[0].mxu0
      %v394 = vadd.f32 0.0, %v393
      %v395 = vpop.f32.mrb[0].mxu0
      %v396 = vpop.f32.mrb[0].mxu0
      %v397 = vpop.f32.mrb[0].mxu0
      %398 = vdwg.mxu0
      %v399 = vmul.f32 %v394, 0.17677669
      %v400 = vsel %vm351, %v399, -1000000.0
      %v401 = vld [vmem:[#allocation2] sm:$0xff]
      %vm402 = vcmask 64512
      %v403 = vsel %vm402, %v400, -inf
      %404 = vmax.xlane.f32.xlu0 %v403
      %v405 = vpop.xlane.xlu0 %404
      %v406 = vmax.f32 %v401, %v405
      %v407 = vsub.f32 %v401, %v406
      %v408 = vmul.f32 %v407, 1.442695
      %v409 = vpow.pop %v408
      %411 = vset.pattern.permute.xlu0 0
      %412 = vperm.xlu0 %411, %v406
      %v413 = vpop.permute.xlu0 %412
      %v415 = vsub.f32 %v400, %v413
      %v416 = vmul.f32 %v415, 1.442695
      %v417 = vpow.pop %v416
      %v418 = vld [vmem:[#allocation3] sm:$0xff]
      %v419 = vmul.f32 %v409, %v418
      %v420 = vmul.f32 %v400, 0.0
      %v421 = vadd.f32 %v420, %v417
      %v422 = vsel %vm402, %v421, 0.0
      %423 = vadd.xlane.f32.xlu0 %v422
      %v424 = vpop.xlane.xlu0 %423
      %v425 = vadd.f32 %v419, %v424
      %v426 = vld [vmem:[#allocation4] sm:$0xff]
      %428 = vset.pattern.permute.xlu0 0
      %429 = vperm.xlu0 %428, %v409
      %v430 = vpop.permute.xlu0 %429
      %v432 = vmul.f32 %v430, %v426
      %v433 = vpack.c.bf16 %v417, %v417
      %v435 = vsel %vm402, %v433, 0
      %vm437 = vcmask 1043456
      %v439 = vsel %vm437, %v341, 0
      %441 = vmatprep.subr.bf16.mxu0 0
      %442 = vmatpush1.bf16.msra.mxu0 %v439
      %443 = vmatprep.subr.bf16.mxu0 0
      %444 = vmatpush1.bf16.msra.mxu0 0
      %445 = vmatprep.subr.bf16.mxu0 0
      %446 = vmatpush1.bf16.msra.mxu0 0
      %447 = vmatprep.subr.bf16.mxu0 0
      %448 = vmatpush1.bf16.msra.mxu0 0
      %449 = vmatprep.subr.bf16.mxu0 0
      %450 = vmatpush1.bf16.msra.mxu0 0
      %451 = vmatprep.subr.bf16.mxu0 0
      %452 = vmatpush1.bf16.msra.mxu0 0
      %453 = vmatprep.subr.bf16.mxu0 0
      %454 = vmatpush1.bf16.msra.mxu0 0
      %455 = vmatprep.subr.bf16.mxu0 0
      %456 = vmatpush1.bf16.msra.mxu0 0
      %457 = vmatprep.subr.bf16.mxu0 0
      %458 = vmatpush1.bf16.msra.mxu0 0
      %459 = vmatprep.subr.bf16.mxu0 0
      %460 = vmatpush1.bf16.msra.mxu0 0
      %461 = vmatprep.subr.bf16.mxu0 0
      %462 = vmatpush1.bf16.msra.mxu0 0
      %463 = vmatprep.subr.bf16.mxu0 0
      %464 = vmatpush1.bf16.msra.mxu0 0
      %465 = vmatprep.subr.bf16.mxu0 0
      %466 = vmatpush1.bf16.msra.mxu0 0
      %467 = vmatprep.subr.bf16.mxu0 0
      %468 = vmatpush1.bf16.msra.mxu0 0
      %469 = vmatprep.subr.bf16.mxu0 0
      %470 = vmatpush1.bf16.msra.mxu0 0
      %471 = vmatprep.subr.bf16.mxu0 0
      %472 = vmatpush1.bf16.msra.mxu0 0
      %473 = vmatprep.mubr.bf16.mxu0 0
      %474 = vmatmul.mubr.bf16.gmra.mrb[0].mxu0 %v435
      %v475 = vpop.f32.mrb[0].mxu0
      %v476 = vadd.f32 0.0, %v475
      %v477 = vpop.f32.mrb[0].mxu0
      %v478 = vpop.f32.mrb[0].mxu0
      %v479 = vpop.f32.mrb[0].mxu0
      %480 = vdwg.mxu0
      %v481 = vadd.f32 %v432, %v476
      %v483 = vunpack.c.l.b16 %v339
      %v484 = vpack.c.b16 %v483, %v483
      %485 = vrot.lane.b32.xlu0 %v484, 96
      %v486 = vpop.permute.xlu0 %485
      %v488 = vunpack.c.l.b16 %v340
      %v489 = vpack.c.b16 %v488, %v488
      %490 = vrot.lane.b32.xlu0 %v489, 96
      %v491 = vpop.permute.xlu0 %490
      %v493 = vsel %vm352, %v486, 0
      %v496 = vsel %vm352, %v491, 0
      %498 = vmatprep.subr.bf16.mxu0 0
      %499 = vmatpush1.bf16.xpose.msra.mxu0 %v496
      %500 = vmatprep.subr.bf16.mxu0 0
      %501 = vmatpush1.bf16.xpose.msra.mxu0 0
      %502 = vmatprep.subr.bf16.mxu0 0
      %503 = vmatpush1.bf16.xpose.msra.mxu0 0
      %504 = vmatprep.subr.bf16.mxu0 0
      %505 = vmatpush1.bf16.xpose.msra.mxu0 0
      %506 = vmatprep.subr.bf16.mxu0 0
      %507 = vmatpush1.bf16.xpose.msra.mxu0 0
      %508 = vmatprep.subr.bf16.mxu0 0
      %509 = vmatpush1.bf16.xpose.msra.mxu0 0
      %510 = vmatprep.subr.bf16.mxu0 0
      %511 = vmatpush1.bf16.xpose.msra.mxu0 0
      %512 = vmatprep.subr.bf16.mxu0 0
      %513 = vmatpush1.bf16.xpose.msra.mxu0 0
      %514 = vmatprep.subr.bf16.mxu0 0
      %515 = vmatpush1.bf16.xpose.msra.mxu0 0
      %516 = vmatprep.subr.bf16.mxu0 0
      %517 = vmatpush1.bf16.xpose.msra.mxu0 0
      %518 = vmatprep.subr.bf16.mxu0 0
      %519 = vmatpush1.bf16.xpose.msra.mxu0 0
      %520 = vmatprep.subr.bf16.mxu0 0
      %521 = vmatpush1.bf16.xpose.msra.mxu0 0
      %522 = vmatprep.subr.bf16.mxu0 0
      %523 = vmatpush1.bf16.xpose.msra.mxu0 0
      %524 = vmatprep.subr.bf16.mxu0 0
      %525 = vmatpush1.bf16.xpose.msra.mxu0 0
      %526 = vmatprep.subr.bf16.mxu0 0
      %527 = vmatpush1.bf16.xpose.msra.mxu0 0
      %528 = vmatprep.subr.bf16.mxu0 0
      %529 = vmatpush1.bf16.xpose.msra.mxu0 0
      %530 = vmatprep.mubr.bf16.mxu0 0
      %531 = vmatmul.mubr.bf16.gmra.mrb[0].mxu0 %v493
      %v532 = vpop.f32.mrb[0].mxu0
      %v533 = vadd.f32 0.0, %v532
      %v534 = vpop.f32.mrb[0].mxu0
      %v535 = vpop.f32.mrb[0].mxu0
      %v536 = vpop.f32.mrb[0].mxu0
      %537 = vdwg.mxu0
      %v538 = vmul.f32 %v533, 0.17677669
      %v539 = vsel %vm351, %v538, -1000000.0
      %v540 = vsel %vm402, %v539, -inf
      %541 = vmax.xlane.f32.xlu0 %v540
      %v542 = vpop.xlane.xlu0 %541
      %v543 = vmax.f32 %v401, %v542
      %v544 = vsub.f32 %v401, %v543
      %v545 = vmul.f32 %v544, 1.442695
      %v546 = vpow.pop %v545
      %548 = vset.pattern.permute.xlu0 1
      %549 = vperm.xlu0 %548, %v543
      %v550 = vpop.permute.xlu0 %549
      %v552 = vsub.f32 %v539, %v550
      %v553 = vmul.f32 %v552, 1.442695
      %v554 = vpow.pop %v553
      %v555 = vmul.f32 %v546, %v418
      %v556 = vmul.f32 %v539, 0.0
      %v557 = vadd.f32 %v556, %v554
      %v558 = vsel %vm402, %v557, 0.0
      %559 = vadd.xlane.f32.xlu0 %v558
      %v560 = vpop.xlane.xlu0 %559
      %v561 = vadd.f32 %v555, %v560
      %563 = vset.pattern.permute.xlu0 1
      %564 = vperm.xlu0 %563, %v546
      %v565 = vpop.permute.xlu0 %564
      %v567 = vmul.f32 %v565, %v426
      %v568 = vpack.c.bf16 %v554, %v554
      %v570 = vunpack.c.l.b16 %v341
      %v571 = vpack.c.b16 %v570, %v570
      %572 = vrot.lane.b32.xlu0 %v571, 96
      %v573 = vpop.permute.xlu0 %572
      %v575 = vsel %vm402, %v568, 0
      %v578 = vsel %vm437, %v573, 0
      %580 = vmatprep.subr.bf16.mxu0 0
      %581 = vmatpush1.bf16.msra.mxu0 %v578
      %582 = vmatprep.subr.bf16.mxu0 0
      %583 = vmatpush1.bf16.msra.mxu0 0
      %584 = vmatprep.subr.bf16.mxu0 0
      %585 = vmatpush1.bf16.msra.mxu0 0
      %586 = vmatprep.subr.bf16.mxu0 0
      %587 = vmatpush1.bf16.msra.mxu0 0
      %588 = vmatprep.subr.bf16.mxu0 0
      %589 = vmatpush1.bf16.msra.mxu0 0
      %590 = vmatprep.subr.bf16.mxu0 0
      %591 = vmatpush1.bf16.msra.mxu0 0
      %592 = vmatprep.subr.bf16.mxu0 0
      %593 = vmatpush1.bf16.msra.mxu0 0
      %594 = vmatprep.subr.bf16.mxu0 0
      %595 = vmatpush1.bf16.msra.mxu0 0
      %596 = vmatprep.subr.bf16.mxu0 0
      %597 = vmatpush1.bf16.msra.mxu0 0
      %598 = vmatprep.subr.bf16.mxu0 0
      %599 = vmatpush1.bf16.msra.mxu0 0
      %600 = vmatprep.subr.bf16.mxu0 0
      %601 = vmatpush1.bf16.msra.mxu0 0
      %602 = vmatprep.subr.bf16.mxu0 0
      %603 = vmatpush1.bf16.msra.mxu0 0
      %604 = vmatprep.subr.bf16.mxu0 0
      %605 = vmatpush1.bf16.msra.mxu0 0
      %606 = vmatprep.subr.bf16.mxu0 0
      %607 = vmatpush1.bf16.msra.mxu0 0
      %608 = vmatprep.subr.bf16.mxu0 0
      %609 = vmatpush1.bf16.msra.mxu0 0
      %610 = vmatprep.subr.bf16.mxu0 0
      %611 = vmatpush1.bf16.msra.mxu0 0
      %612 = vmatprep.mubr.bf16.mxu0 0
      %613 = vmatmul.mubr.bf16.gmra.mrb[0].mxu0 %v575
      %v614 = vpop.f32.mrb[0].mxu0
      %v615 = vadd.f32 0.0, %v614
      %v616 = vpop.f32.mrb[0].mxu0
      %v617 = vpop.f32.mrb[0].mxu0
      %v618 = vpop.f32.mrb[0].mxu0
      %619 = vdwg.mxu0
      %621 = vrot.lane.b32.xlu0 %v615, 32
      %v622 = vpop.permute.xlu0 %621
      %v624 = vadd.f32 %v567, %v622
      %625 = vrot.lane.b32.xlu0 %v484, 64
      %v626 = vpop.permute.xlu0 %625
      %627 = vrot.lane.b32.xlu0 %v489, 64
      %v628 = vpop.permute.xlu0 %627
      %v630 = vsel %vm352, %v626, 0
      %v633 = vsel %vm352, %v628, 0
      %635 = vmatprep.subr.bf16.mxu0 0
      %636 = vmatpush1.bf16.xpose.msra.mxu0 %v633
      %637 = vmatprep.subr.bf16.mxu0 0
      %638 = vmatpush1.bf16.xpose.msra.mxu0 0
      %639 = vmatprep.subr.bf16.mxu0 0
      %640 = vmatpush1.bf16.xpose.msra.mxu0 0
      %641 = vmatprep.subr.bf16.mxu0 0
      %642 = vmatpush1.bf16.xpose.msra.mxu0 0
      %643 = vmatprep.subr.bf16.mxu0 0
      %644 = vmatpush1.bf16.xpose.msra.mxu0 0
      %645 = vmatprep.subr.bf16.mxu0 0
      %646 = vmatpush1.bf16.xpose.msra.mxu0 0
      %647 = vmatprep.subr.bf16.mxu0 0
      %648 = vmatpush1.bf16.xpose.msra.mxu0 0
      %649 = vmatprep.subr.bf16.mxu0 0
      %650 = vmatpush1.bf16.xpose.msra.mxu0 0
      %651 = vmatprep.subr.bf16.mxu0 0
      %652 = vmatpush1.bf16.xpose.msra.mxu0 0
      %653 = vmatprep.subr.bf16.mxu0 0
      %654 = vmatpush1.bf16.xpose.msra.mxu0 0
      %655 = vmatprep.subr.bf16.mxu0 0
      %656 = vmatpush1.bf16.xpose.msra.mxu0 0
      %657 = vmatprep.subr.bf16.mxu0 0
      %658 = vmatpush1.bf16.xpose.msra.mxu0 0
      %659 = vmatprep.subr.bf16.mxu0 0
      %660 = vmatpush1.bf16.xpose.msra.mxu0 0
      %661 = vmatprep.subr.bf16.mxu0 0
      %662 = vmatpush1.bf16.xpose.msra.mxu0 0
      %663 = vmatprep.subr.bf16.mxu0 0
      %664 = vmatpush1.bf16.xpose.msra.mxu0 0
      %665 = vmatprep.subr.bf16.mxu0 0
      %666 = vmatpush1.bf16.xpose.msra.mxu0 0
      %667 = vmatprep.mubr.bf16.mxu0 0
      %668 = vmatmul.mubr.bf16.gmra.mrb[0].mxu0 %v630
      %v669 = vpop.f32.mrb[0].mxu0
      %v670 = vadd.f32 0.0, %v669
      %v671 = vpop.f32.mrb[0].mxu0
      %v672 = vpop.f32.mrb[0].mxu0
      %v673 = vpop.f32.mrb[0].mxu0
      %674 = vdwg.mxu0
      %v675 = vmul.f32 %v670, 0.17677669
      %v676 = vsel %vm351, %v675, -1000000.0
      %v677 = vsel %vm402, %v676, -inf
      %678 = vmax.xlane.f32.xlu0 %v677
      %v679 = vpop.xlane.xlu0 %678
      %v680 = vmax.f32 %v401, %v679
      %v681 = vsub.f32 %v401, %v680
      %v682 = vmul.f32 %v681, 1.442695
      %v683 = vpow.pop %v682
      %685 = vset.pattern.permute.xlu0 2
      %686 = vperm.xlu0 %685, %v680
      %v687 = vpop.permute.xlu0 %686
      %v689 = vsub.f32 %v676, %v687
      %v690 = vmul.f32 %v689, 1.442695
      %v691 = vpow.pop %v690
      %v692 = vmul.f32 %v683, %v418
      %v693 = vmul.f32 %v676, 0.0
      %v694 = vadd.f32 %v693, %v691
      %v695 = vsel %vm402, %v694, 0.0
      %696 = vadd.xlane.f32.xlu0 %v695
      %v697 = vpop.xlane.xlu0 %696
      %v698 = vadd.f32 %v692, %v697
      %700 = vset.pattern.permute.xlu0 2
      %701 = vperm.xlu0 %700, %v683
      %v702 = vpop.permute.xlu0 %701
      %v704 = vmul.f32 %v702, %v426
      %v705 = vpack.c.bf16 %v691, %v691
      %706 = vrot.lane.b32.xlu0 %v571, 64
      %v707 = vpop.permute.xlu0 %706
      %v709 = vsel %vm402, %v705, 0
      %v712 = vsel %vm437, %v707, 0
      %714 = vmatprep.subr.bf16.mxu0 0
      %715 = vmatpush1.bf16.msra.mxu0 %v712
      %716 = vmatprep.subr.bf16.mxu0 0
      %717 = vmatpush1.bf16.msra.mxu0 0
      %718 = vmatprep.subr.bf16.mxu0 0
      %719 = vmatpush1.bf16.msra.mxu0 0
      %720 = vmatprep.subr.bf16.mxu0 0
      %721 = vmatpush1.bf16.msra.mxu0 0
      %722 = vmatprep.subr.bf16.mxu0 0
      %723 = vmatpush1.bf16.msra.mxu0 0
      %724 = vmatprep.subr.bf16.mxu0 0
      %725 = vmatpush1.bf16.msra.mxu0 0
      %726 = vmatprep.subr.bf16.mxu0 0
      %727 = vmatpush1.bf16.msra.mxu0 0
      %728 = vmatprep.subr.bf16.mxu0 0
      %729 = vmatpush1.bf16.msra.mxu0 0
      %730 = vmatprep.subr.bf16.mxu0 0
      %731 = vmatpush1.bf16.msra.mxu0 0
      %732 = vmatprep.subr.bf16.mxu0 0
      %733 = vmatpush1.bf16.msra.mxu0 0
      %734 = vmatprep.subr.bf16.mxu0 0
      %735 = vmatpush1.bf16.msra.mxu0 0
      %736 = vmatprep.subr.bf16.mxu0 0
      %737 = vmatpush1.bf16.msra.mxu0 0
      %738 = vmatprep.subr.bf16.mxu0 0
      %739 = vmatpush1.bf16.msra.mxu0 0
      %740 = vmatprep.subr.bf16.mxu0 0
      %741 = vmatpush1.bf16.msra.mxu0 0
      %742 = vmatprep.subr.bf16.mxu0 0
      %743 = vmatpush1.bf16.msra.mxu0 0
      %744 = vmatprep.subr.bf16.mxu0 0
      %745 = vmatpush1.bf16.msra.mxu0 0
      %746 = vmatprep.mubr.bf16.mxu0 0
      %747 = vmatmul.mubr.bf16.gmra.mrb[0].mxu0 %v709
      %v748 = vpop.f32.mrb[0].mxu0
      %v749 = vadd.f32 0.0, %v748
      %v750 = vpop.f32.mrb[0].mxu0
      %v751 = vpop.f32.mrb[0].mxu0
      %v752 = vpop.f32.mrb[0].mxu0
      %753 = vdwg.mxu0
      %755 = vrot.lane.b32.xlu0 %v749, 64
      %v756 = vpop.permute.xlu0 %755
      %v758 = vadd.f32 %v704, %v756
      %759 = vrot.lane.b32.xlu0 %v484, 32
      %v760 = vpop.permute.xlu0 %759
      %761 = vrot.lane.b32.xlu0 %v489, 32
      %v762 = vpop.permute.xlu0 %761
      %v764 = vsel %vm352, %v760, 0
      %v767 = vsel %vm352, %v762, 0
      %769 = vmatprep.subr.bf16.mxu0 0
      %770 = vmatpush1.bf16.xpose.msra.mxu0 %v767
      %771 = vmatprep.subr.bf16.mxu0 0
      %772 = vmatpush1.bf16.xpose.msra.mxu0 0
      %773 = vmatprep.subr.bf16.mxu0 0
      %774 = vmatpush1.bf16.xpose.msra.mxu0 0
      %775 = vmatprep.subr.bf16.mxu0 0
      %776 = vmatpush1.bf16.xpose.msra.mxu0 0
      %777 = vmatprep.subr.bf16.mxu0 0
      %778 = vmatpush1.bf16.xpose.msra.mxu0 0
      %779 = vmatprep.subr.bf16.mxu0 0
      %780 = vmatpush1.bf16.xpose.msra.mxu0 0
      %781 = vmatprep.subr.bf16.mxu0 0
      %782 = vmatpush1.bf16.xpose.msra.mxu0 0
      %783 = vmatprep.subr.bf16.mxu0 0
      %784 = vmatpush1.bf16.xpose.msra.mxu0 0
      %785 = vmatprep.subr.bf16.mxu0 0
      %786 = vmatpush1.bf16.xpose.msra.mxu0 0
      %787 = vmatprep.subr.bf16.mxu0 0
      %788 = vmatpush1.bf16.xpose.msra.mxu0 0
      %789 = vmatprep.subr.bf16.mxu0 0
      %790 = vmatpush1.bf16.xpose.msra.mxu0 0
      %791 = vmatprep.subr.bf16.mxu0 0
      %792 = vmatpush1.bf16.xpose.msra.mxu0 0
      %793 = vmatprep.subr.bf16.mxu0 0
      %794 = vmatpush1.bf16.xpose.msra.mxu0 0
      %795 = vmatprep.subr.bf16.mxu0 0
      %796 = vmatpush1.bf16.xpose.msra.mxu0 0
      %797 = vmatprep.subr.bf16.mxu0 0
      %798 = vmatpush1.bf16.xpose.msra.mxu0 0
      %799 = vmatprep.subr.bf16.mxu0 0
      %800 = vmatpush1.bf16.xpose.msra.mxu0 0
      %801 = vmatprep.mubr.bf16.mxu0 0
      %802 = vmatmul.mubr.bf16.gmra.mrb[0].mxu0 %v764
      %v803 = vpop.f32.mrb[0].mxu0
      %v804 = vadd.f32 0.0, %v803
      %v805 = vpop.f32.mrb[0].mxu0
      %v806 = vpop.f32.mrb[0].mxu0
      %v807 = vpop.f32.mrb[0].mxu0
      %808 = vdwg.mxu0
      %v809 = vmul.f32 %v804, 0.17677669
      %v810 = vsel %vm351, %v809, -1000000.0
      %v811 = vsel %vm402, %v810, -inf
      %812 = vmax.xlane.f32.xlu0 %v811
      %v813 = vpop.xlane.xlu0 %812
      %v814 = vmax.f32 %v401, %v813
      %v815 = vsub.f32 %v401, %v814
      %v816 = vmul.f32 %v815, 1.442695
      %v817 = vpow.pop %v816
      %819 = vset.pattern.permute.xlu0 3
      %820 = vperm.xlu0 %819, %v814
      %v821 = vpop.permute.xlu0 %820
      %v823 = vsub.f32 %v810, %v821
      %v824 = vmul.f32 %v823, 1.442695
      %v825 = vpow.pop %v824
      %v826 = vmul.f32 %v817, %v418
      %v827 = vmul.f32 %v810, 0.0
      %v828 = vadd.f32 %v827, %v825
      %v829 = vsel %vm402, %v828, 0.0
      %830 = vadd.xlane.f32.xlu0 %v829
      %v831 = vpop.xlane.xlu0 %830
      %v832 = vadd.f32 %v826, %v831
      %834 = vset.pattern.permute.xlu0 3
      %835 = vperm.xlu0 %834, %v817
      %v836 = vpop.permute.xlu0 %835
      %v838 = vmul.f32 %v836, %v426
      %v839 = vpack.c.bf16 %v825, %v825
      %840 = vrot.lane.b32.xlu0 %v571, 32
      %v841 = vpop.permute.xlu0 %840
      %v843 = vsel %vm402, %v839, 0
      %v846 = vsel %vm437, %v841, 0
      %848 = vmatprep.subr.bf16.mxu0 0
      %849 = vmatpush1.bf16.msra.mxu0 %v846
      %850 = vmatprep.subr.bf16.mxu0 0
      %851 = vmatpush1.bf16.msra.mxu0 0
      %852 = vmatprep.subr.bf16.mxu0 0
      %853 = vmatpush1.bf16.msra.mxu0 0
      %854 = vmatprep.subr.bf16.mxu0 0
      %855 = vmatpush1.bf16.msra.mxu0 0
      %856 = vmatprep.subr.bf16.mxu0 0
      %857 = vmatpush1.bf16.msra.mxu0 0
      %858 = vmatprep.subr.bf16.mxu0 0
      %859 = vmatpush1.bf16.msra.mxu0 0
      %860 = vmatprep.subr.bf16.mxu0 0
      %861 = vmatpush1.bf16.msra.mxu0 0
      %862 = vmatprep.subr.bf16.mxu0 0
      %863 = vmatpush1.bf16.msra.mxu0 0
      %864 = vmatprep.subr.bf16.mxu0 0
      %865 = vmatpush1.bf16.msra.mxu0 0
      %866 = vmatprep.subr.bf16.mxu0 0
      %867 = vmatpush1.bf16.msra.mxu0 0
      %868 = vmatprep.subr.bf16.mxu0 0
      %869 = vmatpush1.bf16.msra.mxu0 0
      %870 = vmatprep.subr.bf16.mxu0 0
      %871 = vmatpush1.bf16.msra.mxu0 0
      %872 = vmatprep.subr.bf16.mxu0 0
      %873 = vmatpush1.bf16.msra.mxu0 0
      %874 = vmatprep.subr.bf16.mxu0 0
      %875 = vmatpush1.bf16.msra.mxu0 0
      %876 = vmatprep.subr.bf16.mxu0 0
      %877 = vmatpush1.bf16.msra.mxu0 0
      %878 = vmatprep.subr.bf16.mxu0 0
      %879 = vmatpush1.bf16.msra.mxu0 0
      %880 = vmatprep.mubr.bf16.mxu0 0
      %881 = vmatmul.mubr.bf16.gmra.mrb[0].mxu0 %v843
      %v882 = vpop.f32.mrb[0].mxu0
      %v883 = vadd.f32 0.0, %v882
      %v884 = vpop.f32.mrb[0].mxu0
      %v885 = vpop.f32.mrb[0].mxu0
      %v886 = vpop.f32.mrb[0].mxu0
      %887 = vdwg.mxu0
      %889 = vrot.lane.b32.xlu0 %v883, 96
      %v890 = vpop.permute.xlu0 %889
      %v892 = vadd.f32 %v838, %v890
      %vm893 = vcmask 7168
      %v894 = vsel %vm893, %v406, %v543
      %vm895 = vcmask 15360
      %v896 = vsel %vm895, %v894, %v680
      %vm897 = vcmask 23552
      %v898 = vsel %vm897, %v896, %v814
      %vm899 = vcmask 31744
      %900 = vst.msk [vmem:[#allocation2] sm:$0xff] %vm899, %v898
      %v901 = vsel %vm893, %v425, %v561
      %v902 = vsel %vm895, %v901, %v698
      %v903 = vsel %vm897, %v902, %v832
      %904 = vst.msk [vmem:[#allocation3] sm:$0xff] %vm899, %v903
      %v905 = vsel %vm352, %v481, %v624
      %vm906 = vcmask 523264
      %v907 = vsel %vm906, %v905, %v758
      %vm908 = vcmask 785408
      %v909 = vsel %vm908, %v907, %v892
      %910 = vst [vmem:[#allocation4] sm:$0xff] %v909
      // Predicated region
      $region41: #{transformer_decoder_forward.24} parent=35 // pred_check
        %p911 = pneg %p331
      $region42: #{transformer_decoder_forward.24} parent=35 // pred_check_branch
        %913 = sbr.rel (%p911) target = $region44
      $region43: #{transformer_decoder_forward.24} parent=35 // pred_region
        %v914 = vld [vmem:[#allocation3] sm:$0xff]
        %v915 = vrcp.pop %v914
        %v916 = vld [vmem:[#allocation4] sm:$0xff]
        %918 = vset.pattern.permute.xlu0 0
        %919 = vperm.xlu0 %918, %v915
        %v920 = vpop.permute.xlu0 %919
        %v922 = vmul.f32 %v916, %v920
        %923 = vset.pattern.permute.xlu0 1
        %924 = vperm.xlu0 %923, %v915
        %v925 = vpop.permute.xlu0 %924
        %v927 = vmul.f32 %v916, %v925
        %928 = vset.pattern.permute.xlu0 2
        %929 = vperm.xlu0 %928, %v915
        %v930 = vpop.permute.xlu0 %929
        %v932 = vmul.f32 %v916, %v930
        %933 = vset.pattern.permute.xlu0 3
        %934 = vperm.xlu0 %933, %v915
        %v935 = vpop.permute.xlu0 %934
        %v937 = vmul.f32 %v916, %v935
        %v938 = vsel %vm352, %v922, %v927
        %v939 = vsel %vm906, %v938, %v932
        %v940 = vsel %vm908, %v939, %v937
        %v941 = vpack.c.bf16 %v940, %v940
        %942 = vst [vmem:[%s329] sm:$0xf] %v941
      $region44: #{transformer_decoder_forward.24} parent=35 // pred_fallthru
        _
      %p943 = scmp.lt.s32.totalorder %s20, 1
      %s944 = scalar_select %p943, %s20, 1
      %p945 = scmp.lt.s32.totalorder %s21, 0
      %s946 = scalar_select %p945, %s21, 0
      %s947 = sadd.s32 %s946, %s944
      %s948 = smul.addr %s947, 4
      %s949 = scalar_lea.vmem %s4, %s948
      // Predicated region
      $region45: #{transformer_decoder_forward.24} parent=35 // pred_check
        %p950 = pneg %p166
      $region46: #{transformer_decoder_forward.24} parent=35 // pred_check_branch
        %952 = sbr.rel (%p950) target = $region48
      $region47: #{transformer_decoder_forward.24} parent=35 // pred_region
        _
      $region48: #{transformer_decoder_forward.24} parent=35 // pred_fallthru
        _
    $region36: #{transformer_decoder_forward.24} parent=5 // pred_fallthru
      _
    %p953 = scmp.le.s32.totalorder 2, %s10
    // Predicated region
    $region49: #{transformer_decoder_forward.24} parent=5 // pred_check
      %p954 = pneg %p953
    $region50: #{transformer_decoder_forward.24} parent=5 // pred_check_branch
      %956 = sbr.rel (%p954) target = $region52
    $region51: #{transformer_decoder_forward.24} parent=5 // pred_region
      %s957 = ssub.s32 %s10, 2
      // Predicated region
      $region53: #{transformer_decoder_forward.24} parent=51 // pred_check
        %p958 = pneg %p172
      $region54: #{transformer_decoder_forward.24} parent=51 // pred_check_branch
        %960 = sbr.rel (%p958) target = $region56
      $region55: #{transformer_decoder_forward.24} parent=51 // pred_region
        %p961 = scmp.lt.s32.totalorder %s23, 1
        %s962 = scalar_select %p961, %s23, 1
        %p963 = scmp.lt.s32.totalorder %s24, 0
        %s964 = scalar_select %p963, %s24, 0
        %s965 = sadd.s32 %s964, %s962
        %s966 = smul.addr %s965, 4
        %s967 = scalar_lea.vmem %s4, %s966
      $region56: #{transformer_decoder_forward.24} parent=51 // pred_fallthru
        _
    $region52: #{transformer_decoder_forward.24} parent=5 // pred_fallthru
      _
  $region6: #{transformer_decoder_forward.24} parent=0 // loop_footer
    %s14 = sadd.s32 1, %s10
  $region7: #{transformer_decoder_forward.24} parent=0 // loop_footer_branch
    %9 = sbr.rel target = $region3
  $region8: #{transformer_decoder_forward.24} parent=0 // loop_exit
    _

</llo_original>
